<compile_context>
chip_gen: v5e
topology: v5e:2x2
jax: 0.10.0
libtpu: 0.0.40
codegen_flags: <defaults>
</compile_context>

<pallas_src>
import functools

import jax
import jax.numpy as jnp
from jax import lax
from jax.experimental import pallas as pl
from jax.experimental.pallas import tpu as pltpu

_EPS = 1e-5


def _round_up(x, m):
    return (x + m - 1) // m * m


def _conv_bn_stage(xe_sc, col_ref, w_ref, gamma, beta, mask_col, *,
                   C_pad, L_pad, guard, tap_offsets, count, relu):
    """3x3 same-conv + BatchNorm2d (batch stats) [+ ReLU] in the flat padded layout.

    xe_sc    : (C_pad, Le)  bf16 zero-padded activation (guard columns on each side).
    col_ref  : (9*C_pad, L_pad) bf16 im2col scratch, rebuilt per stage.
    w_ref    : (C_pad, 9*C_pad) bf16 weights, rows = c_out, cols ordered (tap, c_in).
    gamma/beta : (C_pad, 1) f32.
    mask_col : (L_pad, 1) f32, 1.0 at valid pixels (0 at padding & lane tail).

    Returns the normalized (C_pad, L_pad) f32 activation. Border / tail columns hold
    don't-care values; callers mask them before reuse.
    """
    # im2col: 9 lane-shifted taps written once into aligned row blocks (t * C_pad).
    for t, d in enumerate(tap_offsets):
        col_ref[t * C_pad:(t + 1) * C_pad, :] = xe_sc[:, guard + d: guard + d + L_pad]

    # One fat MXU matmul for the whole batch: (C_pad, 9C_pad) x (9C_pad, L_pad).
    y = jnp.dot(w_ref[...], col_ref[...], preferred_element_type=jnp.float32)

    # BatchNorm2d batch stats over (N, H, W).  Lane reductions run on the MXU
    # ((C_pad, L_pad) x (L_pad, 1) dots) instead of the XLU, and masking of the
    # padding columns comes for free from mask_col.
    inv_count = 1.0 / float(count)
    s = jnp.dot(y, mask_col, preferred_element_type=jnp.float32)          # (C_pad, 1)
    ssq = jnp.dot(y * y, mask_col, preferred_element_type=jnp.float32)    # (C_pad, 1)
    mean = s * inv_count
    var = jnp.maximum(ssq * inv_count - mean * mean, 0.0)   # clamp: f32 cancellation
    scale = gamma * lax.rsqrt(var + _EPS)                   # folded affine
    shift = beta - mean * scale
    y = y * scale + shift
    if relu:
        y = jnp.maximum(y, 0.0)
    return y


def _basic_block_kernel(xe_ref, mrow_ref, mcol_ref, w1_ref, w2_ref, gb_ref,
                        o_ref, col_ref, xe_sc, *,
                        C_pad, L_pad, Le, guard, tap_offsets, count):
    mask_row = mrow_ref[...]                                  # (1, L_pad) f32
    mask_col = mcol_ref[...]                                  # (L_pad, 1) f32

    # Zero the guard columns once (lane-aligned, full-width stores); they stay zero
    # for both stages because only the interior is rewritten between stages.
    xe_sc[:, 0:guard] = jnp.zeros((C_pad, guard), xe_sc.dtype)
    xe_sc[:, guard + L_pad:Le] = jnp.zeros((C_pad, Le - guard - L_pad), xe_sc.dtype)

    # Stage-1 padded activation (input already has zeros at padding pixels and tail).
    xe_sc[:, guard:guard + L_pad] = xe_ref[...]

    # Stage 1: conv3x3 + BN + ReLU.
    y1 = _conv_bn_stage(xe_sc, col_ref, w1_ref, gb_ref[:, 0:1], gb_ref[:, 1:2],
                        mask_col, C_pad=C_pad, L_pad=L_pad, guard=guard,
                        tap_offsets=tap_offsets, count=count, relu=True)

    # Stage-2 padded activation: zero at padding pixels / lane tail via the mask
    # (this IS the second conv's zero padding); write is lane-aligned & full-width.
    xe_sc[:, guard:guard + L_pad] = (y1 * mask_row).astype(xe_sc.dtype)

    # Stage 2: conv3x3 + BN (no ReLU, no residual -- matches the spec module).
    y2 = _conv_bn_stage(xe_sc, col_ref, w2_ref, gb_ref[:, 2:3], gb_ref[:, 3:4],
                        mask_col, C_pad=C_pad, L_pad=L_pad, guard=guard,
                        tap_offsets=tap_offsets, count=count, relu=False)

    o_ref[...] = y2.astype(o_ref.dtype)


def basic_block(x_nchw, params):
    """BasicBlock forward. Input/output are NCHW (PyTorch convention)."""
    N, C, H, W = x_nchw.shape
    Hp, Wp = H + 2, W + 2
    L = N * Hp * Wp                          # all padded pixels of the batch
    L_pad = _round_up(L, 128)                # lane-dense compute/output width
    C_pad = _round_up(C, 16)                 # bf16-sublane-aligned channel rows
    guard = _round_up(max(Wp + 1, 1), 128)   # lane-aligned halo (>= max |tap offset|)
    Le = guard + L_pad + guard               # extended halo-buffer width
    count = N * H * W                        # BN reduces over (N, H, W)
    tap_offsets = tuple((kh - 1) * Wp + (kw - 1)
                        for kh in range(3) for kw in range(3))

    # ---- wrapper-side layout plumbing (single fused XLA copy each way) ----
    # Zero-pad spatially, go channel-major, flatten (n, y, x) into the lane axis, and
    # zero-pad channels / lanes up to (C_pad, L_pad).  Guard columns are added
    # in-kernel, so there is no second HBM pad here.
    xpad = jnp.pad(x_nchw, ((0, 0), (0, 0), (1, 1), (1, 1)))            # (N,C,Hp,Wp)
    xflat = jnp.transpose(xpad, (1, 0, 2, 3)).reshape(C, L)             # (C, L)
    xe = jnp.pad(xflat, ((0, C_pad - C), (0, L_pad - L))).astype(jnp.bfloat16)

    # Validity masks: 1.0 at real pixels, 0.0 at padding pixels and the lane tail.
    pos = jnp.arange(L_pad)
    yy = (pos % (Hp * Wp)) // Wp
    xx = pos % Wp
    valid = ((pos < L) & (yy >= 1) & (yy <= H) & (xx >= 1) & (xx <= W))
    mask_row = valid.astype(jnp.float32).reshape(1, L_pad)
    mask_col = valid.astype(jnp.float32).reshape(L_pad, 1)

    def w2d(w_hwio):  # (3,3,Cin,Cout) -> (C_pad, 9*C_pad), matching im2col row order
        w = jnp.transpose(w_hwio, (3, 0, 1, 2))                         # (Cout,3,3,Cin)
        w = jnp.pad(w, ((0, C_pad - C), (0, 0), (0, 0), (0, C_pad - C)))
        return w.reshape(C_pad, 9 * C_pad).astype(jnp.bfloat16)

    # Pack gamma1/beta1/gamma2/beta2 into one small (C_pad, 4) input.
    gb = jnp.stack([params["gamma1"], params["beta1"],
                    params["gamma2"], params["beta2"]], axis=1)          # (C, 4)
    gb = jnp.pad(gb, ((0, C_pad - C), (0, 0))).astype(jnp.float32)

    kern = functools.partial(_basic_block_kernel, C_pad=C_pad, L_pad=L_pad, Le=Le,
                             guard=guard, tap_offsets=tap_offsets, count=count)
    out_flat = pl.pallas_call(
        kern,
        out_shape=jax.ShapeDtypeStruct((C_pad, L_pad), jnp.bfloat16),   # bf16 writeback
        grid=(1,),
        in_specs=[
            pl.BlockSpec((C_pad, L_pad), lambda i: (0, 0)),        # xe (bf16)
            pl.BlockSpec((1, L_pad), lambda i: (0, 0)),            # mask row (f32)
            pl.BlockSpec((L_pad, 1), lambda i: (0, 0)),            # mask col (f32)
            pl.BlockSpec((C_pad, 9 * C_pad), lambda i: (0, 0)),    # w1 (bf16)
            pl.BlockSpec((C_pad, 9 * C_pad), lambda i: (0, 0)),    # w2 (bf16)
            pl.BlockSpec((C_pad, 4), lambda i: (0, 0)),            # gamma/beta packed
        ],
        out_specs=pl.BlockSpec((C_pad, L_pad), lambda i: (0, 0)),
        scratch_shapes=[
            pltpu.VMEM((9 * C_pad, L_pad), jnp.bfloat16),   # im2col (shared by stages)
            pltpu.VMEM((C_pad, Le), jnp.bfloat16),          # halo buffer (shared)
        ],
        compiler_params=pltpu.CompilerParams(
            dimension_semantics=("arbitrary",),
            # Tiny footprint (<1 MiB); explicit, generation-safe limit.
            vmem_limit_bytes=32 * 1024 * 1024,
        ),
    )(xe, mask_row, mask_col, w2d(params["w1"]), w2d(params["w2"]), gb)

    # Back to NCHW: strip padded channels/lanes, keep valid interior pixels (in XLA).
    out = out_flat[:C, :L].astype(jnp.float32).reshape(C, N, Hp, Wp)
    out = out[:, :, 1:H + 1, 1:W + 1]
    return jnp.transpose(out, (1, 0, 2, 3))


def _reference(x_nchw, params, *, matmul_dtype=jnp.float32):
    """Pure-JAX reference (lax conv + batch-stat BN).

    matmul_dtype=jnp.bfloat16 builds a precision-matched reference (bf16 conv inputs,
    f32 accumulation -- the kernel's policy); jnp.float32 is the exact PyTorch-
    semantics reference.
    """
    def stage(x, w, g, b, relu):
        y = lax.conv_general_dilated(
            x.astype(matmul_dtype), w.astype(matmul_dtype),
            window_strides=(1, 1), padding="SAME",
            dimension_numbers=("NHWC", "HWIO", "NHWC"),
            preferred_element_type=jnp.float32)
        mean = y.mean(axis=(0, 1, 2), keepdims=True)
        var = ((y - mean) ** 2).mean(axis=(0, 1, 2), keepdims=True)
        y = (y - mean) * lax.rsqrt(var + _EPS)
        y = y * g.reshape(1, 1, 1, -1) + b.reshape(1, 1, 1, -1)
        return jnp.maximum(y, 0.0) if relu else y

    x = jnp.transpose(x_nchw, (0, 2, 3, 1))
    y = stage(x, params["w1"], params["gamma1"], params["beta1"], True)
    y = stage(y, params["w2"], params["gamma2"], params["beta2"], False)
    return jnp.transpose(y, (0, 3, 1, 2))


if __name__ == "__main__":
    key = jax.random.PRNGKey(0)
    N, C, H, W = 2, 4, 16, 16

    k = jax.random.split(key, 7)
    x = jax.random.normal(k[0], (N, C, H, W), jnp.float32)
    # Conv weights in HWIO layout (kH, kW, in_C, out_C), deterministic init.
    params = {
        "w1": jax.random.normal(k[1], (3, 3, C, C), jnp.float32) * 0.1,
        "w2": jax.random.normal(k[2], (3, 3, C, C), jnp.float32) * 0.1,
        "gamma1": jax.random.normal(k[3], (C,), jnp.float32) * 0.1 + 1.0,
        "beta1": jax.random.normal(k[4], (C,), jnp.float32) * 0.1,
        "gamma2": jax.random.normal(k[5], (C,), jnp.float32) * 0.1 + 1.0,
        "beta2": jax.random.normal(k[6], (C,), jnp.float32) * 0.1,
    }

    out = jax.block_until_ready(basic_block(x, params))
    assert out.shape == (N, C, H, W), out.shape

    # Precision-matched reference (bf16 conv inputs, f32 accumulation & f32 BN).
    # Kernel additionally writes its output in bf16, hence the slightly wider band.
    ref_bf16 = jax.block_until_ready(
        _reference(x, params, matmul_dtype=jnp.bfloat16))
    assert jnp.allclose(out, ref_bf16, atol=2e-2, rtol=2e-2), float(
        jnp.max(jnp.abs(out - ref_bf16)))

    # Full-f32 reference (looser tolerance: the kernel uses bf16 MXU inputs/output).
    ref_f32 = jax.block_until_ready(
        _reference(x, params, matmul_dtype=jnp.float32))
    assert jnp.allclose(out, ref_f32, atol=5e-2, rtol=5e-2), float(
        jnp.max(jnp.abs(out - ref_f32)))

    print("KERNEL_OK")
</pallas_src>

<mosaic_0001>
module attributes {stable_mosaic.version = 11 : i64} {
  func.func @_basic_block_kernel(%arg0: i32, %arg1: memref<16x768xbf16, #tpu.memory_space<vmem>>, %arg2: memref<1x768xf32, #tpu.memory_space<vmem>>, %arg3: memref<768x1xf32, #tpu.memory_space<vmem>>, %arg4: memref<16x144xbf16, #tpu.memory_space<vmem>>, %arg5: memref<16x144xbf16, #tpu.memory_space<vmem>>, %arg6: memref<16x4xf32, #tpu.memory_space<vmem>>, %arg7: memref<16x768xbf16, #tpu.memory_space<vmem>>, %arg8: memref<144x768xbf16, #tpu.memory_space<vmem>>, %arg9: memref<16x1024xbf16, #tpu.memory_space<vmem>>) attributes {dimension_semantics = [#tpu.dimension_semantics<arbitrary>], iteration_bounds = array<i64: 1>, scalar_prefetch = 0 : i64, scratch_operands = 2 : i64, tpu.core_type = #tpu.core_type<tc>, window_params = [{pipeline_mode = #tpu.pipeline_mode<synchronous>, transform_indices = @transform_0, window_bounds = array<i64: 16, 768>}, {pipeline_mode = #tpu.pipeline_mode<synchronous>, transform_indices = @transform_1, window_bounds = array<i64: 1, 768>}, {pipeline_mode = #tpu.pipeline_mode<synchronous>, transform_indices = @transform_2, window_bounds = array<i64: 768, 1>}, {pipeline_mode = #tpu.pipeline_mode<synchronous>, transform_indices = @transform_3, window_bounds = array<i64: 16, 144>}, {pipeline_mode = #tpu.pipeline_mode<synchronous>, transform_indices = @transform_4, window_bounds = array<i64: 16, 144>}, {pipeline_mode = #tpu.pipeline_mode<synchronous>, transform_indices = @transform_5, window_bounds = array<i64: 16, 4>}, {pipeline_mode = #tpu.pipeline_mode<synchronous>, transform_indices = @transform_6, window_bounds = array<i64: 16, 768>}]} {
    %c0 = arith.constant 0 : index
    %c0_0 = arith.constant 0 : index
    %0 = vector.load %arg2[%c0, %c0_0] : memref<1x768xf32, #tpu.memory_space<vmem>>, vector<1x768xf32>
    %c0_1 = arith.constant 0 : index
    %c0_2 = arith.constant 0 : index
    %1 = vector.load %arg3[%c0_1, %c0_2] : memref<768x1xf32, #tpu.memory_space<vmem>>, vector<768x1xf32>
    %cst = arith.constant 0.000000e+00 : bf16
    %2 = vector.broadcast %cst : bf16 to vector<16x128xbf16>
    %c0_3 = arith.constant 0 : index
    %c0_4 = arith.constant 0 : index
    %3 = vector.load %arg9[%c0_3, %c0_4] : memref<16x1024xbf16, #tpu.memory_space<vmem>>, vector<16x128xbf16>
    tpu.vector_store %arg9[%c0_3, %c0_4], %2 {strides = array<i32>} : memref<16x1024xbf16, #tpu.memory_space<vmem>>, vector<16x128xbf16>,
    %cst_5 = arith.constant 0.000000e+00 : bf16
    %4 = vector.broadcast %cst_5 : bf16 to vector<16x128xbf16>
    %c0_6 = arith.constant 0 : index
    %c896 = arith.constant 896 : index
    %5 = vector.load %arg9[%c0_6, %c896] : memref<16x1024xbf16, #tpu.memory_space<vmem>>, vector<16x128xbf16>
    tpu.vector_store %arg9[%c0_6, %c896], %4 {strides = array<i32>} : memref<16x1024xbf16, #tpu.memory_space<vmem>>, vector<16x128xbf16>,
    %c0_7 = arith.constant 0 : index
    %c0_8 = arith.constant 0 : index
    %6 = vector.load %arg1[%c0_7, %c0_8] : memref<16x768xbf16, #tpu.memory_space<vmem>>, vector<16x768xbf16>
    %c0_9 = arith.constant 0 : index
    %c128 = arith.constant 128 : index
    %7 = vector.load %arg9[%c0_9, %c128] : memref<16x1024xbf16, #tpu.memory_space<vmem>>, vector<16x768xbf16>
    tpu.vector_store %arg9[%c0_9, %c128], %6 {strides = array<i32>} : memref<16x1024xbf16, #tpu.memory_space<vmem>>, vector<16x768xbf16>,
    %c0_10 = arith.constant 0 : index
    %c0_11 = arith.constant 0 : index
    %8 = vector.load %arg6[%c0_10, %c0_11] : memref<16x4xf32, #tpu.memory_space<vmem>>, vector<16x1xf32>
    %c0_12 = arith.constant 0 : index
    %c1 = arith.constant 1 : index
    %9 = vector.load %arg6[%c0_12, %c1] : memref<16x4xf32, #tpu.memory_space<vmem>>, vector<16x1xf32>
    %c0_13 = arith.constant 0 : index
    %c109 = arith.constant 109 : index
    %10 = vector.load %arg9[%c0_13, %c109] : memref<16x1024xbf16, #tpu.memory_space<vmem>>, vector<16x768xbf16>
    %c0_14 = arith.constant 0 : index
    %c0_15 = arith.constant 0 : index
    %11 = vector.load %arg8[%c0_14, %c0_15] : memref<144x768xbf16, #tpu.memory_space<vmem>>, vector<16x768xbf16>
    tpu.vector_store %arg8[%c0_14, %c0_15], %10 {strides = array<i32>} : memref<144x768xbf16, #tpu.memory_space<vmem>>, vector<16x768xbf16>,
    %c0_16 = arith.constant 0 : index
    %c110 = arith.constant 110 : index
    %12 = vector.load %arg9[%c0_16, %c110] : memref<16x1024xbf16, #tpu.memory_space<vmem>>, vector<16x768xbf16>
    %c16 = arith.constant 16 : index
    %c0_17 = arith.constant 0 : index
    %13 = vector.load %arg8[%c16, %c0_17] : memref<144x768xbf16, #tpu.memory_space<vmem>>, vector<16x768xbf16>
    tpu.vector_store %arg8[%c16, %c0_17], %12 {strides = array<i32>} : memref<144x768xbf16, #tpu.memory_space<vmem>>, vector<16x768xbf16>,
    %c0_18 = arith.constant 0 : index
    %c111 = arith.constant 111 : index
    %14 = vector.load %arg9[%c0_18, %c111] : memref<16x1024xbf16, #tpu.memory_space<vmem>>, vector<16x768xbf16>
    %c32 = arith.constant 32 : index
    %c0_19 = arith.constant 0 : index
    %15 = vector.load %arg8[%c32, %c0_19] : memref<144x768xbf16, #tpu.memory_space<vmem>>, vector<16x768xbf16>
    tpu.vector_store %arg8[%c32, %c0_19], %14 {strides = array<i32>} : memref<144x768xbf16, #tpu.memory_space<vmem>>, vector<16x768xbf16>,
    %c0_20 = arith.constant 0 : index
    %c127 = arith.constant 127 : index
    %16 = vector.load %arg9[%c0_20, %c127] : memref<16x1024xbf16, #tpu.memory_space<vmem>>, vector<16x768xbf16>
    %c48 = arith.constant 48 : index
    %c0_21 = arith.constant 0 : index
    %17 = vector.load %arg8[%c48, %c0_21] : memref<144x768xbf16, #tpu.memory_space<vmem>>, vector<16x768xbf16>
    tpu.vector_store %arg8[%c48, %c0_21], %16 {strides = array<i32>} : memref<144x768xbf16, #tpu.memory_space<vmem>>, vector<16x768xbf16>,
    %c0_22 = arith.constant 0 : index
    %c128_23 = arith.constant 128 : index
    %18 = vector.load %arg9[%c0_22, %c128_23] : memref<16x1024xbf16, #tpu.memory_space<vmem>>, vector<16x768xbf16>
    %c64 = arith.constant 64 : index
    %c0_24 = arith.constant 0 : index
    %19 = vector.load %arg8[%c64, %c0_24] : memref<144x768xbf16, #tpu.memory_space<vmem>>, vector<16x768xbf16>
    tpu.vector_store %arg8[%c64, %c0_24], %18 {strides = array<i32>} : memref<144x768xbf16, #tpu.memory_space<vmem>>, vector<16x768xbf16>,
    %c0_25 = arith.constant 0 : index
    %c129 = arith.constant 129 : index
    %20 = vector.load %arg9[%c0_25, %c129] : memref<16x1024xbf16, #tpu.memory_space<vmem>>, vector<16x768xbf16>
    %c80 = arith.constant 80 : index
    %c0_26 = arith.constant 0 : index
    %21 = vector.load %arg8[%c80, %c0_26] : memref<144x768xbf16, #tpu.memory_space<vmem>>, vector<16x768xbf16>
    tpu.vector_store %arg8[%c80, %c0_26], %20 {strides = array<i32>} : memref<144x768xbf16, #tpu.memory_space<vmem>>, vector<16x768xbf16>,
    %c0_27 = arith.constant 0 : index
    %c145 = arith.constant 145 : index
    %22 = vector.load %arg9[%c0_27, %c145] : memref<16x1024xbf16, #tpu.memory_space<vmem>>, vector<16x768xbf16>
    %c96 = arith.constant 96 : index
    %c0_28 = arith.constant 0 : index
    %23 = vector.load %arg8[%c96, %c0_28] : memref<144x768xbf16, #tpu.memory_space<vmem>>, vector<16x768xbf16>
    tpu.vector_store %arg8[%c96, %c0_28], %22 {strides = array<i32>} : memref<144x768xbf16, #tpu.memory_space<vmem>>, vector<16x768xbf16>,
    %c0_29 = arith.constant 0 : index
    %c146 = arith.constant 146 : index
    %24 = vector.load %arg9[%c0_29, %c146] : memref<16x1024xbf16, #tpu.memory_space<vmem>>, vector<16x768xbf16>
    %c112 = arith.constant 112 : index
    %c0_30 = arith.constant 0 : index
    %25 = vector.load %arg8[%c112, %c0_30] : memref<144x768xbf16, #tpu.memory_space<vmem>>, vector<16x768xbf16>
    tpu.vector_store %arg8[%c112, %c0_30], %24 {strides = array<i32>} : memref<144x768xbf16, #tpu.memory_space<vmem>>, vector<16x768xbf16>,
    %c0_31 = arith.constant 0 : index
    %c147 = arith.constant 147 : index
    %26 = vector.load %arg9[%c0_31, %c147] : memref<16x1024xbf16, #tpu.memory_space<vmem>>, vector<16x768xbf16>
    %c128_32 = arith.constant 128 : index
    %c0_33 = arith.constant 0 : index
    %27 = vector.load %arg8[%c128_32, %c0_33] : memref<144x768xbf16, #tpu.memory_space<vmem>>, vector<16x768xbf16>
    tpu.vector_store %arg8[%c128_32, %c0_33], %26 {strides = array<i32>} : memref<144x768xbf16, #tpu.memory_space<vmem>>, vector<16x768xbf16>,
    %c0_34 = arith.constant 0 : index
    %c0_35 = arith.constant 0 : index
    %28 = vector.load %arg4[%c0_34, %c0_35] : memref<16x144xbf16, #tpu.memory_space<vmem>>, vector<16x144xbf16>
    %c0_36 = arith.constant 0 : index
    %c0_37 = arith.constant 0 : index
    %29 = vector.load %arg8[%c0_36, %c0_37] : memref<144x768xbf16, #tpu.memory_space<vmem>>, vector<144x768xbf16>
    %cst_38 = arith.constant dense<0.000000e+00> : vector<16x768xf32>
    %30 = tpu.matmul %28, %29, %cst_38 {dimension_numbers = #tpu.dot_dimension_numbers<[1], [0], [0], [1], [0, 0, 1, 1], [], []>} : vector<16x144xbf16>, vector<144x768xbf16>, vector<16x768xf32> -> vector<16x768xf32>
    %cst_39 = arith.constant dense<0.000000e+00> : vector<16x1xf32>
    %31 = tpu.matmul %30, %1, %cst_39 {dimension_numbers = #tpu.dot_dimension_numbers<[1], [0], [0], [1], [0, 0, 1, 1], [], []>} : vector<16x768xf32>, vector<768x1xf32>, vector<16x1xf32> -> vector<16x1xf32>
    %32 = arith.mulf %30, %30 : vector<16x768xf32>
    %cst_40 = arith.constant dense<0.000000e+00> : vector<16x1xf32>
    %33 = tpu.matmul %32, %1, %cst_40 {dimension_numbers = #tpu.dot_dimension_numbers<[1], [0], [0], [1], [0, 0, 1, 1], [], []>} : vector<16x768xf32>, vector<768x1xf32>, vector<16x1xf32> -> vector<16x1xf32>
    %cst_41 = arith.constant 0.001953125 : f32
    %34 = vector.broadcast %cst_41 : f32 to vector<16x1xf32>
    %35 = arith.mulf %31, %34 : vector<16x1xf32>
    %cst_42 = arith.constant 0.001953125 : f32
    %36 = vector.broadcast %cst_42 : f32 to vector<16x1xf32>
    %37 = arith.mulf %33, %36 : vector<16x1xf32>
    %38 = arith.mulf %35, %35 : vector<16x1xf32>
    %39 = arith.subf %37, %38 : vector<16x1xf32>
    %cst_43 = arith.constant 0.000000e+00 : f32
    %40 = vector.broadcast %cst_43 : f32 to vector<16x1xf32>
    %41 = arith.maximumf %39, %40 : vector<16x1xf32>
    %cst_44 = arith.constant 9.99999974E-6 : f32
    %42 = vector.broadcast %cst_44 : f32 to vector<16x1xf32>
    %43 = arith.addf %41, %42 : vector<16x1xf32>
    %44 = math.rsqrt %43 : vector<16x1xf32>
    %45 = arith.mulf %8, %44 : vector<16x1xf32>
    %46 = arith.mulf %35, %45 : vector<16x1xf32>
    %47 = arith.subf %9, %46 : vector<16x1xf32>
    %48 = vector.broadcast %45 : vector<16x1xf32> to vector<16x768xf32>
    %49 = arith.mulf %30, %48 : vector<16x768xf32>
    %50 = vector.broadcast %47 : vector<16x1xf32> to vector<16x768xf32>
    %51 = arith.addf %49, %50 : vector<16x768xf32>
    %cst_45 = arith.constant 0.000000e+00 : f32
    %52 = vector.broadcast %cst_45 : f32 to vector<16x768xf32>
    %53 = arith.maximumf %51, %52 : vector<16x768xf32>
    %54 = vector.broadcast %0 : vector<1x768xf32> to vector<16x768xf32>
    %55 = arith.mulf %53, %54 : vector<16x768xf32>
    %56 = arith.truncf %55 : vector<16x768xf32> to vector<16x768xbf16>
    %c0_46 = arith.constant 0 : index
    %c128_47 = arith.constant 128 : index
    %57 = vector.load %arg9[%c0_46, %c128_47] : memref<16x1024xbf16, #tpu.memory_space<vmem>>, vector<16x768xbf16>
    tpu.vector_store %arg9[%c0_46, %c128_47], %56 {strides = array<i32>} : memref<16x1024xbf16, #tpu.memory_space<vmem>>, vector<16x768xbf16>,
    %c0_48 = arith.constant 0 : index
    %c2 = arith.constant 2 : index
    %58 = vector.load %arg6[%c0_48, %c2] : memref<16x4xf32, #tpu.memory_space<vmem>>, vector<16x1xf32>
    %c0_49 = arith.constant 0 : index
    %c3 = arith.constant 3 : index
    %59 = vector.load %arg6[%c0_49, %c3] : memref<16x4xf32, #tpu.memory_space<vmem>>, vector<16x1xf32>
    %c0_50 = arith.constant 0 : index
    %c109_51 = arith.constant 109 : index
    %60 = vector.load %arg9[%c0_50, %c109_51] : memref<16x1024xbf16, #tpu.memory_space<vmem>>, vector<16x768xbf16>
    %c0_52 = arith.constant 0 : index
    %c0_53 = arith.constant 0 : index
    %61 = vector.load %arg8[%c0_52, %c0_53] : memref<144x768xbf16, #tpu.memory_space<vmem>>, vector<16x768xbf16>
    tpu.vector_store %arg8[%c0_52, %c0_53], %60 {strides = array<i32>} : memref<144x768xbf16, #tpu.memory_space<vmem>>, vector<16x768xbf16>,
    %c0_54 = arith.constant 0 : index
    %c110_55 = arith.constant 110 : index
    %62 = vector.load %arg9[%c0_54, %c110_55] : memref<16x1024xbf16, #tpu.memory_space<vmem>>, vector<16x768xbf16>
    %c16_56 = arith.constant 16 : index
    %c0_57 = arith.constant 0 : index
    %63 = vector.load %arg8[%c16_56, %c0_57] : memref<144x768xbf16, #tpu.memory_space<vmem>>, vector<16x768xbf16>
    tpu.vector_store %arg8[%c16_56, %c0_57], %62 {strides = array<i32>} : memref<144x768xbf16, #tpu.memory_space<vmem>>, vector<16x768xbf16>,
    %c0_58 = arith.constant 0 : index
    %c111_59 = arith.constant 111 : index
    %64 = vector.load %arg9[%c0_58, %c111_59] : memref<16x1024xbf16, #tpu.memory_space<vmem>>, vector<16x768xbf16>
    %c32_60 = arith.constant 32 : index
    %c0_61 = arith.constant 0 : index
    %65 = vector.load %arg8[%c32_60, %c0_61] : memref<144x768xbf16, #tpu.memory_space<vmem>>, vector<16x768xbf16>
    tpu.vector_store %arg8[%c32_60, %c0_61], %64 {strides = array<i32>} : memref<144x768xbf16, #tpu.memory_space<vmem>>, vector<16x768xbf16>,
    %c0_62 = arith.constant 0 : index
    %c127_63 = arith.constant 127 : index
    %66 = vector.load %arg9[%c0_62, %c127_63] : memref<16x1024xbf16, #tpu.memory_space<vmem>>, vector<16x768xbf16>
    %c48_64 = arith.constant 48 : index
    %c0_65 = arith.constant 0 : index
    %67 = vector.load %arg8[%c48_64, %c0_65] : memref<144x768xbf16, #tpu.memory_space<vmem>>, vector<16x768xbf16>
    tpu.vector_store %arg8[%c48_64, %c0_65], %66 {strides = array<i32>} : memref<144x768xbf16, #tpu.memory_space<vmem>>, vector<16x768xbf16>,
    %c0_66 = arith.constant 0 : index
    %c128_67 = arith.constant 128 : index
    %68 = vector.load %arg9[%c0_66, %c128_67] : memref<16x1024xbf16, #tpu.memory_space<vmem>>, vector<16x768xbf16>
    %c64_68 = arith.constant 64 : index
    %c0_69 = arith.constant 0 : index
    %69 = vector.load %arg8[%c64_68, %c0_69] : memref<144x768xbf16, #tpu.memory_space<vmem>>, vector<16x768xbf16>
    tpu.vector_store %arg8[%c64_68, %c0_69], %68 {strides = array<i32>} : memref<144x768xbf16, #tpu.memory_space<vmem>>, vector<16x768xbf16>,
    %c0_70 = arith.constant 0 : index
    %c129_71 = arith.constant 129 : index
    %70 = vector.load %arg9[%c0_70, %c129_71] : memref<16x1024xbf16, #tpu.memory_space<vmem>>, vector<16x768xbf16>
    %c80_72 = arith.constant 80 : index
    %c0_73 = arith.constant 0 : index
    %71 = vector.load %arg8[%c80_72, %c0_73] : memref<144x768xbf16, #tpu.memory_space<vmem>>, vector<16x768xbf16>
    tpu.vector_store %arg8[%c80_72, %c0_73], %70 {strides = array<i32>} : memref<144x768xbf16, #tpu.memory_space<vmem>>, vector<16x768xbf16>,
    %c0_74 = arith.constant 0 : index
    %c145_75 = arith.constant 145 : index
    %72 = vector.load %arg9[%c0_74, %c145_75] : memref<16x1024xbf16, #tpu.memory_space<vmem>>, vector<16x768xbf16>
    %c96_76 = arith.constant 96 : index
    %c0_77 = arith.constant 0 : index
    %73 = vector.load %arg8[%c96_76, %c0_77] : memref<144x768xbf16, #tpu.memory_space<vmem>>, vector<16x768xbf16>
    tpu.vector_store %arg8[%c96_76, %c0_77], %72 {strides = array<i32>} : memref<144x768xbf16, #tpu.memory_space<vmem>>, vector<16x768xbf16>,
    %c0_78 = arith.constant 0 : index
    %c146_79 = arith.constant 146 : index
    %74 = vector.load %arg9[%c0_78, %c146_79] : memref<16x1024xbf16, #tpu.memory_space<vmem>>, vector<16x768xbf16>
    %c112_80 = arith.constant 112 : index
    %c0_81 = arith.constant 0 : index
    %75 = vector.load %arg8[%c112_80, %c0_81] : memref<144x768xbf16, #tpu.memory_space<vmem>>, vector<16x768xbf16>
    tpu.vector_store %arg8[%c112_80, %c0_81], %74 {strides = array<i32>} : memref<144x768xbf16, #tpu.memory_space<vmem>>, vector<16x768xbf16>,
    %c0_82 = arith.constant 0 : index
    %c147_83 = arith.constant 147 : index
    %76 = vector.load %arg9[%c0_82, %c147_83] : memref<16x1024xbf16, #tpu.memory_space<vmem>>, vector<16x768xbf16>
    %c128_84 = arith.constant 128 : index
    %c0_85 = arith.constant 0 : index
    %77 = vector.load %arg8[%c128_84, %c0_85] : memref<144x768xbf16, #tpu.memory_space<vmem>>, vector<16x768xbf16>
    tpu.vector_store %arg8[%c128_84, %c0_85], %76 {strides = array<i32>} : memref<144x768xbf16, #tpu.memory_space<vmem>>, vector<16x768xbf16>,
    %c0_86 = arith.constant 0 : index
    %c0_87 = arith.constant 0 : index
    %78 = vector.load %arg5[%c0_86, %c0_87] : memref<16x144xbf16, #tpu.memory_space<vmem>>, vector<16x144xbf16>
    %c0_88 = arith.constant 0 : index
    %c0_89 = arith.constant 0 : index
    %79 = vector.load %arg8[%c0_88, %c0_89] : memref<144x768xbf16, #tpu.memory_space<vmem>>, vector<144x768xbf16>
    %cst_90 = arith.constant dense<0.000000e+00> : vector<16x768xf32>
    %80 = tpu.matmul %78, %79, %cst_90 {dimension_numbers = #tpu.dot_dimension_numbers<[1], [0], [0], [1], [0, 0, 1, 1], [], []>} : vector<16x144xbf16>, vector<144x768xbf16>, vector<16x768xf32> -> vector<16x768xf32>
    %cst_91 = arith.constant dense<0.000000e+00> : vector<16x1xf32>
    %81 = tpu.matmul %80, %1, %cst_91 {dimension_numbers = #tpu.dot_dimension_numbers<[1], [0], [0], [1], [0, 0, 1, 1], [], []>} : vector<16x768xf32>, vector<768x1xf32>, vector<16x1xf32> -> vector<16x1xf32>
    %82 = arith.mulf %80, %80 : vector<16x768xf32>
    %cst_92 = arith.constant dense<0.000000e+00> : vector<16x1xf32>
    %83 = tpu.matmul %82, %1, %cst_92 {dimension_numbers = #tpu.dot_dimension_numbers<[1], [0], [0], [1], [0, 0, 1, 1], [], []>} : vector<16x768xf32>, vector<768x1xf32>, vector<16x1xf32> -> vector<16x1xf32>
    %cst_93 = arith.constant 0.001953125 : f32
    %84 = vector.broadcast %cst_93 : f32 to vector<16x1xf32>
    %85 = arith.mulf %81, %84 : vector<16x1xf32>
    %cst_94 = arith.constant 0.001953125 : f32
    %86 = vector.broadcast %cst_94 : f32 to vector<16x1xf32>
    %87 = arith.mulf %83, %86 : vector<16x1xf32>
    %88 = arith.mulf %85, %85 : vector<16x1xf32>
    %89 = arith.subf %87, %88 : vector<16x1xf32>
    %cst_95 = arith.constant 0.000000e+00 : f32
    %90 = vector.broadcast %cst_95 : f32 to vector<16x1xf32>
    %91 = arith.maximumf %89, %90 : vector<16x1xf32>
    %cst_96 = arith.constant 9.99999974E-6 : f32
    %92 = vector.broadcast %cst_96 : f32 to vector<16x1xf32>
    %93 = arith.addf %91, %92 : vector<16x1xf32>
    %94 = math.rsqrt %93 : vector<16x1xf32>
    %95 = arith.mulf %58, %94 : vector<16x1xf32>
    %96 = arith.mulf %85, %95 : vector<16x1xf32>
    %97 = arith.subf %59, %96 : vector<16x1xf32>
    %98 = vector.broadcast %95 : vector<16x1xf32> to vector<16x768xf32>
    %99 = arith.mulf %80, %98 : vector<16x768xf32>
    %100 = vector.broadcast %97 : vector<16x1xf32> to vector<16x768xf32>
    %101 = arith.addf %99, %100 : vector<16x768xf32>
    %102 = arith.truncf %101 : vector<16x768xf32> to vector<16x768xbf16>
    %c0_97 = arith.constant 0 : index
    %c0_98 = arith.constant 0 : index
    %103 = vector.load %arg7[%c0_97, %c0_98] : memref<16x768xbf16, #tpu.memory_space<vmem>>, vector<16x768xbf16>
    tpu.vector_store %arg7[%c0_97, %c0_98], %102 {strides = array<i32>} : memref<16x768xbf16, #tpu.memory_space<vmem>>, vector<16x768xbf16>,
    return
  }
  func.func @transform_0(%arg0: i32) -> (i32, i32) {
    %c0_i32 = arith.constant 0 : i32
    %c0_i32_0 = arith.constant 0 : i32
    %c0_i32_1 = arith.constant 0 : i32
    return %c0_i32, %c0_i32_0 : i32, i32
  }
  func.func @transform_1(%arg0: i32) -> (i32, i32) {
    %c0_i32 = arith.constant 0 : i32
    %c0_i32_0 = arith.constant 0 : i32
    %c0_i32_1 = arith.constant 0 : i32
    return %c0_i32, %c0_i32_0 : i32, i32
  }
  func.func @transform_2(%arg0: i32) -> (i32, i32) {
    %c0_i32 = arith.constant 0 : i32
    %c0_i32_0 = arith.constant 0 : i32
    %c0_i32_1 = arith.constant 0 : i32
    return %c0_i32, %c0_i32_0 : i32, i32
  }
  func.func @transform_3(%arg0: i32) -> (i32, i32) {
    %c0_i32 = arith.constant 0 : i32
    %c0_i32_0 = arith.constant 0 : i32
    %c0_i32_1 = arith.constant 0 : i32
    return %c0_i32, %c0_i32_0 : i32, i32
  }
  func.func @transform_4(%arg0: i32) -> (i32, i32) {
    %c0_i32 = arith.constant 0 : i32
    %c0_i32_0 = arith.constant 0 : i32
    %c0_i32_1 = arith.constant 0 : i32
    return %c0_i32, %c0_i32_0 : i32, i32
  }
  func.func @transform_5(%arg0: i32) -> (i32, i32) {
    %c0_i32 = arith.constant 0 : i32
    %c0_i32_0 = arith.constant 0 : i32
    %c0_i32_1 = arith.constant 0 : i32
    return %c0_i32, %c0_i32_0 : i32, i32
  }
  func.func @transform_6(%arg0: i32) -> (i32, i32) {
    %c0_i32 = arith.constant 0 : i32
    %c0_i32_0 = arith.constant 0 : i32
    %c0_i32_1 = arith.constant 0 : i32
    return %c0_i32, %c0_i32_0 : i32, i32
  }
}

</mosaic_0001>

<llo_original>
// kernel: tpu_custom_call.1
$region0: #{tpu_custom_call.1}
  #allocation0 [shape = 'u32[]', space=smem, size = 0x4, offset = 0x4, fixed_abs, tag = 'smem constant byte address 0x4 - core index']
  #allocation1 [shape = 'u32[72,128]{1,0:T(1,128)}', space=vmem, size = 0x9000, scoped, tag = 'internal scratch']
  #allocation2 [shape = 'bf16[144,768]{1,0:T(8,128)(2,1)}', space=vmem, size = 0x36000, scoped, tag = 'scratch operand']
  #allocation3 [shape = 'bf16[16,1024]{1,0:T(8,128)(2,1)}', space=vmem, size = 0x8000, scoped, tag = 'scratch operand']
  %s0 = inlined_call_operand.vmem [shape: bf16[16,768], index: 0, kind: input, shape index: {}]
  %s1 = inlined_call_operand.vmem [shape: f32[1,768], index: 1, kind: input, shape index: {}]
  %s2 = inlined_call_operand.vmem [shape: f32[768,1], index: 2, kind: input, shape index: {}]
  %s3 = inlined_call_operand.vmem [shape: bf16[16,144], index: 3, kind: input, shape index: {}]
  %s4 = inlined_call_operand.vmem [shape: bf16[16,144], index: 4, kind: input, shape index: {}]
  %s5 = inlined_call_operand.vmem [shape: f32[16,4], index: 5, kind: input, shape index: {}]
  %s6 = inlined_call_operand.hbm [shape: bf16[16,768], index: 6, kind: output, shape index: {}]
  %s7 = sld [smem:[#allocation0]]
  $region34: #{tpu_custom_call.1} parent=0
    _
  %s9 = ssub.s32 1, %s7
  %s10 = scalar_select 0, %s9, %s7
  $region1: #{tpu_custom_call.1} parent=0
    #allocation4 [shape = 'u8[24576]{0}', space=vmem, size = 0x6000, scoped, tag = 'output window, operand 0, single buffered']
    #allocation5 [shape = 's32[1]{0}', space=sflag, size = 0x4, scoped, tag = 'scoped memory for tpu_custom_call.1']
    %11 = vsyncpa [#allocation5], 0
    // Predicated region
    $region2: #{tpu_custom_call.1} parent=1 // pred_check
      _
    $region3: #{tpu_custom_call.1} parent=1 // pred_check_branch
      %13 = sbr.rel (0) target = $region5
    $region4: #{tpu_custom_call.1} parent=1 // pred_region
      _
    $region5: #{tpu_custom_call.1} parent=1 // pred_fallthru
      _
    // Predicated region
    $region6: #{tpu_custom_call.1} parent=1 // pred_check
      _
    $region7: #{tpu_custom_call.1} parent=1 // pred_check_branch
      %15 = sbr.rel (0) target = $region9
    $region8: #{tpu_custom_call.1} parent=1 // pred_region
      _
    $region9: #{tpu_custom_call.1} parent=1 // pred_fallthru
      _
    // Predicated region
    $region10: #{tpu_custom_call.1} parent=1 // pred_check
      _
    $region11: #{tpu_custom_call.1} parent=1 // pred_check_branch
      %17 = sbr.rel (0) target = $region13
    $region12: #{tpu_custom_call.1} parent=1 // pred_region
      _
    $region13: #{tpu_custom_call.1} parent=1 // pred_fallthru
      _
    // Predicated region
    $region14: #{tpu_custom_call.1} parent=1 // pred_check
      _
    $region15: #{tpu_custom_call.1} parent=1 // pred_check_branch
      %19 = sbr.rel (0) target = $region17
    $region16: #{tpu_custom_call.1} parent=1 // pred_region
      _
    $region17: #{tpu_custom_call.1} parent=1 // pred_fallthru
      _
    // Predicated region
    $region18: #{tpu_custom_call.1} parent=1 // pred_check
      _
    $region19: #{tpu_custom_call.1} parent=1 // pred_check_branch
      %21 = sbr.rel (0) target = $region21
    $region20: #{tpu_custom_call.1} parent=1 // pred_region
      _
    $region21: #{tpu_custom_call.1} parent=1 // pred_fallthru
      _
    // Predicated region
    $region22: #{tpu_custom_call.1} parent=1 // pred_check
      _
    $region23: #{tpu_custom_call.1} parent=1 // pred_check_branch
      %23 = sbr.rel (0) target = $region25
    $region24: #{tpu_custom_call.1} parent=1 // pred_region
      _
    $region25: #{tpu_custom_call.1} parent=1 // pred_fallthru
      _
    %v25 = vld [vmem:[%s1] sm:$0x3f]
    %v26 = vld [vmem:[%s2] sm:$0xff]
    %v27 = vld [vmem:[%s2 + $0x8] sm:$0xff]
    %v28 = vld [vmem:[%s2 + $0x10] sm:$0xff]
    %v29 = vld [vmem:[%s2 + $0x18] sm:$0xff]
    %v30 = vld [vmem:[%s2 + $0x20] sm:$0xff]
    %v31 = vld [vmem:[%s2 + $0x28] sm:$0xff]
    %v32 = vld [vmem:[%s2 + $0x30] sm:$0xff]
    %v33 = vld [vmem:[%s2 + $0x38] sm:$0xff]
    %v34 = vld [vmem:[%s2 + $0x40] sm:$0xff]
    %v35 = vld [vmem:[%s2 + $0x48] sm:$0xff]
    %v36 = vld [vmem:[%s2 + $0x50] sm:$0xff]
    %v37 = vld [vmem:[%s2 + $0x58] sm:$0xff]
    %v38 = vld [vmem:[%s2 + $0x60] sm:$0xff]
    %v39 = vld [vmem:[%s2 + $0x68] sm:$0xff]
    %v40 = vld [vmem:[%s2 + $0x70] sm:$0xff]
    %v41 = vld [vmem:[%s2 + $0x78] sm:$0xff]
    %v42 = vld [vmem:[%s2 + $0x80] sm:$0xff]
    %v43 = vld [vmem:[%s2 + $0x88] sm:$0xff]
    %v44 = vld [vmem:[%s2 + $0x90] sm:$0xff]
    %v45 = vld [vmem:[%s2 + $0x98] sm:$0xff]
    %v46 = vld [vmem:[%s2 + $0xa0] sm:$0xff]
    %v47 = vld [vmem:[%s2 + $0xa8] sm:$0xff]
    %v48 = vld [vmem:[%s2 + $0xb0] sm:$0xff]
    %v49 = vld [vmem:[%s2 + $0xb8] sm:$0xff]
    %v50 = vld [vmem:[%s2 + $0xc0] sm:$0xff]
    %v51 = vld [vmem:[%s2 + $0xc8] sm:$0xff]
    %v52 = vld [vmem:[%s2 + $0xd0] sm:$0xff]
    %v53 = vld [vmem:[%s2 + $0xd8] sm:$0xff]
    %v54 = vld [vmem:[%s2 + $0xe0] sm:$0xff]
    %v55 = vld [vmem:[%s2 + $0xe8] sm:$0xff]
    %v56 = vld [vmem:[%s2 + $0xf0] sm:$0xff]
    %v57 = vld [vmem:[%s2 + $0xf8] sm:$0xff]
    %v58 = vld [vmem:[%s2 + $0x100] sm:$0xff]
    %v59 = vld [vmem:[%s2 + $0x108] sm:$0xff]
    %v60 = vld [vmem:[%s2 + $0x110] sm:$0xff]
    %v61 = vld [vmem:[%s2 + $0x118] sm:$0xff]
    %v62 = vld [vmem:[%s2 + $0x120] sm:$0xff]
    %v63 = vld [vmem:[%s2 + $0x128] sm:$0xff]
    %v64 = vld [vmem:[%s2 + $0x130] sm:$0xff]
    %v65 = vld [vmem:[%s2 + $0x138] sm:$0xff]
    %v66 = vld [vmem:[%s2 + $0x140] sm:$0xff]
    %v67 = vld [vmem:[%s2 + $0x148] sm:$0xff]
    %v68 = vld [vmem:[%s2 + $0x150] sm:$0xff]
    %v69 = vld [vmem:[%s2 + $0x158] sm:$0xff]
    %v70 = vld [vmem:[%s2 + $0x160] sm:$0xff]
    %v71 = vld [vmem:[%s2 + $0x168] sm:$0xff]
    %v72 = vld [vmem:[%s2 + $0x170] sm:$0xff]
    %v73 = vld [vmem:[%s2 + $0x178] sm:$0xff]
    %v74 = vld [vmem:[%s2 + $0x180] sm:$0xff]
    %v75 = vld [vmem:[%s2 + $0x188] sm:$0xff]
    %v76 = vld [vmem:[%s2 + $0x190] sm:$0xff]
    %v77 = vld [vmem:[%s2 + $0x198] sm:$0xff]
    %v78 = vld [vmem:[%s2 + $0x1a0] sm:$0xff]
    %v79 = vld [vmem:[%s2 + $0x1a8] sm:$0xff]
    %v80 = vld [vmem:[%s2 + $0x1b0] sm:$0xff]
    %v81 = vld [vmem:[%s2 + $0x1b8] sm:$0xff]
    %v82 = vld [vmem:[%s2 + $0x1c0] sm:$0xff]
    %v83 = vld [vmem:[%s2 + $0x1c8] sm:$0xff]
    %v84 = vld [vmem:[%s2 + $0x1d0] sm:$0xff]
    %v85 = vld [vmem:[%s2 + $0x1d8] sm:$0xff]
    %v86 = vld [vmem:[%s2 + $0x1e0] sm:$0xff]
    %v87 = vld [vmem:[%s2 + $0x1e8] sm:$0xff]
    %v88 = vld [vmem:[%s2 + $0x1f0] sm:$0xff]
    %v89 = vld [vmem:[%s2 + $0x1f8] sm:$0xff]
    %v90 = vld [vmem:[%s2 + $0x200] sm:$0xff]
    %v91 = vld [vmem:[%s2 + $0x208] sm:$0xff]
    %v92 = vld [vmem:[%s2 + $0x210] sm:$0xff]
    %v93 = vld [vmem:[%s2 + $0x218] sm:$0xff]
    %v94 = vld [vmem:[%s2 + $0x220] sm:$0xff]
    %v95 = vld [vmem:[%s2 + $0x228] sm:$0xff]
    %v96 = vld [vmem:[%s2 + $0x230] sm:$0xff]
    %v97 = vld [vmem:[%s2 + $0x238] sm:$0xff]
    %v98 = vld [vmem:[%s2 + $0x240] sm:$0xff]
    %v99 = vld [vmem:[%s2 + $0x248] sm:$0xff]
    %v100 = vld [vmem:[%s2 + $0x250] sm:$0xff]
    %v101 = vld [vmem:[%s2 + $0x258] sm:$0xff]
    %v102 = vld [vmem:[%s2 + $0x260] sm:$0xff]
    %v103 = vld [vmem:[%s2 + $0x268] sm:$0xff]
    %v104 = vld [vmem:[%s2 + $0x270] sm:$0xff]
    %v105 = vld [vmem:[%s2 + $0x278] sm:$0xff]
    %v106 = vld [vmem:[%s2 + $0x280] sm:$0xff]
    %v107 = vld [vmem:[%s2 + $0x288] sm:$0xff]
    %v108 = vld [vmem:[%s2 + $0x290] sm:$0xff]
    %v109 = vld [vmem:[%s2 + $0x298] sm:$0xff]
    %v110 = vld [vmem:[%s2 + $0x2a0] sm:$0xff]
    %v111 = vld [vmem:[%s2 + $0x2a8] sm:$0xff]
    %v112 = vld [vmem:[%s2 + $0x2b0] sm:$0xff]
    %v113 = vld [vmem:[%s2 + $0x2b8] sm:$0xff]
    %v114 = vld [vmem:[%s2 + $0x2c0] sm:$0xff]
    %v115 = vld [vmem:[%s2 + $0x2c8] sm:$0xff]
    %v116 = vld [vmem:[%s2 + $0x2d0] sm:$0xff]
    %v117 = vld [vmem:[%s2 + $0x2d8] sm:$0xff]
    %v118 = vld [vmem:[%s2 + $0x2e0] sm:$0xff]
    %v119 = vld [vmem:[%s2 + $0x2e8] sm:$0xff]
    %v120 = vld [vmem:[%s2 + $0x2f0] sm:$0xff]
    %v121 = vld [vmem:[%s2 + $0x2f8] sm:$0xff]
    %122 = vst [vmem:[#allocation3] sm:$0xf] 0
    %123 = vst [vmem:[#allocation3 + $0x20] sm:$0xf] 0
    %124 = vst [vmem:[#allocation3 + $0x1c] sm:$0xf] 0
    %125 = vst [vmem:[#allocation3 + $0x3c] sm:$0xf] 0
    %v126 = vld [vmem:[%s0] sm:$0xff]
    %v127 = vld [vmem:[%s0 + $0x8] sm:$0xff]
    %v128 = vld [vmem:[%s0 + $0x10] sm:$0xff]
    %v129 = vld [vmem:[%s0 + $0x18] sm:$0xff]
    %v130 = vld [vmem:[%s0 + $0x20] sm:$0xff]
    %v131 = vld [vmem:[%s0 + $0x28] sm:$0xff]
    %132 = vst [vmem:[#allocation3 + $0x4] sm:$0xff] %v126
    %133 = vst [vmem:[#allocation3 + $0xc] sm:$0xff] %v127
    %134 = vst [vmem:[#allocation3 + $0x14] sm:$0xff] %v128
    %135 = vst [vmem:[#allocation3 + $0x24] sm:$0xff] %v129
    %136 = vst [vmem:[#allocation3 + $0x2c] sm:$0xff] %v130
    %137 = vst [vmem:[#allocation3 + $0x34] sm:$0xff] %v131
    %v138 = vld [vmem:[%s5] sm:$0xff]
    %v139 = vld [vmem:[%s5 + $0x8] sm:$0xff]
    %v140 = vld [vmem:[#allocation3] sm:$0xff]
    %v141 = vld [vmem:[#allocation3 + $0x8] sm:$0xff]
    %v142 = vld [vmem:[#allocation3 + $0x10] sm:$0xff]
    %v143 = vld [vmem:[#allocation3 + $0x18] sm:$0xf]
    %v144 = vld [vmem:[#allocation3 + $0x20] sm:$0xff]
    %v145 = vld [vmem:[#allocation3 + $0x28] sm:$0xff]
    %v146 = vld [vmem:[#allocation3 + $0x30] sm:$0xff]
    %v147 = vld [vmem:[#allocation3 + $0x38] sm:$0xf]
    %156 = vrot.lane.b32.xlu0 %v140, 19
    %v157 = vpop.permute.xlu0 %156
    %158 = vrot.lane.b32.xlu0 %v141, 19
    %v159 = vpop.permute.xlu0 %158
    %160 = vrot.lane.b32.xlu0 %v142, 19
    %v161 = vpop.permute.xlu0 %160
    %162 = vrot.lane.b32.xlu0 %v143, 19
    %v163 = vpop.permute.xlu0 %162
    %164 = vrot.lane.b32.xlu0 %v144, 19
    %v165 = vpop.permute.xlu0 %164
    %166 = vrot.lane.b32.xlu0 %v145, 19
    %v167 = vpop.permute.xlu0 %166
    %168 = vrot.lane.b32.xlu0 %v146, 19
    %v169 = vpop.permute.xlu0 %168
    %170 = vrot.lane.b32.xlu0 %v147, 19
    %v171 = vpop.permute.xlu0 %170
    %v172 = vrot.slane %v157, 4
    %v173 = vrot.slane %v159, 4
    %v174 = vrot.slane %v161, 4
    %v175 = vrot.slane %v163, 4
    %v176 = vrot.slane %v165, 4
    %v177 = vrot.slane %v167, 4
    %v178 = vrot.slane %v169, 4
    %v179 = vrot.slane %v171, 4
    %vm180 = vcmask 1043456
    %v181 = vsel %vm180, %v172, %v173
    %vm182 = vcmask 154624
    %v183 = vsel %vm182, %v157, %v181
    %v184 = vsel %vm180, %v173, %v174
    %v185 = vsel %vm182, %v159, %v184
    %v186 = vsel %vm180, %v174, %v175
    %v187 = vsel %vm182, %v161, %v186
    %v188 = vsel %vm180, %v176, %v177
    %v189 = vsel %vm182, %v165, %v188
    %v190 = vsel %vm180, %v177, %v178
    %v191 = vsel %vm182, %v167, %v190
    %v192 = vsel %vm180, %v178, %v179
    %v193 = vsel %vm182, %v169, %v192
    %200 = vst [vmem:[#allocation2] sm:$0xff] %v183
    %201 = vst [vmem:[#allocation2 + $0x8] sm:$0xff] %v185
    %202 = vst [vmem:[#allocation2 + $0x10] sm:$0xff] %v187
    %203 = vst [vmem:[#allocation2 + $0x18] sm:$0xff] %v189
    %204 = vst [vmem:[#allocation2 + $0x20] sm:$0xff] %v191
    %205 = vst [vmem:[#allocation2 + $0x28] sm:$0xff] %v193
    %v206 = vld [vmem:[#allocation3] sm:$0xff]
    %v207 = vld [vmem:[#allocation3 + $0x8] sm:$0xff]
    %v208 = vld [vmem:[#allocation3 + $0x10] sm:$0xff]
    %v209 = vld [vmem:[#allocation3 + $0x18] sm:$0xf]
    %v210 = vld [vmem:[#allocation3 + $0x20] sm:$0xff]
    %v211 = vld [vmem:[#allocation3 + $0x28] sm:$0xff]
    %v212 = vld [vmem:[#allocation3 + $0x30] sm:$0xff]
    %v213 = vld [vmem:[#allocation3 + $0x38] sm:$0xf]
    %222 = vrot.lane.b32.xlu0 %v206, 18
    %v223 = vpop.permute.xlu0 %222
    %224 = vrot.lane.b32.xlu0 %v207, 18
    %v225 = vpop.permute.xlu0 %224
    %226 = vrot.lane.b32.xlu0 %v208, 18
    %v227 = vpop.permute.xlu0 %226
    %228 = vrot.lane.b32.xlu0 %v209, 18
    %v229 = vpop.permute.xlu0 %228
    %230 = vrot.lane.b32.xlu0 %v210, 18
    %v231 = vpop.permute.xlu0 %230
    %232 = vrot.lane.b32.xlu0 %v211, 18
    %v233 = vpop.permute.xlu0 %232
    %234 = vrot.lane.b32.xlu0 %v212, 18
    %v235 = vpop.permute.xlu0 %234
    %236 = vrot.lane.b32.xlu0 %v213, 18
    %v237 = vpop.permute.xlu0 %236
    %v238 = vrot.slane %v223, 4
    %v239 = vrot.slane %v225, 4
    %v240 = vrot.slane %v227, 4
    %v241 = vrot.slane %v229, 4
    %v242 = vrot.slane %v231, 4
    %v243 = vrot.slane %v233, 4
    %v244 = vrot.slane %v235, 4
    %v245 = vrot.slane %v237, 4
    %v246 = vsel %vm180, %v238, %v239
    %vm247 = vcmask 146432
    %v248 = vsel %vm247, %v223, %v246
    %v249 = vsel %vm180, %v239, %v240
    %v250 = vsel %vm247, %v225, %v249
    %v251 = vsel %vm180, %v240, %v241
    %v252 = vsel %vm247, %v227, %v251
    %v253 = vsel %vm180, %v242, %v243
    %v254 = vsel %vm247, %v231, %v253
    %v255 = vsel %vm180, %v243, %v244
    %v256 = vsel %vm247, %v233, %v255
    %v257 = vsel %vm180, %v244, %v245
    %v258 = vsel %vm247, %v235, %v257
    %265 = vst [vmem:[#allocation2 + $0x30] sm:$0xff] %v248
    %266 = vst [vmem:[#allocation2 + $0x38] sm:$0xff] %v250
    %267 = vst [vmem:[#allocation2 + $0x40] sm:$0xff] %v252
    %268 = vst [vmem:[#allocation2 + $0x48] sm:$0xff] %v254
    %269 = vst [vmem:[#allocation2 + $0x50] sm:$0xff] %v256
    %270 = vst [vmem:[#allocation2 + $0x58] sm:$0xff] %v258
    %v271 = vld [vmem:[#allocation3] sm:$0xff]
    %v272 = vld [vmem:[#allocation3 + $0x8] sm:$0xff]
    %v273 = vld [vmem:[#allocation3 + $0x10] sm:$0xff]
    %v274 = vld [vmem:[#allocation3 + $0x18] sm:$0xf]
    %v275 = vld [vmem:[#allocation3 + $0x20] sm:$0xff]
    %v276 = vld [vmem:[#allocation3 + $0x28] sm:$0xff]
    %v277 = vld [vmem:[#allocation3 + $0x30] sm:$0xff]
    %v278 = vld [vmem:[#allocation3 + $0x38] sm:$0xf]
    %287 = vrot.lane.b32.xlu0 %v271, 17
    %v288 = vpop.permute.xlu0 %287
    %289 = vrot.lane.b32.xlu0 %v272, 17
    %v290 = vpop.permute.xlu0 %289
    %291 = vrot.lane.b32.xlu0 %v273, 17
    %v292 = vpop.permute.xlu0 %291
    %293 = vrot.lane.b32.xlu0 %v274, 17
    %v294 = vpop.permute.xlu0 %293
    %295 = vrot.lane.b32.xlu0 %v275, 17
    %v296 = vpop.permute.xlu0 %295
    %297 = vrot.lane.b32.xlu0 %v276, 17
    %v298 = vpop.permute.xlu0 %297
    %299 = vrot.lane.b32.xlu0 %v277, 17
    %v300 = vpop.permute.xlu0 %299
    %301 = vrot.lane.b32.xlu0 %v278, 17
    %v302 = vpop.permute.xlu0 %301
    %v303 = vrot.slane %v288, 4
    %v304 = vrot.slane %v290, 4
    %v305 = vrot.slane %v292, 4
    %v306 = vrot.slane %v294, 4
    %v307 = vrot.slane %v296, 4
    %v308 = vrot.slane %v298, 4
    %v309 = vrot.slane %v300, 4
    %v310 = vrot.slane %v302, 4
    %v311 = vsel %vm180, %v303, %v304
    %vm312 = vcmask 138240
    %v313 = vsel %vm312, %v288, %v311
    %v314 = vsel %vm180, %v304, %v305
    %v315 = vsel %vm312, %v290, %v314
    %v316 = vsel %vm180, %v305, %v306
    %v317 = vsel %vm312, %v292, %v316
    %v318 = vsel %vm180, %v307, %v308
    %v319 = vsel %vm312, %v296, %v318
    %v320 = vsel %vm180, %v308, %v309
    %v321 = vsel %vm312, %v298, %v320
    %v322 = vsel %vm180, %v309, %v310
    %v323 = vsel %vm312, %v300, %v322
    %330 = vst [vmem:[#allocation2 + $0x60] sm:$0xff] %v313
    %331 = vst [vmem:[#allocation2 + $0x68] sm:$0xff] %v315
    %332 = vst [vmem:[#allocation2 + $0x70] sm:$0xff] %v317
    %333 = vst [vmem:[#allocation2 + $0x78] sm:$0xff] %v319
    %334 = vst [vmem:[#allocation2 + $0x80] sm:$0xff] %v321
    %335 = vst [vmem:[#allocation2 + $0x88] sm:$0xff] %v323
    %v336 = vld [vmem:[#allocation3] sm:$0xff]
    %v337 = vld [vmem:[#allocation3 + $0x8] sm:$0xff]
    %v338 = vld [vmem:[#allocation3 + $0x10] sm:$0xff]
    %v339 = vld [vmem:[#allocation3 + $0x18] sm:$0xf]
    %v340 = vld [vmem:[#allocation3 + $0x20] sm:$0xff]
    %v341 = vld [vmem:[#allocation3 + $0x28] sm:$0xff]
    %v342 = vld [vmem:[#allocation3 + $0x30] sm:$0xff]
    %v343 = vld [vmem:[#allocation3 + $0x38] sm:$0xf]
    %352 = vrot.lane.b32.xlu0 %v336, 1
    %v353 = vpop.permute.xlu0 %352
    %354 = vrot.lane.b32.xlu0 %v337, 1
    %v355 = vpop.permute.xlu0 %354
    %356 = vrot.lane.b32.xlu0 %v338, 1
    %v357 = vpop.permute.xlu0 %356
    %358 = vrot.lane.b32.xlu0 %v339, 1
    %v359 = vpop.permute.xlu0 %358
    %360 = vrot.lane.b32.xlu0 %v340, 1
    %v361 = vpop.permute.xlu0 %360
    %362 = vrot.lane.b32.xlu0 %v341, 1
    %v363 = vpop.permute.xlu0 %362
    %364 = vrot.lane.b32.xlu0 %v342, 1
    %v365 = vpop.permute.xlu0 %364
    %366 = vrot.lane.b32.xlu0 %v343, 1
    %v367 = vpop.permute.xlu0 %366
    %v368 = vrot.slane %v353, 4
    %v369 = vrot.slane %v355, 4
    %v370 = vrot.slane %v357, 4
    %v371 = vrot.slane %v359, 4
    %v372 = vrot.slane %v361, 4
    %v373 = vrot.slane %v363, 4
    %v374 = vrot.slane %v365, 4
    %v375 = vrot.slane %v367, 4
    %v376 = vsel %vm180, %v368, %v369
    %vm377 = vcmask 7168
    %v378 = vsel %vm377, %v353, %v376
    %v379 = vsel %vm180, %v369, %v370
    %v380 = vsel %vm377, %v355, %v379
    %v381 = vsel %vm180, %v370, %v371
    %v382 = vsel %vm377, %v357, %v381
    %v383 = vsel %vm180, %v372, %v373
    %v384 = vsel %vm377, %v361, %v383
    %v385 = vsel %vm180, %v373, %v374
    %v386 = vsel %vm377, %v363, %v385
    %v387 = vsel %vm180, %v374, %v375
    %v388 = vsel %vm377, %v365, %v387
    %395 = vst [vmem:[#allocation2 + $0x90] sm:$0xff] %v378
    %396 = vst [vmem:[#allocation2 + $0x98] sm:$0xff] %v380
    %397 = vst [vmem:[#allocation2 + $0xa0] sm:$0xff] %v382
    %398 = vst [vmem:[#allocation2 + $0xa8] sm:$0xff] %v384
    %399 = vst [vmem:[#allocation2 + $0xb0] sm:$0xff] %v386
    %400 = vst [vmem:[#allocation2 + $0xb8] sm:$0xff] %v388
    %v401 = vld [vmem:[#allocation3 + $0x4] sm:$0xff]
    %v402 = vld [vmem:[#allocation3 + $0xc] sm:$0xff]
    %v403 = vld [vmem:[#allocation3 + $0x14] sm:$0xff]
    %v404 = vld [vmem:[#allocation3 + $0x24] sm:$0xff]
    %v405 = vld [vmem:[#allocation3 + $0x2c] sm:$0xff]
    %v406 = vld [vmem:[#allocation3 + $0x34] sm:$0xff]
    %407 = vst [vmem:[#allocation2 + $0xc0] sm:$0xff] %v401
    %408 = vst [vmem:[#allocation2 + $0xc8] sm:$0xff] %v402
    %409 = vst [vmem:[#allocation2 + $0xd0] sm:$0xff] %v403
    %410 = vst [vmem:[#allocation2 + $0xd8] sm:$0xff] %v404
    %411 = vst [vmem:[#allocation2 + $0xe0] sm:$0xff] %v405
    %412 = vst [vmem:[#allocation2 + $0xe8] sm:$0xff] %v406
    %v413 = vld [vmem:[#allocation3 + $0x4] sm:$0xff]
    %v414 = vld [vmem:[#allocation3 + $0xc] sm:$0xff]
    %v415 = vld [vmem:[#allocation3 + $0x14] sm:$0xff]
    %v416 = vld [vmem:[#allocation3 + $0x1c] sm:$0xf]
    %v417 = vld [vmem:[#allocation3 + $0x24] sm:$0xff]
    %v418 = vld [vmem:[#allocation3 + $0x2c] sm:$0xff]
    %v419 = vld [vmem:[#allocation3 + $0x34] sm:$0xff]
    %v420 = vld [vmem:[#allocation3 + $0x3c] sm:$0xf]
    %429 = vrot.lane.b32.xlu0 %v413, 127
    %v430 = vpop.permute.xlu0 %429
    %431 = vrot.lane.b32.xlu0 %v414, 127
    %v432 = vpop.permute.xlu0 %431
    %433 = vrot.lane.b32.xlu0 %v415, 127
    %v434 = vpop.permute.xlu0 %433
    %435 = vrot.lane.b32.xlu0 %v416, 127
    %v436 = vpop.permute.xlu0 %435
    %437 = vrot.lane.b32.xlu0 %v417, 127
    %v438 = vpop.permute.xlu0 %437
    %439 = vrot.lane.b32.xlu0 %v418, 127
    %v440 = vpop.permute.xlu0 %439
    %441 = vrot.lane.b32.xlu0 %v419, 127
    %v442 = vpop.permute.xlu0 %441
    %443 = vrot.lane.b32.xlu0 %v420, 127
    %v444 = vpop.permute.xlu0 %443
    %v445 = vrot.slane %v430, 4
    %v446 = vrot.slane %v432, 4
    %v447 = vrot.slane %v434, 4
    %v448 = vrot.slane %v436, 4
    %v449 = vrot.slane %v438, 4
    %v450 = vrot.slane %v440, 4
    %v451 = vrot.slane %v442, 4
    %v452 = vrot.slane %v444, 4
    %v453 = vsel %vm180, %v445, %v446
    %vm454 = vcmask 1039360
    %v455 = vsel %vm454, %v430, %v453
    %v456 = vsel %vm180, %v446, %v447
    %v457 = vsel %vm454, %v432, %v456
    %v458 = vsel %vm180, %v447, %v448
    %v459 = vsel %vm454, %v434, %v458
    %v460 = vsel %vm180, %v449, %v450
    %v461 = vsel %vm454, %v438, %v460
    %v462 = vsel %vm180, %v450, %v451
    %v463 = vsel %vm454, %v440, %v462
    %v464 = vsel %vm180, %v451, %v452
    %v465 = vsel %vm454, %v442, %v464
    %472 = vst [vmem:[#allocation2 + $0xf0] sm:$0xff] %v455
    %473 = vst [vmem:[#allocation2 + $0xf8] sm:$0xff] %v457
    %474 = vst [vmem:[#allocation2 + $0x100] sm:$0xff] %v459
    %475 = vst [vmem:[#allocation2 + $0x108] sm:$0xff] %v461
    %476 = vst [vmem:[#allocation2 + $0x110] sm:$0xff] %v463
    %477 = vst [vmem:[#allocation2 + $0x118] sm:$0xff] %v465
    %v478 = vld [vmem:[#allocation3 + $0x4] sm:$0xff]
    %v479 = vld [vmem:[#allocation3 + $0xc] sm:$0xff]
    %v480 = vld [vmem:[#allocation3 + $0x14] sm:$0xff]
    %v481 = vld [vmem:[#allocation3 + $0x1c] sm:$0xf]
    %v482 = vld [vmem:[#allocation3 + $0x24] sm:$0xff]
    %v483 = vld [vmem:[#allocation3 + $0x2c] sm:$0xff]
    %v484 = vld [vmem:[#allocation3 + $0x34] sm:$0xff]
    %v485 = vld [vmem:[#allocation3 + $0x3c] sm:$0xf]
    %494 = vrot.lane.b32.xlu0 %v478, 111
    %v495 = vpop.permute.xlu0 %494
    %496 = vrot.lane.b32.xlu0 %v479, 111
    %v497 = vpop.permute.xlu0 %496
    %498 = vrot.lane.b32.xlu0 %v480, 111
    %v499 = vpop.permute.xlu0 %498
    %500 = vrot.lane.b32.xlu0 %v481, 111
    %v501 = vpop.permute.xlu0 %500
    %502 = vrot.lane.b32.xlu0 %v482, 111
    %v503 = vpop.permute.xlu0 %502
    %504 = vrot.lane.b32.xlu0 %v483, 111
    %v505 = vpop.permute.xlu0 %504
    %506 = vrot.lane.b32.xlu0 %v484, 111
    %v507 = vpop.permute.xlu0 %506
    %508 = vrot.lane.b32.xlu0 %v485, 111
    %v509 = vpop.permute.xlu0 %508
    %v510 = vrot.slane %v495, 4
    %v511 = vrot.slane %v497, 4
    %v512 = vrot.slane %v499, 4
    %v513 = vrot.slane %v501, 4
    %v514 = vrot.slane %v503, 4
    %v515 = vrot.slane %v505, 4
    %v516 = vrot.slane %v507, 4
    %v517 = vrot.slane %v509, 4
    %v518 = vsel %vm180, %v510, %v511
    %vm519 = vcmask 908288
    %v520 = vsel %vm519, %v495, %v518
    %v521 = vsel %vm180, %v511, %v512
    %v522 = vsel %vm519, %v497, %v521
    %v523 = vsel %vm180, %v512, %v513
    %v524 = vsel %vm519, %v499, %v523
    %v525 = vsel %vm180, %v514, %v515
    %v526 = vsel %vm519, %v503, %v525
    %v527 = vsel %vm180, %v515, %v516
    %v528 = vsel %vm519, %v505, %v527
    %v529 = vsel %vm180, %v516, %v517
    %v530 = vsel %vm519, %v507, %v529
    %537 = vst [vmem:[#allocation2 + $0x120] sm:$0xff] %v520
    %538 = vst [vmem:[#allocation2 + $0x128] sm:$0xff] %v522
    %539 = vst [vmem:[#allocation2 + $0x130] sm:$0xff] %v524
    %540 = vst [vmem:[#allocation2 + $0x138] sm:$0xff] %v526
    %541 = vst [vmem:[#allocation2 + $0x140] sm:$0xff] %v528
    %542 = vst [vmem:[#allocation2 + $0x148] sm:$0xff] %v530
    %v543 = vld [vmem:[#allocation3 + $0x4] sm:$0xff]
    %v544 = vld [vmem:[#allocation3 + $0xc] sm:$0xff]
    %v545 = vld [vmem:[#allocation3 + $0x14] sm:$0xff]
    %v546 = vld [vmem:[#allocation3 + $0x1c] sm:$0xf]
    %v547 = vld [vmem:[#allocation3 + $0x24] sm:$0xff]
    %v548 = vld [vmem:[#allocation3 + $0x2c] sm:$0xff]
    %v549 = vld [vmem:[#allocation3 + $0x34] sm:$0xff]
    %v550 = vld [vmem:[#allocation3 + $0x3c] sm:$0xf]
    %559 = vrot.lane.b32.xlu0 %v543, 110
    %v560 = vpop.permute.xlu0 %559
    %561 = vrot.lane.b32.xlu0 %v544, 110
    %v562 = vpop.permute.xlu0 %561
    %563 = vrot.lane.b32.xlu0 %v545, 110
    %v564 = vpop.permute.xlu0 %563
    %565 = vrot.lane.b32.xlu0 %v546, 110
    %v566 = vpop.permute.xlu0 %565
    %567 = vrot.lane.b32.xlu0 %v547, 110
    %v568 = vpop.permute.xlu0 %567
    %569 = vrot.lane.b32.xlu0 %v548, 110
    %v570 = vpop.permute.xlu0 %569
    %571 = vrot.lane.b32.xlu0 %v549, 110
    %v572 = vpop.permute.xlu0 %571
    %573 = vrot.lane.b32.xlu0 %v550, 110
    %v574 = vpop.permute.xlu0 %573
    %v575 = vrot.slane %v560, 4
    %v576 = vrot.slane %v562, 4
    %v577 = vrot.slane %v564, 4
    %v578 = vrot.slane %v566, 4
    %v579 = vrot.slane %v568, 4
    %v580 = vrot.slane %v570, 4
    %v581 = vrot.slane %v572, 4
    %v582 = vrot.slane %v574, 4
    %v583 = vsel %vm180, %v575, %v576
    %vm584 = vcmask 900096
    %v585 = vsel %vm584, %v560, %v583
    %v586 = vsel %vm180, %v576, %v577
    %v587 = vsel %vm584, %v562, %v586
    %v588 = vsel %vm180, %v577, %v578
    %v589 = vsel %vm584, %v564, %v588
    %v590 = vsel %vm180, %v579, %v580
    %v591 = vsel %vm584, %v568, %v590
    %v592 = vsel %vm180, %v580, %v581
    %v593 = vsel %vm584, %v570, %v592
    %v594 = vsel %vm180, %v581, %v582
    %v595 = vsel %vm584, %v572, %v594
    %602 = vst [vmem:[#allocation2 + $0x150] sm:$0xff] %v585
    %603 = vst [vmem:[#allocation2 + $0x158] sm:$0xff] %v587
    %604 = vst [vmem:[#allocation2 + $0x160] sm:$0xff] %v589
    %605 = vst [vmem:[#allocation2 + $0x168] sm:$0xff] %v591
    %606 = vst [vmem:[#allocation2 + $0x170] sm:$0xff] %v593
    %607 = vst [vmem:[#allocation2 + $0x178] sm:$0xff] %v595
    %v608 = vld [vmem:[#allocation3 + $0x4] sm:$0xff]
    %v609 = vld [vmem:[#allocation3 + $0xc] sm:$0xff]
    %v610 = vld [vmem:[#allocation3 + $0x14] sm:$0xff]
    %v611 = vld [vmem:[#allocation3 + $0x1c] sm:$0xf]
    %v612 = vld [vmem:[#allocation3 + $0x24] sm:$0xff]
    %v613 = vld [vmem:[#allocation3 + $0x2c] sm:$0xff]
    %v614 = vld [vmem:[#allocation3 + $0x34] sm:$0xff]
    %v615 = vld [vmem:[#allocation3 + $0x3c] sm:$0xf]
    %624 = vrot.lane.b32.xlu0 %v608, 109
    %v625 = vpop.permute.xlu0 %624
    %626 = vrot.lane.b32.xlu0 %v609, 109
    %v627 = vpop.permute.xlu0 %626
    %628 = vrot.lane.b32.xlu0 %v610, 109
    %v629 = vpop.permute.xlu0 %628
    %630 = vrot.lane.b32.xlu0 %v611, 109
    %v631 = vpop.permute.xlu0 %630
    %632 = vrot.lane.b32.xlu0 %v612, 109
    %v633 = vpop.permute.xlu0 %632
    %634 = vrot.lane.b32.xlu0 %v613, 109
    %v635 = vpop.permute.xlu0 %634
    %636 = vrot.lane.b32.xlu0 %v614, 109
    %v637 = vpop.permute.xlu0 %636
    %638 = vrot.lane.b32.xlu0 %v615, 109
    %v639 = vpop.permute.xlu0 %638
    %v640 = vrot.slane %v625, 4
    %v641 = vrot.slane %v627, 4
    %v642 = vrot.slane %v629, 4
    %v643 = vrot.slane %v631, 4
    %v644 = vrot.slane %v633, 4
    %v645 = vrot.slane %v635, 4
    %v646 = vrot.slane %v637, 4
    %v647 = vrot.slane %v639, 4
    %v648 = vsel %vm180, %v640, %v641
    %vm649 = vcmask 891904
    %v650 = vsel %vm649, %v625, %v648
    %v651 = vsel %vm180, %v641, %v642
    %v652 = vsel %vm649, %v627, %v651
    %v653 = vsel %vm180, %v642, %v643
    %v654 = vsel %vm649, %v629, %v653
    %v655 = vsel %vm180, %v644, %v645
    %v656 = vsel %vm649, %v633, %v655
    %v657 = vsel %vm180, %v645, %v646
    %v658 = vsel %vm649, %v635, %v657
    %v659 = vsel %vm180, %v646, %v647
    %v660 = vsel %vm649, %v637, %v659
    %667 = vst [vmem:[#allocation2 + $0x180] sm:$0xff] %v650
    %668 = vst [vmem:[#allocation2 + $0x188] sm:$0xff] %v652
    %669 = vst [vmem:[#allocation2 + $0x190] sm:$0xff] %v654
    %670 = vst [vmem:[#allocation2 + $0x198] sm:$0xff] %v656
    %671 = vst [vmem:[#allocation2 + $0x1a0] sm:$0xff] %v658
    %672 = vst [vmem:[#allocation2 + $0x1a8] sm:$0xff] %v660
    %v673 = vld [vmem:[%s3] sm:$0xff]
    %v674 = vld [vmem:[%s3 + $0x8] sm:$0xff]
    %v675 = vld [vmem:[#allocation2] sm:$0xff]
    %v676 = vld [vmem:[#allocation2 + $0x8] sm:$0xff]
    %v677 = vld [vmem:[#allocation2 + $0x10] sm:$0xff]
    %v678 = vld [vmem:[#allocation2 + $0x18] sm:$0xff]
    %v679 = vld [vmem:[#allocation2 + $0x20] sm:$0xff]
    %v680 = vld [vmem:[#allocation2 + $0x28] sm:$0xff]
    %v681 = vld [vmem:[#allocation2 + $0x30] sm:$0xff]
    %v682 = vld [vmem:[#allocation2 + $0x38] sm:$0xff]
    %v683 = vld [vmem:[#allocation2 + $0x40] sm:$0xff]
    %v684 = vld [vmem:[#allocation2 + $0x48] sm:$0xff]
    %v685 = vld [vmem:[#allocation2 + $0x50] sm:$0xff]
    %v686 = vld [vmem:[#allocation2 + $0x58] sm:$0xff]
    %v687 = vld [vmem:[#allocation2 + $0x60] sm:$0xff]
    %v688 = vld [vmem:[#allocation2 + $0x68] sm:$0xff]
    %v689 = vld [vmem:[#allocation2 + $0x70] sm:$0xff]
    %v690 = vld [vmem:[#allocation2 + $0x78] sm:$0xff]
    %v691 = vld [vmem:[#allocation2 + $0x80] sm:$0xff]
    %v692 = vld [vmem:[#allocation2 + $0x88] sm:$0xff]
    %v693 = vld [vmem:[#allocation2 + $0x90] sm:$0xff]
    %v694 = vld [vmem:[#allocation2 + $0x98] sm:$0xff]
    %v695 = vld [vmem:[#allocation2 + $0xa0] sm:$0xff]
    %v696 = vld [vmem:[#allocation2 + $0xa8] sm:$0xff]
    %v697 = vld [vmem:[#allocation2 + $0xb0] sm:$0xff]
    %v698 = vld [vmem:[#allocation2 + $0xb8] sm:$0xff]
    %v699 = vld [vmem:[#allocation2 + $0xc0] sm:$0xff]
    %v700 = vld [vmem:[#allocation2 + $0xc8] sm:$0xff]
    %v701 = vld [vmem:[#allocation2 + $0xd0] sm:$0xff]
    %v702 = vld [vmem:[#allocation2 + $0xd8] sm:$0xff]
    %v703 = vld [vmem:[#allocation2 + $0xe0] sm:$0xff]
    %v704 = vld [vmem:[#allocation2 + $0xe8] sm:$0xff]
    %v705 = vld [vmem:[#allocation2 + $0xf0] sm:$0xff]
    %v706 = vld [vmem:[#allocation2 + $0xf8] sm:$0xff]
    %v707 = vld [vmem:[#allocation2 + $0x100] sm:$0xff]
    %v708 = vld [vmem:[#allocation2 + $0x108] sm:$0xff]
    %v709 = vld [vmem:[#allocation2 + $0x110] sm:$0xff]
    %v710 = vld [vmem:[#allocation2 + $0x118] sm:$0xff]
    %v711 = vld [vmem:[#allocation2 + $0x120] sm:$0xff]
    %v712 = vld [vmem:[#allocation2 + $0x128] sm:$0xff]
    %v713 = vld [vmem:[#allocation2 + $0x130] sm:$0xff]
    %v714 = vld [vmem:[#allocation2 + $0x138] sm:$0xff]
    %v715 = vld [vmem:[#allocation2 + $0x140] sm:$0xff]
    %v716 = vld [vmem:[#allocation2 + $0x148] sm:$0xff]
    %v717 = vld [vmem:[#allocation2 + $0x150] sm:$0xff]
    %v718 = vld [vmem:[#allocation2 + $0x158] sm:$0xff]
    %v719 = vld [vmem:[#allocation2 + $0x160] sm:$0xff]
    %v720 = vld [vmem:[#allocation2 + $0x168] sm:$0xff]
    %v721 = vld [vmem:[#allocation2 + $0x170] sm:$0xff]
    %v722 = vld [vmem:[#allocation2 + $0x178] sm:$0xff]
    %v723 = vld [vmem:[#allocation2 + $0x180] sm:$0xff]
    %v724 = vld [vmem:[#allocation2 + $0x188] sm:$0xff]
    %v725 = vld [vmem:[#allocation2 + $0x190] sm:$0xff]
    %v726 = vld [vmem:[#allocation2 + $0x198] sm:$0xff]
    %v727 = vld [vmem:[#allocation2 + $0x1a0] sm:$0xff]
    %v728 = vld [vmem:[#allocation2 + $0x1a8] sm:$0xff]
    %v731 = vunpack.c.l.b16 %v673
    %v732 = vunpack.c.h.b16 %v673
    %v733 = vunpack.c.l.b16 %v674
    %v734 = vunpack.c.h.b16 %v674
    %v735 = vpack.c.b16 %v733, %v731
    %v736 = vpack.c.b16 %v734, %v732
    %v792 = vunpack.c.l.b16 %v675
    %v793 = vunpack.c.h.b16 %v675
    %v794 = vunpack.c.l.b16 %v676
    %v795 = vunpack.c.h.b16 %v676
    %v796 = vunpack.c.l.b16 %v677
    %v797 = vunpack.c.h.b16 %v677
    %v798 = vunpack.c.l.b16 %v678
    %v799 = vunpack.c.h.b16 %v678
    %v800 = vunpack.c.l.b16 %v679
    %v801 = vunpack.c.h.b16 %v679
    %v802 = vunpack.c.l.b16 %v680
    %v803 = vunpack.c.h.b16 %v680
    %v804 = vunpack.c.l.b16 %v681
    %v805 = vunpack.c.h.b16 %v681
    %v806 = vunpack.c.l.b16 %v682
    %v807 = vunpack.c.h.b16 %v682
    %v808 = vunpack.c.l.b16 %v683
    %v809 = vunpack.c.h.b16 %v683
    %v810 = vunpack.c.l.b16 %v684
    %v811 = vunpack.c.h.b16 %v684
    %v812 = vunpack.c.l.b16 %v685
    %v813 = vunpack.c.h.b16 %v685
    %v814 = vunpack.c.l.b16 %v686
    %v815 = vunpack.c.h.b16 %v686
    %v816 = vunpack.c.l.b16 %v687
    %v817 = vunpack.c.h.b16 %v687
    %v818 = vunpack.c.l.b16 %v688
    %v819 = vunpack.c.h.b16 %v688
    %v820 = vunpack.c.l.b16 %v689
    %v821 = vunpack.c.h.b16 %v689
    %v822 = vunpack.c.l.b16 %v690
    %v823 = vunpack.c.h.b16 %v690
    %v824 = vunpack.c.l.b16 %v691
    %v825 = vunpack.c.h.b16 %v691
    %v826 = vunpack.c.l.b16 %v692
    %v827 = vunpack.c.h.b16 %v692
    %v828 = vunpack.c.l.b16 %v693
    %v829 = vunpack.c.h.b16 %v693
    %v830 = vunpack.c.l.b16 %v694
    %v831 = vunpack.c.h.b16 %v694
    %v832 = vunpack.c.l.b16 %v695
    %v833 = vunpack.c.h.b16 %v695
    %v834 = vunpack.c.l.b16 %v696
    %v835 = vunpack.c.h.b16 %v696
    %v836 = vunpack.c.l.b16 %v697
    %v837 = vunpack.c.h.b16 %v697
    %v838 = vunpack.c.l.b16 %v698
    %v839 = vunpack.c.h.b16 %v698
    %v840 = vunpack.c.l.b16 %v699
    %v841 = vunpack.c.h.b16 %v699
    %v842 = vunpack.c.l.b16 %v700
    %v843 = vunpack.c.h.b16 %v700
    %v844 = vunpack.c.l.b16 %v701
    %v845 = vunpack.c.h.b16 %v701
    %v846 = vunpack.c.l.b16 %v702
    %v847 = vunpack.c.h.b16 %v702
    %v848 = vunpack.c.l.b16 %v703
    %v849 = vunpack.c.h.b16 %v703
    %v850 = vunpack.c.l.b16 %v704
    %v851 = vunpack.c.h.b16 %v704
    %v852 = vunpack.c.l.b16 %v705
    %v853 = vunpack.c.h.b16 %v705
    %v854 = vunpack.c.l.b16 %v706
    %v855 = vunpack.c.h.b16 %v706
    %v856 = vunpack.c.l.b16 %v707
    %v857 = vunpack.c.h.b16 %v707
    %v858 = vunpack.c.l.b16 %v708
    %v859 = vunpack.c.h.b16 %v708
    %v860 = vunpack.c.l.b16 %v709
    %v861 = vunpack.c.h.b16 %v709
    %v862 = vunpack.c.l.b16 %v710
    %v863 = vunpack.c.h.b16 %v710
    %v864 = vunpack.c.l.b16 %v711
    %v865 = vunpack.c.h.b16 %v711
    %v866 = vunpack.c.l.b16 %v712
    %v867 = vunpack.c.h.b16 %v712
    %v868 = vunpack.c.l.b16 %v713
    %v869 = vunpack.c.h.b16 %v713
    %v870 = vunpack.c.l.b16 %v714
    %v871 = vunpack.c.h.b16 %v714
    %v872 = vunpack.c.l.b16 %v715
    %v873 = vunpack.c.h.b16 %v715
    %v874 = vunpack.c.l.b16 %v716
    %v875 = vunpack.c.h.b16 %v716
    %v876 = vunpack.c.l.b16 %v717
    %v877 = vunpack.c.h.b16 %v717
    %v878 = vunpack.c.l.b16 %v718
    %v879 = vunpack.c.h.b16 %v718
    %v880 = vunpack.c.l.b16 %v719
    %v881 = vunpack.c.h.b16 %v719
    %v882 = vunpack.c.l.b16 %v720
    %v883 = vunpack.c.h.b16 %v720
    %v884 = vunpack.c.l.b16 %v721
    %v885 = vunpack.c.h.b16 %v721
    %v886 = vunpack.c.l.b16 %v722
    %v887 = vunpack.c.h.b16 %v722
    %v888 = vunpack.c.l.b16 %v723
    %v889 = vunpack.c.h.b16 %v723
    %v890 = vunpack.c.l.b16 %v724
    %v891 = vunpack.c.h.b16 %v724
    %v892 = vunpack.c.l.b16 %v725
    %v893 = vunpack.c.h.b16 %v725
    %v894 = vunpack.c.l.b16 %v726
    %v895 = vunpack.c.h.b16 %v726
    %v896 = vunpack.c.l.b16 %v727
    %v897 = vunpack.c.h.b16 %v727
    %v898 = vunpack.c.l.b16 %v728
    %v899 = vunpack.c.h.b16 %v728
    %v900 = vpack.c.b16 %v798, %v792
    %v901 = vpack.c.b16 %v799, %v793
    %v902 = vpack.c.b16 %v800, %v794
    %v903 = vpack.c.b16 %v801, %v795
    %v904 = vpack.c.b16 %v802, %v796
    %v905 = vpack.c.b16 %v803, %v797
    %v906 = vpack.c.b16 %v810, %v804
    %v907 = vpack.c.b16 %v811, %v805
    %v908 = vpack.c.b16 %v812, %v806
    %v909 = vpack.c.b16 %v813, %v807
    %v910 = vpack.c.b16 %v814, %v808
    %v911 = vpack.c.b16 %v815, %v809
    %v912 = vpack.c.b16 %v822, %v816
    %v913 = vpack.c.b16 %v823, %v817
    %v914 = vpack.c.b16 %v824, %v818
    %v915 = vpack.c.b16 %v825, %v819
    %v916 = vpack.c.b16 %v826, %v820
    %v917 = vpack.c.b16 %v827, %v821
    %v918 = vpack.c.b16 %v834, %v828
    %v919 = vpack.c.b16 %v835, %v829
    %v920 = vpack.c.b16 %v836, %v830
    %v921 = vpack.c.b16 %v837, %v831
    %v922 = vpack.c.b16 %v838, %v832
    %v923 = vpack.c.b16 %v839, %v833
    %v924 = vpack.c.b16 %v846, %v840
    %v925 = vpack.c.b16 %v847, %v841
    %v926 = vpack.c.b16 %v848, %v842
    %v927 = vpack.c.b16 %v849, %v843
    %v928 = vpack.c.b16 %v850, %v844
    %v929 = vpack.c.b16 %v851, %v845
    %v930 = vpack.c.b16 %v858, %v852
    %v931 = vpack.c.b16 %v859, %v853
    %v932 = vpack.c.b16 %v860, %v854
    %v933 = vpack.c.b16 %v861, %v855
    %v934 = vpack.c.b16 %v862, %v856
    %v935 = vpack.c.b16 %v863, %v857
    %v936 = vpack.c.b16 %v870, %v864
    %v937 = vpack.c.b16 %v871, %v865
    %v938 = vpack.c.b16 %v872, %v866
    %v939 = vpack.c.b16 %v873, %v867
    %v940 = vpack.c.b16 %v874, %v868
    %v941 = vpack.c.b16 %v875, %v869
    %v942 = vpack.c.b16 %v882, %v876
    %v943 = vpack.c.b16 %v883, %v877
    %v944 = vpack.c.b16 %v884, %v878
    %v945 = vpack.c.b16 %v885, %v879
    %v946 = vpack.c.b16 %v886, %v880
    %v947 = vpack.c.b16 %v887, %v881
    %v948 = vpack.c.b16 %v894, %v888
    %v949 = vpack.c.b16 %v895, %v889
    %v950 = vpack.c.b16 %v896, %v890
    %v951 = vpack.c.b16 %v897, %v891
    %v952 = vpack.c.b16 %v898, %v892
    %v953 = vpack.c.b16 %v899, %v893
    %vm1008 = vcmask 130048
    %v1010 = vsel %vm1008, %v736, 0
    %1012 = vmatpush.bf16.msra.mxu0 %v942
    %1013 = vmatpush.bf16.msra.mxu0 %v936
    %1014 = vmatpush.bf16.msra.mxu0 %v930
    %1015 = vmatpush.bf16.msra.mxu0 %v924
    %1016 = vmatpush.bf16.msra.mxu0 %v918
    %1017 = vmatpush.bf16.msra.mxu0 %v912
    %1018 = vmatpush.bf16.msra.mxu0 %v906
    %1019 = vmatpush.bf16.msra.mxu0 %v900
    %1020 = vmatmul.bf16.gmra.mxu0 %v735
    %v1021 = vpop.f32.mrf.mxu0
    %v1022 = vadd.f32 0.0, %v1021
    %v1023 = vpop.f32.mrf.mxu0
    %v1024 = vadd.f32 0.0, %v1023
    %1025 = vdwg.mxu0
    %1026 = vmatpush.bf16.msra.mxu0 0
    %1027 = vmatpush.bf16.msra.mxu0 0
    %1028 = vmatpush.bf16.msra.mxu0 0
    %1029 = vmatpush.bf16.msra.mxu0 0
    %1030 = vmatpush.bf16.msra.mxu0 0
    %1031 = vmatpush.bf16.msra.mxu0 0
    %1032 = vmatpush.bf16.msra.mxu0 0
    %1033 = vmatpush.bf16.msra.mxu0 %v948
    %1034 = vmatmul.bf16.gmra.mxu0 %v1010
    %v1035 = vpop.f32.mrf.mxu0
    %v1036 = vadd.f32 %v1022, %v1035
    %v1037 = vpop.f32.mrf.mxu0
    %v1038 = vadd.f32 %v1024, %v1037
    %1039 = vdwg.mxu0
    %1040 = vmatpush.bf16.msra.mxu0 %v943
    %1041 = vmatpush.bf16.msra.mxu0 %v937
    %1042 = vmatpush.bf16.msra.mxu0 %v931
    %1043 = vmatpush.bf16.msra.mxu0 %v925
    %1044 = vmatpush.bf16.msra.mxu0 %v919
    %1045 = vmatpush.bf16.msra.mxu0 %v913
    %1046 = vmatpush.bf16.msra.mxu0 %v907
    %1047 = vmatpush.bf16.msra.mxu0 %v901
    %1048 = vmatmul.bf16.gmra.mxu0 %v735
    %v1049 = vpop.f32.mrf.mxu0
    %v1050 = vadd.f32 0.0, %v1049
    %v1051 = vpop.f32.mrf.mxu0
    %v1052 = vadd.f32 0.0, %v1051
    %1053 = vdwg.mxu0
    %1054 = vmatpush.bf16.msra.mxu0 0
    %1055 = vmatpush.bf16.msra.mxu0 0
    %1056 = vmatpush.bf16.msra.mxu0 0
    %1057 = vmatpush.bf16.msra.mxu0 0
    %1058 = vmatpush.bf16.msra.mxu0 0
    %1059 = vmatpush.bf16.msra.mxu0 0
    %1060 = vmatpush.bf16.msra.mxu0 0
    %1061 = vmatpush.bf16.msra.mxu0 %v949
    %1062 = vmatmul.bf16.gmra.mxu0 %v1010
    %v1063 = vpop.f32.mrf.mxu0
    %v1064 = vadd.f32 %v1050, %v1063
    %v1065 = vpop.f32.mrf.mxu0
    %v1066 = vadd.f32 %v1052, %v1065
    %1067 = vdwg.mxu0
    %1068 = vmatpush.bf16.msra.mxu0 %v944
    %1069 = vmatpush.bf16.msra.mxu0 %v938
    %1070 = vmatpush.bf16.msra.mxu0 %v932
    %1071 = vmatpush.bf16.msra.mxu0 %v926
    %1072 = vmatpush.bf16.msra.mxu0 %v920
    %1073 = vmatpush.bf16.msra.mxu0 %v914
    %1074 = vmatpush.bf16.msra.mxu0 %v908
    %1075 = vmatpush.bf16.msra.mxu0 %v902
    %1076 = vmatmul.bf16.gmra.mxu0 %v735
    %v1077 = vpop.f32.mrf.mxu0
    %v1078 = vadd.f32 0.0, %v1077
    %v1079 = vpop.f32.mrf.mxu0
    %v1080 = vadd.f32 0.0, %v1079
    %1081 = vdwg.mxu0
    %1082 = vmatpush.bf16.msra.mxu0 0
    %1083 = vmatpush.bf16.msra.mxu0 0
    %1084 = vmatpush.bf16.msra.mxu0 0
    %1085 = vmatpush.bf16.msra.mxu0 0
    %1086 = vmatpush.bf16.msra.mxu0 0
    %1087 = vmatpush.bf16.msra.mxu0 0
    %1088 = vmatpush.bf16.msra.mxu0 0
    %1089 = vmatpush.bf16.msra.mxu0 %v950
    %1090 = vmatmul.bf16.gmra.mxu0 %v1010
    %v1091 = vpop.f32.mrf.mxu0
    %v1092 = vadd.f32 %v1078, %v1091
    %v1093 = vpop.f32.mrf.mxu0
    %v1094 = vadd.f32 %v1080, %v1093
    %1095 = vdwg.mxu0
    %1096 = vmatpush.bf16.msra.mxu0 %v945
    %1097 = vmatpush.bf16.msra.mxu0 %v939
    %1098 = vmatpush.bf16.msra.mxu0 %v933
    %1099 = vmatpush.bf16.msra.mxu0 %v927
    %1100 = vmatpush.bf16.msra.mxu0 %v921
    %1101 = vmatpush.bf16.msra.mxu0 %v915
    %1102 = vmatpush.bf16.msra.mxu0 %v909
    %1103 = vmatpush.bf16.msra.mxu0 %v903
    %1104 = vmatmul.bf16.gmra.mxu0 %v735
    %v1105 = vpop.f32.mrf.mxu0
    %v1106 = vadd.f32 0.0, %v1105
    %v1107 = vpop.f32.mrf.mxu0
    %v1108 = vadd.f32 0.0, %v1107
    %1109 = vdwg.mxu0
    %1110 = vmatpush.bf16.msra.mxu0 0
    %1111 = vmatpush.bf16.msra.mxu0 0
    %1112 = vmatpush.bf16.msra.mxu0 0
    %1113 = vmatpush.bf16.msra.mxu0 0
    %1114 = vmatpush.bf16.msra.mxu0 0
    %1115 = vmatpush.bf16.msra.mxu0 0
    %1116 = vmatpush.bf16.msra.mxu0 0
    %1117 = vmatpush.bf16.msra.mxu0 %v951
    %1118 = vmatmul.bf16.gmra.mxu0 %v1010
    %v1119 = vpop.f32.mrf.mxu0
    %v1120 = vadd.f32 %v1106, %v1119
    %v1121 = vpop.f32.mrf.mxu0
    %v1122 = vadd.f32 %v1108, %v1121
    %1123 = vdwg.mxu0
    %1124 = vmatpush.bf16.msra.mxu0 %v946
    %1125 = vmatpush.bf16.msra.mxu0 %v940
    %1126 = vmatpush.bf16.msra.mxu0 %v934
    %1127 = vmatpush.bf16.msra.mxu0 %v928
    %1128 = vmatpush.bf16.msra.mxu0 %v922
    %1129 = vmatpush.bf16.msra.mxu0 %v916
    %1130 = vmatpush.bf16.msra.mxu0 %v910
    %1131 = vmatpush.bf16.msra.mxu0 %v904
    %1132 = vmatmul.bf16.gmra.mxu0 %v735
    %v1133 = vpop.f32.mrf.mxu0
    %v1134 = vadd.f32 0.0, %v1133
    %v1135 = vpop.f32.mrf.mxu0
    %v1136 = vadd.f32 0.0, %v1135
    %1137 = vdwg.mxu0
    %1138 = vmatpush.bf16.msra.mxu0 0
    %1139 = vmatpush.bf16.msra.mxu0 0
    %1140 = vmatpush.bf16.msra.mxu0 0
    %1141 = vmatpush.bf16.msra.mxu0 0
    %1142 = vmatpush.bf16.msra.mxu0 0
    %1143 = vmatpush.bf16.msra.mxu0 0
    %1144 = vmatpush.bf16.msra.mxu0 0
    %1145 = vmatpush.bf16.msra.mxu0 %v952
    %1146 = vmatmul.bf16.gmra.mxu0 %v1010
    %v1147 = vpop.f32.mrf.mxu0
    %v1148 = vadd.f32 %v1134, %v1147
    %v1149 = vpop.f32.mrf.mxu0
    %v1150 = vadd.f32 %v1136, %v1149
    %1151 = vdwg.mxu0
    %1152 = vmatpush.bf16.msra.mxu0 %v947
    %1153 = vmatpush.bf16.msra.mxu0 %v941
    %1154 = vmatpush.bf16.msra.mxu0 %v935
    %1155 = vmatpush.bf16.msra.mxu0 %v929
    %1156 = vmatpush.bf16.msra.mxu0 %v923
    %1157 = vmatpush.bf16.msra.mxu0 %v917
    %1158 = vmatpush.bf16.msra.mxu0 %v911
    %1159 = vmatpush.bf16.msra.mxu0 %v905
    %1160 = vmatmul.bf16.gmra.mxu0 %v735
    %v1161 = vpop.f32.mrf.mxu0
    %v1162 = vadd.f32 0.0, %v1161
    %v1163 = vpop.f32.mrf.mxu0
    %v1164 = vadd.f32 0.0, %v1163
    %1165 = vdwg.mxu0
    %1166 = vmatpush.bf16.msra.mxu0 0
    %1167 = vmatpush.bf16.msra.mxu0 0
    %1168 = vmatpush.bf16.msra.mxu0 0
    %1169 = vmatpush.bf16.msra.mxu0 0
    %1170 = vmatpush.bf16.msra.mxu0 0
    %1171 = vmatpush.bf16.msra.mxu0 0
    %1172 = vmatpush.bf16.msra.mxu0 0
    %1173 = vmatpush.bf16.msra.mxu0 %v953
    %1174 = vmatmul.bf16.gmra.mxu0 %v1010
    %v1175 = vpop.f32.mrf.mxu0
    %v1176 = vadd.f32 %v1162, %v1175
    %v1177 = vpop.f32.mrf.mxu0
    %v1178 = vadd.f32 %v1164, %v1177
    %1179 = vdwg.mxu0
    %1180 = vmatpush.msra.mxu0 %v41
    %1181 = vmatpush.msra.mxu0 %v40
    %1182 = vmatpush.msra.mxu0 %v39
    %1183 = vmatpush.msra.mxu0 %v38
    %1184 = vmatpush.msra.mxu0 %v37
    %1185 = vmatpush.msra.mxu0 %v36
    %1186 = vmatpush.msra.mxu0 %v35
    %1187 = vmatpush.msra.mxu0 %v34
    %1188 = vmatpush.msra.mxu0 %v33
    %1189 = vmatpush.msra.mxu0 %v32
    %1190 = vmatpush.msra.mxu0 %v31
    %1191 = vmatpush.msra.mxu0 %v30
    %1192 = vmatpush.msra.mxu0 %v29
    %1193 = vmatpush.msra.mxu0 %v28
    %1194 = vmatpush.msra.mxu0 %v27
    %1195 = vmatpush.msra.mxu0 %v26
    %1196 = vmatmul.f32.gmra.mxu0 %v1036
    %v1197 = vpop.f32.mrf.mxu0
    %v1198 = vadd.f32 0.0, %v1197
    %1199 = vmatmul.f32.gmra.mxu0 %v1038
    %v1200 = vpop.f32.mrf.mxu0
    %v1201 = vadd.f32 0.0, %v1200
    %1202 = vdwg.mxu0
    %1203 = vmatpush.msra.mxu0 %v57
    %1204 = vmatpush.msra.mxu0 %v56
    %1205 = vmatpush.msra.mxu0 %v55
    %1206 = vmatpush.msra.mxu0 %v54
    %1207 = vmatpush.msra.mxu0 %v53
    %1208 = vmatpush.msra.mxu0 %v52
    %1209 = vmatpush.msra.mxu0 %v51
    %1210 = vmatpush.msra.mxu0 %v50
    %1211 = vmatpush.msra.mxu0 %v49
    %1212 = vmatpush.msra.mxu0 %v48
    %1213 = vmatpush.msra.mxu0 %v47
    %1214 = vmatpush.msra.mxu0 %v46
    %1215 = vmatpush.msra.mxu0 %v45
    %1216 = vmatpush.msra.mxu0 %v44
    %1217 = vmatpush.msra.mxu0 %v43
    %1218 = vmatpush.msra.mxu0 %v42
    %1219 = vmatmul.f32.gmra.mxu0 %v1064
    %v1220 = vpop.f32.mrf.mxu0
    %v1221 = vadd.f32 %v1198, %v1220
    %1222 = vmatmul.f32.gmra.mxu0 %v1066
    %v1223 = vpop.f32.mrf.mxu0
    %v1224 = vadd.f32 %v1201, %v1223
    %1225 = vdwg.mxu0
    %1226 = vmatpush.msra.mxu0 %v73
    %1227 = vmatpush.msra.mxu0 %v72
    %1228 = vmatpush.msra.mxu0 %v71
    %1229 = vmatpush.msra.mxu0 %v70
    %1230 = vmatpush.msra.mxu0 %v69
    %1231 = vmatpush.msra.mxu0 %v68
    %1232 = vmatpush.msra.mxu0 %v67
    %1233 = vmatpush.msra.mxu0 %v66
    %1234 = vmatpush.msra.mxu0 %v65
    %1235 = vmatpush.msra.mxu0 %v64
    %1236 = vmatpush.msra.mxu0 %v63
    %1237 = vmatpush.msra.mxu0 %v62
    %1238 = vmatpush.msra.mxu0 %v61
    %1239 = vmatpush.msra.mxu0 %v60
    %1240 = vmatpush.msra.mxu0 %v59
    %1241 = vmatpush.msra.mxu0 %v58
    %1242 = vmatmul.f32.gmra.mxu0 %v1092
    %v1243 = vpop.f32.mrf.mxu0
    %v1244 = vadd.f32 %v1221, %v1243
    %1245 = vmatmul.f32.gmra.mxu0 %v1094
    %v1246 = vpop.f32.mrf.mxu0
    %v1247 = vadd.f32 %v1224, %v1246
    %1248 = vdwg.mxu0
    %1249 = vmatpush.msra.mxu0 %v89
    %1250 = vmatpush.msra.mxu0 %v88
    %1251 = vmatpush.msra.mxu0 %v87
    %1252 = vmatpush.msra.mxu0 %v86
    %1253 = vmatpush.msra.mxu0 %v85
    %1254 = vmatpush.msra.mxu0 %v84
    %1255 = vmatpush.msra.mxu0 %v83
    %1256 = vmatpush.msra.mxu0 %v82
    %1257 = vmatpush.msra.mxu0 %v81
    %1258 = vmatpush.msra.mxu0 %v80
    %1259 = vmatpush.msra.mxu0 %v79
    %1260 = vmatpush.msra.mxu0 %v78
    %1261 = vmatpush.msra.mxu0 %v77
    %1262 = vmatpush.msra.mxu0 %v76
    %1263 = vmatpush.msra.mxu0 %v75
    %1264 = vmatpush.msra.mxu0 %v74
    %1265 = vmatmul.f32.gmra.mxu0 %v1120
    %v1266 = vpop.f32.mrf.mxu0
    %v1267 = vadd.f32 %v1244, %v1266
    %1268 = vmatmul.f32.gmra.mxu0 %v1122
    %v1269 = vpop.f32.mrf.mxu0
    %v1270 = vadd.f32 %v1247, %v1269
    %1271 = vdwg.mxu0
    %1272 = vmatpush.msra.mxu0 %v105
    %1273 = vmatpush.msra.mxu0 %v104
    %1274 = vmatpush.msra.mxu0 %v103
    %1275 = vmatpush.msra.mxu0 %v102
    %1276 = vmatpush.msra.mxu0 %v101
    %1277 = vmatpush.msra.mxu0 %v100
    %1278 = vmatpush.msra.mxu0 %v99
    %1279 = vmatpush.msra.mxu0 %v98
    %1280 = vmatpush.msra.mxu0 %v97
    %1281 = vmatpush.msra.mxu0 %v96
    %1282 = vmatpush.msra.mxu0 %v95
    %1283 = vmatpush.msra.mxu0 %v94
    %1284 = vmatpush.msra.mxu0 %v93
    %1285 = vmatpush.msra.mxu0 %v92
    %1286 = vmatpush.msra.mxu0 %v91
    %1287 = vmatpush.msra.mxu0 %v90
    %1288 = vmatmul.f32.gmra.mxu0 %v1148
    %v1289 = vpop.f32.mrf.mxu0
    %v1290 = vadd.f32 %v1267, %v1289
    %1291 = vmatmul.f32.gmra.mxu0 %v1150
    %v1292 = vpop.f32.mrf.mxu0
    %v1293 = vadd.f32 %v1270, %v1292
    %1294 = vdwg.mxu0
    %1295 = vmatpush.msra.mxu0 %v121
    %1296 = vmatpush.msra.mxu0 %v120
    %1297 = vmatpush.msra.mxu0 %v119
    %1298 = vmatpush.msra.mxu0 %v118
    %1299 = vmatpush.msra.mxu0 %v117
    %1300 = vmatpush.msra.mxu0 %v116
    %1301 = vmatpush.msra.mxu0 %v115
    %1302 = vmatpush.msra.mxu0 %v114
    %1303 = vmatpush.msra.mxu0 %v113
    %1304 = vmatpush.msra.mxu0 %v112
    %1305 = vmatpush.msra.mxu0 %v111
    %1306 = vmatpush.msra.mxu0 %v110
    %1307 = vmatpush.msra.mxu0 %v109
    %1308 = vmatpush.msra.mxu0 %v108
    %1309 = vmatpush.msra.mxu0 %v107
    %1310 = vmatpush.msra.mxu0 %v106
    %1311 = vmatmul.f32.gmra.mxu0 %v1176
    %v1312 = vpop.f32.mrf.mxu0
    %v1313 = vadd.f32 %v1290, %v1312
    %1314 = vmatmul.f32.gmra.mxu0 %v1178
    %v1315 = vpop.f32.mrf.mxu0
    %v1316 = vadd.f32 %v1293, %v1315
    %1317 = vdwg.mxu0
    %v1318 = vmul.f32 %v1036, %v1036
    %v1319 = vmul.f32 %v1064, %v1064
    %v1320 = vmul.f32 %v1092, %v1092
    %v1321 = vmul.f32 %v1120, %v1120
    %v1322 = vmul.f32 %v1148, %v1148
    %v1323 = vmul.f32 %v1176, %v1176
    %v1324 = vmul.f32 %v1038, %v1038
    %v1325 = vmul.f32 %v1066, %v1066
    %v1326 = vmul.f32 %v1094, %v1094
    %v1327 = vmul.f32 %v1122, %v1122
    %v1328 = vmul.f32 %v1150, %v1150
    %v1329 = vmul.f32 %v1178, %v1178
    %1330 = vmatpush.msra.mxu0 %v41
    %1331 = vmatpush.msra.mxu0 %v40
    %1332 = vmatpush.msra.mxu0 %v39
    %1333 = vmatpush.msra.mxu0 %v38
    %1334 = vmatpush.msra.mxu0 %v37
    %1335 = vmatpush.msra.mxu0 %v36
    %1336 = vmatpush.msra.mxu0 %v35
    %1337 = vmatpush.msra.mxu0 %v34
    %1338 = vmatpush.msra.mxu0 %v33
    %1339 = vmatpush.msra.mxu0 %v32
    %1340 = vmatpush.msra.mxu0 %v31
    %1341 = vmatpush.msra.mxu0 %v30
    %1342 = vmatpush.msra.mxu0 %v29
    %1343 = vmatpush.msra.mxu0 %v28
    %1344 = vmatpush.msra.mxu0 %v27
    %1345 = vmatpush.msra.mxu0 %v26
    %1346 = vmatmul.f32.gmra.mxu0 %v1318
    %v1347 = vpop.f32.mrf.mxu0
    %v1348 = vadd.f32 0.0, %v1347
    %1349 = vmatmul.f32.gmra.mxu0 %v1324
    %v1350 = vpop.f32.mrf.mxu0
    %v1351 = vadd.f32 0.0, %v1350
    %1352 = vdwg.mxu0
    %1353 = vmatpush.msra.mxu0 %v57
    %1354 = vmatpush.msra.mxu0 %v56
    %1355 = vmatpush.msra.mxu0 %v55
    %1356 = vmatpush.msra.mxu0 %v54
    %1357 = vmatpush.msra.mxu0 %v53
    %1358 = vmatpush.msra.mxu0 %v52
    %1359 = vmatpush.msra.mxu0 %v51
    %1360 = vmatpush.msra.mxu0 %v50
    %1361 = vmatpush.msra.mxu0 %v49
    %1362 = vmatpush.msra.mxu0 %v48
    %1363 = vmatpush.msra.mxu0 %v47
    %1364 = vmatpush.msra.mxu0 %v46
    %1365 = vmatpush.msra.mxu0 %v45
    %1366 = vmatpush.msra.mxu0 %v44
    %1367 = vmatpush.msra.mxu0 %v43
    %1368 = vmatpush.msra.mxu0 %v42
    %1369 = vmatmul.f32.gmra.mxu0 %v1319
    %v1370 = vpop.f32.mrf.mxu0
    %v1371 = vadd.f32 %v1348, %v1370
    %1372 = vmatmul.f32.gmra.mxu0 %v1325
    %v1373 = vpop.f32.mrf.mxu0
    %v1374 = vadd.f32 %v1351, %v1373
    %1375 = vdwg.mxu0
    %1376 = vmatpush.msra.mxu0 %v73
    %1377 = vmatpush.msra.mxu0 %v72
    %1378 = vmatpush.msra.mxu0 %v71
    %1379 = vmatpush.msra.mxu0 %v70
    %1380 = vmatpush.msra.mxu0 %v69
    %1381 = vmatpush.msra.mxu0 %v68
    %1382 = vmatpush.msra.mxu0 %v67
    %1383 = vmatpush.msra.mxu0 %v66
    %1384 = vmatpush.msra.mxu0 %v65
    %1385 = vmatpush.msra.mxu0 %v64
    %1386 = vmatpush.msra.mxu0 %v63
    %1387 = vmatpush.msra.mxu0 %v62
    %1388 = vmatpush.msra.mxu0 %v61
    %1389 = vmatpush.msra.mxu0 %v60
    %1390 = vmatpush.msra.mxu0 %v59
    %1391 = vmatpush.msra.mxu0 %v58
    %1392 = vmatmul.f32.gmra.mxu0 %v1320
    %v1393 = vpop.f32.mrf.mxu0
    %v1394 = vadd.f32 %v1371, %v1393
    %1395 = vmatmul.f32.gmra.mxu0 %v1326
    %v1396 = vpop.f32.mrf.mxu0
    %v1397 = vadd.f32 %v1374, %v1396
    %1398 = vdwg.mxu0
    %1399 = vmatpush.msra.mxu0 %v89
    %1400 = vmatpush.msra.mxu0 %v88
    %1401 = vmatpush.msra.mxu0 %v87
    %1402 = vmatpush.msra.mxu0 %v86
    %1403 = vmatpush.msra.mxu0 %v85
    %1404 = vmatpush.msra.mxu0 %v84
    %1405 = vmatpush.msra.mxu0 %v83
    %1406 = vmatpush.msra.mxu0 %v82
    %1407 = vmatpush.msra.mxu0 %v81
    %1408 = vmatpush.msra.mxu0 %v80
    %1409 = vmatpush.msra.mxu0 %v79
    %1410 = vmatpush.msra.mxu0 %v78
    %1411 = vmatpush.msra.mxu0 %v77
    %1412 = vmatpush.msra.mxu0 %v76
    %1413 = vmatpush.msra.mxu0 %v75
    %1414 = vmatpush.msra.mxu0 %v74
    %1415 = vmatmul.f32.gmra.mxu0 %v1321
    %v1416 = vpop.f32.mrf.mxu0
    %v1417 = vadd.f32 %v1394, %v1416
    %1418 = vmatmul.f32.gmra.mxu0 %v1327
    %v1419 = vpop.f32.mrf.mxu0
    %v1420 = vadd.f32 %v1397, %v1419
    %1421 = vdwg.mxu0
    %1422 = vmatpush.msra.mxu0 %v105
    %1423 = vmatpush.msra.mxu0 %v104
    %1424 = vmatpush.msra.mxu0 %v103
    %1425 = vmatpush.msra.mxu0 %v102
    %1426 = vmatpush.msra.mxu0 %v101
    %1427 = vmatpush.msra.mxu0 %v100
    %1428 = vmatpush.msra.mxu0 %v99
    %1429 = vmatpush.msra.mxu0 %v98
    %1430 = vmatpush.msra.mxu0 %v97
    %1431 = vmatpush.msra.mxu0 %v96
    %1432 = vmatpush.msra.mxu0 %v95
    %1433 = vmatpush.msra.mxu0 %v94
    %1434 = vmatpush.msra.mxu0 %v93
    %1435 = vmatpush.msra.mxu0 %v92
    %1436 = vmatpush.msra.mxu0 %v91
    %1437 = vmatpush.msra.mxu0 %v90
    %1438 = vmatmul.f32.gmra.mxu0 %v1322
    %v1439 = vpop.f32.mrf.mxu0
    %v1440 = vadd.f32 %v1417, %v1439
    %1441 = vmatmul.f32.gmra.mxu0 %v1328
    %v1442 = vpop.f32.mrf.mxu0
    %v1443 = vadd.f32 %v1420, %v1442
    %1444 = vdwg.mxu0
    %1445 = vmatpush.msra.mxu0 %v121
    %1446 = vmatpush.msra.mxu0 %v120
    %1447 = vmatpush.msra.mxu0 %v119
    %1448 = vmatpush.msra.mxu0 %v118
    %1449 = vmatpush.msra.mxu0 %v117
    %1450 = vmatpush.msra.mxu0 %v116
    %1451 = vmatpush.msra.mxu0 %v115
    %1452 = vmatpush.msra.mxu0 %v114
    %1453 = vmatpush.msra.mxu0 %v113
    %1454 = vmatpush.msra.mxu0 %v112
    %1455 = vmatpush.msra.mxu0 %v111
    %1456 = vmatpush.msra.mxu0 %v110
    %1457 = vmatpush.msra.mxu0 %v109
    %1458 = vmatpush.msra.mxu0 %v108
    %1459 = vmatpush.msra.mxu0 %v107
    %1460 = vmatpush.msra.mxu0 %v106
    %1461 = vmatmul.f32.gmra.mxu0 %v1323
    %v1462 = vpop.f32.mrf.mxu0
    %v1463 = vadd.f32 %v1440, %v1462
    %1464 = vmatmul.f32.gmra.mxu0 %v1329
    %v1465 = vpop.f32.mrf.mxu0
    %v1466 = vadd.f32 %v1443, %v1465
    %1467 = vdwg.mxu0
    %v1468 = vmul.f32 %v1313, 0.001953125
    %v1469 = vmul.f32 %v1316, 0.001953125
    %v1470 = vmul.f32 %v1463, 0.001953125
    %v1471 = vmul.f32 %v1466, 0.001953125
    %v1472 = vmul.f32 %v1468, %v1468
    %v1473 = vmul.f32 %v1469, %v1469
    %v1474 = vsub.f32 %v1470, %v1472
    %v1475 = vsub.f32 %v1471, %v1473
    %v1476 = vmax.f32 %v1474, 0.0
    %v1477 = vmax.f32 %v1475, 0.0
    %v1478 = vadd.f32 %v1476, 1e-05
    %v1479 = vadd.f32 %v1477, 1e-05
    %v1480 = vrsqrt.pop %v1478
    %v1481 = vmul.f32 %v1480, %v1478
    %v1482 = vmul.f32 %v1481, %v1480
    %v1483 = vmul.f32 0.5, %v1482
    %v1484 = vsub.f32 1.5, %v1483
    %v1485 = vmul.f32 %v1480, %v1484
    %vm1486 = vweird.f32 %v1478
    %vm1487 = vweird.f32 %v1480
    %vm1488 = vmor %vm1486, %vm1487
    %v1489 = vsel %vm1488, %v1480, %v1485
    %v1490 = vrsqrt.pop %v1479
    %v1491 = vmul.f32 %v1490, %v1479
    %v1492 = vmul.f32 %v1491, %v1490
    %v1493 = vmul.f32 0.5, %v1492
    %v1494 = vsub.f32 1.5, %v1493
    %v1495 = vmul.f32 %v1490, %v1494
    %vm1496 = vweird.f32 %v1479
    %vm1497 = vweird.f32 %v1490
    %vm1498 = vmor %vm1496, %vm1497
    %v1499 = vsel %vm1498, %v1490, %v1495
    %v1500 = vmul.f32 %v138, %v1489
    %v1501 = vmul.f32 %v139, %v1499
    %v1502 = vmul.f32 %v1468, %v1500
    %v1503 = vmul.f32 %v1469, %v1501
    %1506 = vrot.lane.b32.xlu0 %v1502, 1
    %v1507 = vpop.permute.xlu0 %1506
    %1508 = vrot.lane.b32.xlu0 %v1503, 1
    %v1509 = vpop.permute.xlu0 %1508
    %v1512 = vsub.f32 %v138, %v1507
    %v1513 = vsub.f32 %v139, %v1509
    %1515 = vset.pattern.permute.xlu0 0
    %1516 = vperm.xlu0 %1515, %v1500
    %v1517 = vpop.permute.xlu0 %1516
    %1520 = vset.pattern.permute.xlu0 0
    %1521 = vperm.xlu0 %1520, %v1501
    %v1522 = vpop.permute.xlu0 %1521
    %v1524 = vmul.f32 %v1036, %v1517
    %v1525 = vmul.f32 %v1064, %v1517
    %v1526 = vmul.f32 %v1092, %v1517
    %v1527 = vmul.f32 %v1120, %v1517
    %v1528 = vmul.f32 %v1148, %v1517
    %v1529 = vmul.f32 %v1176, %v1517
    %v1530 = vmul.f32 %v1038, %v1522
    %v1531 = vmul.f32 %v1066, %v1522
    %v1532 = vmul.f32 %v1094, %v1522
    %v1533 = vmul.f32 %v1122, %v1522
    %v1534 = vmul.f32 %v1150, %v1522
    %v1535 = vmul.f32 %v1178, %v1522
    %1537 = vset.pattern.permute.xlu0 1
    %1538 = vperm.xlu0 %1537, %v1512
    %v1539 = vpop.permute.xlu0 %1538
    %1542 = vset.pattern.permute.xlu0 1
    %1543 = vperm.xlu0 %1542, %v1513
    %v1544 = vpop.permute.xlu0 %1543
    %v1546 = vadd.f32 %v1524, %v1539
    %v1547 = vadd.f32 %v1525, %v1539
    %v1548 = vadd.f32 %v1526, %v1539
    %v1549 = vadd.f32 %v1527, %v1539
    %v1550 = vadd.f32 %v1528, %v1539
    %v1551 = vadd.f32 %v1529, %v1539
    %v1552 = vadd.f32 %v1530, %v1544
    %v1553 = vadd.f32 %v1531, %v1544
    %v1554 = vadd.f32 %v1532, %v1544
    %v1555 = vadd.f32 %v1533, %v1544
    %v1556 = vadd.f32 %v1534, %v1544
    %v1557 = vadd.f32 %v1535, %v1544
    %v1558 = vmax.f32 %v1546, 0.0
    %v1559 = vmax.f32 %v1547, 0.0
    %v1560 = vmax.f32 %v1548, 0.0
    %v1561 = vmax.f32 %v1549, 0.0
    %v1562 = vmax.f32 %v1550, 0.0
    %v1563 = vmax.f32 %v1551, 0.0
    %v1564 = vmax.f32 %v1552, 0.0
    %v1565 = vmax.f32 %v1553, 0.0
    %v1566 = vmax.f32 %v1554, 0.0
    %v1567 = vmax.f32 %v1555, 0.0
    %v1568 = vmax.f32 %v1556, 0.0
    %v1569 = vmax.f32 %v1557, 0.0
    %v1571 = vperm.slane %v25, 0
    %v1572 = vperm.slane %v25, 1
    %v1573 = vperm.slane %v25, 2
    %v1574 = vperm.slane %v25, 3
    %v1575 = vperm.slane %v25, 4
    %v1576 = vperm.slane %v25, 5
    %v1583 = vmul.f32 %v1558, %v1571
    %v1584 = vmul.f32 %v1559, %v1572
    %v1585 = vmul.f32 %v1560, %v1573
    %v1586 = vmul.f32 %v1561, %v1574
    %v1587 = vmul.f32 %v1562, %v1575
    %v1588 = vmul.f32 %v1563, %v1576
    %v1589 = vmul.f32 %v1564, %v1571
    %v1590 = vmul.f32 %v1565, %v1572
    %v1591 = vmul.f32 %v1566, %v1573
    %v1592 = vmul.f32 %v1567, %v1574
    %v1593 = vmul.f32 %v1568, %v1575
    %v1594 = vmul.f32 %v1569, %v1576
    %v1595 = vpack.c.bf16 %v1584, %v1583
    %v1596 = vpack.c.bf16 %v1586, %v1585
    %v1597 = vpack.c.bf16 %v1588, %v1587
    %v1598 = vpack.c.bf16 %v1590, %v1589
    %v1599 = vpack.c.bf16 %v1592, %v1591
    %v1600 = vpack.c.bf16 %v1594, %v1593
    %1601 = vst [vmem:[#allocation3 + $0x4] sm:$0xff] %v1595
    %1602 = vst [vmem:[#allocation3 + $0xc] sm:$0xff] %v1596
    %1603 = vst [vmem:[#allocation3 + $0x14] sm:$0xff] %v1597
    %1604 = vst [vmem:[#allocation3 + $0x24] sm:$0xff] %v1598
    %1605 = vst [vmem:[#allocation3 + $0x2c] sm:$0xff] %v1599
    %1606 = vst [vmem:[#allocation3 + $0x34] sm:$0xff] %v1600
    %v1607 = vld [vmem:[%s5] sm:$0xff]
    %v1608 = vld [vmem:[%s5 + $0x8] sm:$0xff]
    %v1609 = vld [vmem:[#allocation3] sm:$0xff]
    %v1610 = vld [vmem:[#allocation3 + $0x8] sm:$0xff]
    %v1611 = vld [vmem:[#allocation3 + $0x10] sm:$0xff]
    %v1612 = vld [vmem:[#allocation3 + $0x18] sm:$0xf]
    %v1613 = vld [vmem:[#allocation3 + $0x20] sm:$0xff]
    %v1614 = vld [vmem:[#allocation3 + $0x28] sm:$0xff]
    %v1615 = vld [vmem:[#allocation3 + $0x30] sm:$0xff]
    %v1616 = vld [vmem:[#allocation3 + $0x38] sm:$0xf]
    %1625 = vrot.lane.b32.xlu0 %v1609, 19
    %v1626 = vpop.permute.xlu0 %1625
    %1627 = vrot.lane.b32.xlu0 %v1610, 19
    %v1628 = vpop.permute.xlu0 %1627
    %1629 = vrot.lane.b32.xlu0 %v1611, 19
    %v1630 = vpop.permute.xlu0 %1629
    %1631 = vrot.lane.b32.xlu0 %v1612, 19
    %v1632 = vpop.permute.xlu0 %1631
    %1633 = vrot.lane.b32.xlu0 %v1613, 19
    %v1634 = vpop.permute.xlu0 %1633
    %1635 = vrot.lane.b32.xlu0 %v1614, 19
    %v1636 = vpop.permute.xlu0 %1635
    %1637 = vrot.lane.b32.xlu0 %v1615, 19
    %v1638 = vpop.permute.xlu0 %1637
    %1639 = vrot.lane.b32.xlu0 %v1616, 19
    %v1640 = vpop.permute.xlu0 %1639
    %v1641 = vrot.slane %v1626, 4
    %v1642 = vrot.slane %v1628, 4
    %v1643 = vrot.slane %v1630, 4
    %v1644 = vrot.slane %v1632, 4
    %v1645 = vrot.slane %v1634, 4
    %v1646 = vrot.slane %v1636, 4
    %v1647 = vrot.slane %v1638, 4
    %v1648 = vrot.slane %v1640, 4
    %v1649 = vsel %vm180, %v1641, %v1642
    %v1650 = vsel %vm182, %v1626, %v1649
    %v1651 = vsel %vm180, %v1642, %v1643
    %v1652 = vsel %vm182, %v1628, %v1651
    %v1653 = vsel %vm180, %v1643, %v1644
    %v1654 = vsel %vm182, %v1630, %v1653
    %v1655 = vsel %vm180, %v1645, %v1646
    %v1656 = vsel %vm182, %v1634, %v1655
    %v1657 = vsel %vm180, %v1646, %v1647
    %v1658 = vsel %vm182, %v1636, %v1657
    %v1659 = vsel %vm180, %v1647, %v1648
    %v1660 = vsel %vm182, %v1638, %v1659
    %1667 = vst [vmem:[#allocation2] sm:$0xff] %v1650
    %1668 = vst [vmem:[#allocation2 + $0x8] sm:$0xff] %v1652
    %1669 = vst [vmem:[#allocation2 + $0x10] sm:$0xff] %v1654
    %1670 = vst [vmem:[#allocation2 + $0x18] sm:$0xff] %v1656
    %1671 = vst [vmem:[#allocation2 + $0x20] sm:$0xff] %v1658
    %1672 = vst [vmem:[#allocation2 + $0x28] sm:$0xff] %v1660
    %v1673 = vld [vmem:[#allocation3] sm:$0xff]
    %v1674 = vld [vmem:[#allocation3 + $0x8] sm:$0xff]
    %v1675 = vld [vmem:[#allocation3 + $0x10] sm:$0xff]
    %v1676 = vld [vmem:[#allocation3 + $0x18] sm:$0xf]
    %v1677 = vld [vmem:[#allocation3 + $0x20] sm:$0xff]
    %v1678 = vld [vmem:[#allocation3 + $0x28] sm:$0xff]
    %v1679 = vld [vmem:[#allocation3 + $0x30] sm:$0xff]
    %v1680 = vld [vmem:[#allocation3 + $0x38] sm:$0xf]
    %1689 = vrot.lane.b32.xlu0 %v1673, 18
    %v1690 = vpop.permute.xlu0 %1689
    %1691 = vrot.lane.b32.xlu0 %v1674, 18
    %v1692 = vpop.permute.xlu0 %1691
    %1693 = vrot.lane.b32.xlu0 %v1675, 18
    %v1694 = vpop.permute.xlu0 %1693
    %1695 = vrot.lane.b32.xlu0 %v1676, 18
    %v1696 = vpop.permute.xlu0 %1695
    %1697 = vrot.lane.b32.xlu0 %v1677, 18
    %v1698 = vpop.permute.xlu0 %1697
    %1699 = vrot.lane.b32.xlu0 %v1678, 18
    %v1700 = vpop.permute.xlu0 %1699
    %1701 = vrot.lane.b32.xlu0 %v1679, 18
    %v1702 = vpop.permute.xlu0 %1701
    %1703 = vrot.lane.b32.xlu0 %v1680, 18
    %v1704 = vpop.permute.xlu0 %1703
    %v1705 = vrot.slane %v1690, 4
    %v1706 = vrot.slane %v1692, 4
    %v1707 = vrot.slane %v1694, 4
    %v1708 = vrot.slane %v1696, 4
    %v1709 = vrot.slane %v1698, 4
    %v1710 = vrot.slane %v1700, 4
    %v1711 = vrot.slane %v1702, 4
    %v1712 = vrot.slane %v1704, 4
    %v1713 = vsel %vm180, %v1705, %v1706
    %v1714 = vsel %vm247, %v1690, %v1713
    %v1715 = vsel %vm180, %v1706, %v1707
    %v1716 = vsel %vm247, %v1692, %v1715
    %v1717 = vsel %vm180, %v1707, %v1708
    %v1718 = vsel %vm247, %v1694, %v1717
    %v1719 = vsel %vm180, %v1709, %v1710
    %v1720 = vsel %vm247, %v1698, %v1719
    %v1721 = vsel %vm180, %v1710, %v1711
    %v1722 = vsel %vm247, %v1700, %v1721
    %v1723 = vsel %vm180, %v1711, %v1712
    %v1724 = vsel %vm247, %v1702, %v1723
    %1731 = vst [vmem:[#allocation2 + $0x30] sm:$0xff] %v1714
    %1732 = vst [vmem:[#allocation2 + $0x38] sm:$0xff] %v1716
    %1733 = vst [vmem:[#allocation2 + $0x40] sm:$0xff] %v1718
    %1734 = vst [vmem:[#allocation2 + $0x48] sm:$0xff] %v1720
    %1735 = vst [vmem:[#allocation2 + $0x50] sm:$0xff] %v1722
    %1736 = vst [vmem:[#allocation2 + $0x58] sm:$0xff] %v1724
    %v1737 = vld [vmem:[#allocation3] sm:$0xff]
    %v1738 = vld [vmem:[#allocation3 + $0x8] sm:$0xff]
    %v1739 = vld [vmem:[#allocation3 + $0x10] sm:$0xff]
    %v1740 = vld [vmem:[#allocation3 + $0x18] sm:$0xf]
    %v1741 = vld [vmem:[#allocation3 + $0x20] sm:$0xff]
    %v1742 = vld [vmem:[#allocation3 + $0x28] sm:$0xff]
    %v1743 = vld [vmem:[#allocation3 + $0x30] sm:$0xff]
    %v1744 = vld [vmem:[#allocation3 + $0x38] sm:$0xf]
    %1753 = vrot.lane.b32.xlu0 %v1737, 17
    %v1754 = vpop.permute.xlu0 %1753
    %1755 = vrot.lane.b32.xlu0 %v1738, 17
    %v1756 = vpop.permute.xlu0 %1755
    %1757 = vrot.lane.b32.xlu0 %v1739, 17
    %v1758 = vpop.permute.xlu0 %1757
    %1759 = vrot.lane.b32.xlu0 %v1740, 17
    %v1760 = vpop.permute.xlu0 %1759
    %1761 = vrot.lane.b32.xlu0 %v1741, 17
    %v1762 = vpop.permute.xlu0 %1761
    %1763 = vrot.lane.b32.xlu0 %v1742, 17
    %v1764 = vpop.permute.xlu0 %1763
    %1765 = vrot.lane.b32.xlu0 %v1743, 17
    %v1766 = vpop.permute.xlu0 %1765
    %1767 = vrot.lane.b32.xlu0 %v1744, 17
    %v1768 = vpop.permute.xlu0 %1767
    %v1769 = vrot.slane %v1754, 4
    %v1770 = vrot.slane %v1756, 4
    %v1771 = vrot.slane %v1758, 4
    %v1772 = vrot.slane %v1760, 4
    %v1773 = vrot.slane %v1762, 4
    %v1774 = vrot.slane %v1764, 4
    %v1775 = vrot.slane %v1766, 4
    %v1776 = vrot.slane %v1768, 4
    %v1777 = vsel %vm180, %v1769, %v1770
    %v1778 = vsel %vm312, %v1754, %v1777
    %v1779 = vsel %vm180, %v1770, %v1771
    %v1780 = vsel %vm312, %v1756, %v1779
    %v1781 = vsel %vm180, %v1771, %v1772
    %v1782 = vsel %vm312, %v1758, %v1781
    %v1783 = vsel %vm180, %v1773, %v1774
    %v1784 = vsel %vm312, %v1762, %v1783
    %v1785 = vsel %vm180, %v1774, %v1775
    %v1786 = vsel %vm312, %v1764, %v1785
    %v1787 = vsel %vm180, %v1775, %v1776
    %v1788 = vsel %vm312, %v1766, %v1787
    %1795 = vst [vmem:[#allocation2 + $0x60] sm:$0xff] %v1778
    %1796 = vst [vmem:[#allocation2 + $0x68] sm:$0xff] %v1780
    %1797 = vst [vmem:[#allocation2 + $0x70] sm:$0xff] %v1782
    %1798 = vst [vmem:[#allocation2 + $0x78] sm:$0xff] %v1784
    %1799 = vst [vmem:[#allocation2 + $0x80] sm:$0xff] %v1786
    %1800 = vst [vmem:[#allocation2 + $0x88] sm:$0xff] %v1788
    %v1801 = vld [vmem:[#allocation3] sm:$0xff]
    %v1802 = vld [vmem:[#allocation3 + $0x8] sm:$0xff]
    %v1803 = vld [vmem:[#allocation3 + $0x10] sm:$0xff]
    %v1804 = vld [vmem:[#allocation3 + $0x18] sm:$0xf]
    %v1805 = vld [vmem:[#allocation3 + $0x20] sm:$0xff]
    %v1806 = vld [vmem:[#allocation3 + $0x28] sm:$0xff]
    %v1807 = vld [vmem:[#allocation3 + $0x30] sm:$0xff]
    %v1808 = vld [vmem:[#allocation3 + $0x38] sm:$0xf]
    %1817 = vrot.lane.b32.xlu0 %v1801, 1
    %v1818 = vpop.permute.xlu0 %1817
    %1819 = vrot.lane.b32.xlu0 %v1802, 1
    %v1820 = vpop.permute.xlu0 %1819
    %1821 = vrot.lane.b32.xlu0 %v1803, 1
    %v1822 = vpop.permute.xlu0 %1821
    %1823 = vrot.lane.b32.xlu0 %v1804, 1
    %v1824 = vpop.permute.xlu0 %1823
    %1825 = vrot.lane.b32.xlu0 %v1805, 1
    %v1826 = vpop.permute.xlu0 %1825
    %1827 = vrot.lane.b32.xlu0 %v1806, 1
    %v1828 = vpop.permute.xlu0 %1827
    %1829 = vrot.lane.b32.xlu0 %v1807, 1
    %v1830 = vpop.permute.xlu0 %1829
    %1831 = vrot.lane.b32.xlu0 %v1808, 1
    %v1832 = vpop.permute.xlu0 %1831
    %v1833 = vrot.slane %v1818, 4
    %v1834 = vrot.slane %v1820, 4
    %v1835 = vrot.slane %v1822, 4
    %v1836 = vrot.slane %v1824, 4
    %v1837 = vrot.slane %v1826, 4
    %v1838 = vrot.slane %v1828, 4
    %v1839 = vrot.slane %v1830, 4
    %v1840 = vrot.slane %v1832, 4
    %v1841 = vsel %vm180, %v1833, %v1834
    %v1842 = vsel %vm377, %v1818, %v1841
    %v1843 = vsel %vm180, %v1834, %v1835
    %v1844 = vsel %vm377, %v1820, %v1843
    %v1845 = vsel %vm180, %v1835, %v1836
    %v1846 = vsel %vm377, %v1822, %v1845
    %v1847 = vsel %vm180, %v1837, %v1838
    %v1848 = vsel %vm377, %v1826, %v1847
    %v1849 = vsel %vm180, %v1838, %v1839
    %v1850 = vsel %vm377, %v1828, %v1849
    %v1851 = vsel %vm180, %v1839, %v1840
    %v1852 = vsel %vm377, %v1830, %v1851
    %1859 = vst [vmem:[#allocation2 + $0x90] sm:$0xff] %v1842
    %1860 = vst [vmem:[#allocation2 + $0x98] sm:$0xff] %v1844
    %1861 = vst [vmem:[#allocation2 + $0xa0] sm:$0xff] %v1846
    %1862 = vst [vmem:[#allocation2 + $0xa8] sm:$0xff] %v1848
    %1863 = vst [vmem:[#allocation2 + $0xb0] sm:$0xff] %v1850
    %1864 = vst [vmem:[#allocation2 + $0xb8] sm:$0xff] %v1852
    %v1865 = vld [vmem:[#allocation3 + $0x4] sm:$0xff]
    %v1866 = vld [vmem:[#allocation3 + $0xc] sm:$0xff]
    %v1867 = vld [vmem:[#allocation3 + $0x14] sm:$0xff]
    %v1868 = vld [vmem:[#allocation3 + $0x24] sm:$0xff]
    %v1869 = vld [vmem:[#allocation3 + $0x2c] sm:$0xff]
    %v1870 = vld [vmem:[#allocation3 + $0x34] sm:$0xff]
    %1871 = vst [vmem:[#allocation2 + $0xc0] sm:$0xff] %v1865
    %1872 = vst [vmem:[#allocation2 + $0xc8] sm:$0xff] %v1866
    %1873 = vst [vmem:[#allocation2 + $0xd0] sm:$0xff] %v1867
    %1874 = vst [vmem:[#allocation2 + $0xd8] sm:$0xff] %v1868
    %1875 = vst [vmem:[#allocation2 + $0xe0] sm:$0xff] %v1869
    %1876 = vst [vmem:[#allocation2 + $0xe8] sm:$0xff] %v1870
    %v1877 = vld [vmem:[#allocation3 + $0x4] sm:$0xff]
    %v1878 = vld [vmem:[#allocation3 + $0xc] sm:$0xff]
    %v1879 = vld [vmem:[#allocation3 + $0x14] sm:$0xff]
    %v1880 = vld [vmem:[#allocation3 + $0x1c] sm:$0xf]
    %v1881 = vld [vmem:[#allocation3 + $0x24] sm:$0xff]
    %v1882 = vld [vmem:[#allocation3 + $0x2c] sm:$0xff]
    %v1883 = vld [vmem:[#allocation3 + $0x34] sm:$0xff]
    %v1884 = vld [vmem:[#allocation3 + $0x3c] sm:$0xf]
    %1893 = vrot.lane.b32.xlu0 %v1877, 127
    %v1894 = vpop.permute.xlu0 %1893
    %1895 = vrot.lane.b32.xlu0 %v1878, 127
    %v1896 = vpop.permute.xlu0 %1895
    %1897 = vrot.lane.b32.xlu0 %v1879, 127
    %v1898 = vpop.permute.xlu0 %1897
    %1899 = vrot.lane.b32.xlu0 %v1880, 127
    %v1900 = vpop.permute.xlu0 %1899
    %1901 = vrot.lane.b32.xlu0 %v1881, 127
    %v1902 = vpop.permute.xlu0 %1901
    %1903 = vrot.lane.b32.xlu0 %v1882, 127
    %v1904 = vpop.permute.xlu0 %1903
    %1905 = vrot.lane.b32.xlu0 %v1883, 127
    %v1906 = vpop.permute.xlu0 %1905
    %1907 = vrot.lane.b32.xlu0 %v1884, 127
    %v1908 = vpop.permute.xlu0 %1907
    %v1909 = vrot.slane %v1894, 4
    %v1910 = vrot.slane %v1896, 4
    %v1911 = vrot.slane %v1898, 4
    %v1912 = vrot.slane %v1900, 4
    %v1913 = vrot.slane %v1902, 4
    %v1914 = vrot.slane %v1904, 4
    %v1915 = vrot.slane %v1906, 4
    %v1916 = vrot.slane %v1908, 4
    %v1917 = vsel %vm180, %v1909, %v1910
    %v1918 = vsel %vm454, %v1894, %v1917
    %v1919 = vsel %vm180, %v1910, %v1911
    %v1920 = vsel %vm454, %v1896, %v1919
    %v1921 = vsel %vm180, %v1911, %v1912
    %v1922 = vsel %vm454, %v1898, %v1921
    %v1923 = vsel %vm180, %v1913, %v1914
    %v1924 = vsel %vm454, %v1902, %v1923
    %v1925 = vsel %vm180, %v1914, %v1915
    %v1926 = vsel %vm454, %v1904, %v1925
    %v1927 = vsel %vm180, %v1915, %v1916
    %v1928 = vsel %vm454, %v1906, %v1927
    %1935 = vst [vmem:[#allocation2 + $0xf0] sm:$0xff] %v1918
    %1936 = vst [vmem:[#allocation2 + $0xf8] sm:$0xff] %v1920
    %1937 = vst [vmem:[#allocation2 + $0x100] sm:$0xff] %v1922
    %1938 = vst [vmem:[#allocation2 + $0x108] sm:$0xff] %v1924
    %1939 = vst [vmem:[#allocation2 + $0x110] sm:$0xff] %v1926
    %1940 = vst [vmem:[#allocation2 + $0x118] sm:$0xff] %v1928
    %v1941 = vld [vmem:[#allocation3 + $0x4] sm:$0xff]
    %v1942 = vld [vmem:[#allocation3 + $0xc] sm:$0xff]
    %v1943 = vld [vmem:[#allocation3 + $0x14] sm:$0xff]
    %v1944 = vld [vmem:[#allocation3 + $0x1c] sm:$0xf]
    %v1945 = vld [vmem:[#allocation3 + $0x24] sm:$0xff]
    %v1946 = vld [vmem:[#allocation3 + $0x2c] sm:$0xff]
    %v1947 = vld [vmem:[#allocation3 + $0x34] sm:$0xff]
    %v1948 = vld [vmem:[#allocation3 + $0x3c] sm:$0xf]
    %1957 = vrot.lane.b32.xlu0 %v1941, 111
    %v1958 = vpop.permute.xlu0 %1957
    %1959 = vrot.lane.b32.xlu0 %v1942, 111
    %v1960 = vpop.permute.xlu0 %1959
    %1961 = vrot.lane.b32.xlu0 %v1943, 111
    %v1962 = vpop.permute.xlu0 %1961
    %1963 = vrot.lane.b32.xlu0 %v1944, 111
    %v1964 = vpop.permute.xlu0 %1963
    %1965 = vrot.lane.b32.xlu0 %v1945, 111
    %v1966 = vpop.permute.xlu0 %1965
    %1967 = vrot.lane.b32.xlu0 %v1946, 111
    %v1968 = vpop.permute.xlu0 %1967
    %1969 = vrot.lane.b32.xlu0 %v1947, 111
    %v1970 = vpop.permute.xlu0 %1969
    %1971 = vrot.lane.b32.xlu0 %v1948, 111
    %v1972 = vpop.permute.xlu0 %1971
    %v1973 = vrot.slane %v1958, 4
    %v1974 = vrot.slane %v1960, 4
    %v1975 = vrot.slane %v1962, 4
    %v1976 = vrot.slane %v1964, 4
    %v1977 = vrot.slane %v1966, 4
    %v1978 = vrot.slane %v1968, 4
    %v1979 = vrot.slane %v1970, 4
    %v1980 = vrot.slane %v1972, 4
    %v1981 = vsel %vm180, %v1973, %v1974
    %v1982 = vsel %vm519, %v1958, %v1981
    %v1983 = vsel %vm180, %v1974, %v1975
    %v1984 = vsel %vm519, %v1960, %v1983
    %v1985 = vsel %vm180, %v1975, %v1976
    %v1986 = vsel %vm519, %v1962, %v1985
    %v1987 = vsel %vm180, %v1977, %v1978
    %v1988 = vsel %vm519, %v1966, %v1987
    %v1989 = vsel %vm180, %v1978, %v1979
    %v1990 = vsel %vm519, %v1968, %v1989
    %v1991 = vsel %vm180, %v1979, %v1980
    %v1992 = vsel %vm519, %v1970, %v1991
    %1999 = vst [vmem:[#allocation2 + $0x120] sm:$0xff] %v1982
    %2000 = vst [vmem:[#allocation2 + $0x128] sm:$0xff] %v1984
    %2001 = vst [vmem:[#allocation2 + $0x130] sm:$0xff] %v1986
    %2002 = vst [vmem:[#allocation2 + $0x138] sm:$0xff] %v1988
    %2003 = vst [vmem:[#allocation2 + $0x140] sm:$0xff] %v1990
    %2004 = vst [vmem:[#allocation2 + $0x148] sm:$0xff] %v1992
    %v2005 = vld [vmem:[#allocation3 + $0x4] sm:$0xff]
    %v2006 = vld [vmem:[#allocation3 + $0xc] sm:$0xff]
    %v2007 = vld [vmem:[#allocation3 + $0x14] sm:$0xff]
    %v2008 = vld [vmem:[#allocation3 + $0x1c] sm:$0xf]
    %v2009 = vld [vmem:[#allocation3 + $0x24] sm:$0xff]
    %v2010 = vld [vmem:[#allocation3 + $0x2c] sm:$0xff]
    %v2011 = vld [vmem:[#allocation3 + $0x34] sm:$0xff]
    %v2012 = vld [vmem:[#allocation3 + $0x3c] sm:$0xf]
    %2021 = vrot.lane.b32.xlu0 %v2005, 110
    %v2022 = vpop.permute.xlu0 %2021
    %2023 = vrot.lane.b32.xlu0 %v2006, 110
    %v2024 = vpop.permute.xlu0 %2023
    %2025 = vrot.lane.b32.xlu0 %v2007, 110
    %v2026 = vpop.permute.xlu0 %2025
    %2027 = vrot.lane.b32.xlu0 %v2008, 110
    %v2028 = vpop.permute.xlu0 %2027
    %2029 = vrot.lane.b32.xlu0 %v2009, 110
    %v2030 = vpop.permute.xlu0 %2029
    %2031 = vrot.lane.b32.xlu0 %v2010, 110
    %v2032 = vpop.permute.xlu0 %2031
    %2033 = vrot.lane.b32.xlu0 %v2011, 110
    %v2034 = vpop.permute.xlu0 %2033
    %2035 = vrot.lane.b32.xlu0 %v2012, 110
    %v2036 = vpop.permute.xlu0 %2035
    %v2037 = vrot.slane %v2022, 4
    %v2038 = vrot.slane %v2024, 4
    %v2039 = vrot.slane %v2026, 4
    %v2040 = vrot.slane %v2028, 4
    %v2041 = vrot.slane %v2030, 4
    %v2042 = vrot.slane %v2032, 4
    %v2043 = vrot.slane %v2034, 4
    %v2044 = vrot.slane %v2036, 4
    %v2045 = vsel %vm180, %v2037, %v2038
    %v2046 = vsel %vm584, %v2022, %v2045
    %v2047 = vsel %vm180, %v2038, %v2039
    %v2048 = vsel %vm584, %v2024, %v2047
    %v2049 = vsel %vm180, %v2039, %v2040
    %v2050 = vsel %vm584, %v2026, %v2049
    %v2051 = vsel %vm180, %v2041, %v2042
    %v2052 = vsel %vm584, %v2030, %v2051
    %v2053 = vsel %vm180, %v2042, %v2043
    %v2054 = vsel %vm584, %v2032, %v2053
    %v2055 = vsel %vm180, %v2043, %v2044
    %v2056 = vsel %vm584, %v2034, %v2055
    %2063 = vst [vmem:[#allocation2 + $0x150] sm:$0xff] %v2046
    %2064 = vst [vmem:[#allocation2 + $0x158] sm:$0xff] %v2048
    %2065 = vst [vmem:[#allocation2 + $0x160] sm:$0xff] %v2050
    %2066 = vst [vmem:[#allocation2 + $0x168] sm:$0xff] %v2052
    %2067 = vst [vmem:[#allocation2 + $0x170] sm:$0xff] %v2054
    %2068 = vst [vmem:[#allocation2 + $0x178] sm:$0xff] %v2056
    %v2069 = vld [vmem:[#allocation3 + $0x4] sm:$0xff]
    %v2070 = vld [vmem:[#allocation3 + $0xc] sm:$0xff]
    %v2071 = vld [vmem:[#allocation3 + $0x14] sm:$0xff]
    %v2072 = vld [vmem:[#allocation3 + $0x1c] sm:$0xf]
    %v2073 = vld [vmem:[#allocation3 + $0x24] sm:$0xff]
    %v2074 = vld [vmem:[#allocation3 + $0x2c] sm:$0xff]
    %v2075 = vld [vmem:[#allocation3 + $0x34] sm:$0xff]
    %v2076 = vld [vmem:[#allocation3 + $0x3c] sm:$0xf]
    %2085 = vrot.lane.b32.xlu0 %v2069, 109
    %v2086 = vpop.permute.xlu0 %2085
    %2087 = vrot.lane.b32.xlu0 %v2070, 109
    %v2088 = vpop.permute.xlu0 %2087
    %2089 = vrot.lane.b32.xlu0 %v2071, 109
    %v2090 = vpop.permute.xlu0 %2089
    %2091 = vrot.lane.b32.xlu0 %v2072, 109
    %v2092 = vpop.permute.xlu0 %2091
    %2093 = vrot.lane.b32.xlu0 %v2073, 109
    %v2094 = vpop.permute.xlu0 %2093
    %2095 = vrot.lane.b32.xlu0 %v2074, 109
    %v2096 = vpop.permute.xlu0 %2095
    %2097 = vrot.lane.b32.xlu0 %v2075, 109
    %v2098 = vpop.permute.xlu0 %2097
    %2099 = vrot.lane.b32.xlu0 %v2076, 109
    %v2100 = vpop.permute.xlu0 %2099
    %v2101 = vrot.slane %v2086, 4
    %v2102 = vrot.slane %v2088, 4
    %v2103 = vrot.slane %v2090, 4
    %v2104 = vrot.slane %v2092, 4
    %v2105 = vrot.slane %v2094, 4
    %v2106 = vrot.slane %v2096, 4
    %v2107 = vrot.slane %v2098, 4
    %v2108 = vrot.slane %v2100, 4
    %v2109 = vsel %vm180, %v2101, %v2102
    %v2110 = vsel %vm649, %v2086, %v2109
    %v2111 = vsel %vm180, %v2102, %v2103
    %v2112 = vsel %vm649, %v2088, %v2111
    %v2113 = vsel %vm180, %v2103, %v2104
    %v2114 = vsel %vm649, %v2090, %v2113
    %v2115 = vsel %vm180, %v2105, %v2106
    %v2116 = vsel %vm649, %v2094, %v2115
    %v2117 = vsel %vm180, %v2106, %v2107
    %v2118 = vsel %vm649, %v2096, %v2117
    %v2119 = vsel %vm180, %v2107, %v2108
    %v2120 = vsel %vm649, %v2098, %v2119
    %2127 = vst [vmem:[#allocation2 + $0x180] sm:$0xff] %v2110
    %2128 = vst [vmem:[#allocation2 + $0x188] sm:$0xff] %v2112
    %2129 = vst [vmem:[#allocation2 + $0x190] sm:$0xff] %v2114
    %2130 = vst [vmem:[#allocation2 + $0x198] sm:$0xff] %v2116
    %2131 = vst [vmem:[#allocation2 + $0x1a0] sm:$0xff] %v2118
    %2132 = vst [vmem:[#allocation2 + $0x1a8] sm:$0xff] %v2120
    %v2133 = vld [vmem:[%s4] sm:$0xff]
    %v2134 = vld [vmem:[%s4 + $0x8] sm:$0xff]
    %v2135 = vld [vmem:[#allocation2] sm:$0xff]
    %v2136 = vld [vmem:[#allocation2 + $0x8] sm:$0xff]
    %v2137 = vld [vmem:[#allocation2 + $0x10] sm:$0xff]
    %v2138 = vld [vmem:[#allocation2 + $0x18] sm:$0xff]
    %v2139 = vld [vmem:[#allocation2 + $0x20] sm:$0xff]
    %v2140 = vld [vmem:[#allocation2 + $0x28] sm:$0xff]
    %v2141 = vld [vmem:[#allocation2 + $0x30] sm:$0xff]
    %v2142 = vld [vmem:[#allocation2 + $0x38] sm:$0xff]
    %v2143 = vld [vmem:[#allocation2 + $0x40] sm:$0xff]
    %v2144 = vld [vmem:[#allocation2 + $0x48] sm:$0xff]
    %v2145 = vld [vmem:[#allocation2 + $0x50] sm:$0xff]
    %v2146 = vld [vmem:[#allocation2 + $0x58] sm:$0xff]
    %v2147 = vld [vmem:[#allocation2 + $0x60] sm:$0xff]
    %v2148 = vld [vmem:[#allocation2 + $0x68] sm:$0xff]
    %v2149 = vld [vmem:[#allocation2 + $0x70] sm:$0xff]
    %v2150 = vld [vmem:[#allocation2 + $0x78] sm:$0xff]
    %v2151 = vld [vmem:[#allocation2 + $0x80] sm:$0xff]
    %v2152 = vld [vmem:[#allocation2 + $0x88] sm:$0xff]
    %v2153 = vld [vmem:[#allocation2 + $0x90] sm:$0xff]
    %v2154 = vld [vmem:[#allocation2 + $0x98] sm:$0xff]
    %v2155 = vld [vmem:[#allocation2 + $0xa0] sm:$0xff]
    %v2156 = vld [vmem:[#allocation2 + $0xa8] sm:$0xff]
    %v2157 = vld [vmem:[#allocation2 + $0xb0] sm:$0xff]
    %v2158 = vld [vmem:[#allocation2 + $0xb8] sm:$0xff]
    %v2159 = vld [vmem:[#allocation2 + $0xc0] sm:$0xff]
    %v2160 = vld [vmem:[#allocation2 + $0xc8] sm:$0xff]
    %v2161 = vld [vmem:[#allocation2 + $0xd0] sm:$0xff]
    %v2162 = vld [vmem:[#allocation2 + $0xd8] sm:$0xff]
    %v2163 = vld [vmem:[#allocation2 + $0xe0] sm:$0xff]
    %v2164 = vld [vmem:[#allocation2 + $0xe8] sm:$0xff]
    %v2165 = vld [vmem:[#allocation2 + $0xf0] sm:$0xff]
    %v2166 = vld [vmem:[#allocation2 + $0xf8] sm:$0xff]
    %v2167 = vld [vmem:[#allocation2 + $0x100] sm:$0xff]
    %v2168 = vld [vmem:[#allocation2 + $0x108] sm:$0xff]
    %v2169 = vld [vmem:[#allocation2 + $0x110] sm:$0xff]
    %v2170 = vld [vmem:[#allocation2 + $0x118] sm:$0xff]
    %v2171 = vld [vmem:[#allocation2 + $0x120] sm:$0xff]
    %v2172 = vld [vmem:[#allocation2 + $0x128] sm:$0xff]
    %v2173 = vld [vmem:[#allocation2 + $0x130] sm:$0xff]
    %v2174 = vld [vmem:[#allocation2 + $0x138] sm:$0xff]
    %v2175 = vld [vmem:[#allocation2 + $0x140] sm:$0xff]
    %v2176 = vld [vmem:[#allocation2 + $0x148] sm:$0xff]
    %v2177 = vld [vmem:[#allocation2 + $0x150] sm:$0xff]
    %v2178 = vld [vmem:[#allocation2 + $0x158] sm:$0xff]
    %v2179 = vld [vmem:[#allocation2 + $0x160] sm:$0xff]
    %v2180 = vld [vmem:[#allocation2 + $0x168] sm:$0xff]
    %v2181 = vld [vmem:[#allocation2 + $0x170] sm:$0xff]
    %v2182 = vld [vmem:[#allocation2 + $0x178] sm:$0xff]
    %v2183 = vld [vmem:[#allocation2 + $0x180] sm:$0xff]
    %v2184 = vld [vmem:[#allocation2 + $0x188] sm:$0xff]
    %v2185 = vld [vmem:[#allocation2 + $0x190] sm:$0xff]
    %v2186 = vld [vmem:[#allocation2 + $0x198] sm:$0xff]
    %v2187 = vld [vmem:[#allocation2 + $0x1a0] sm:$0xff]
    %v2188 = vld [vmem:[#allocation2 + $0x1a8] sm:$0xff]
    %v2191 = vunpack.c.l.b16 %v2133
    %v2192 = vunpack.c.h.b16 %v2133
    %v2193 = vunpack.c.l.b16 %v2134
    %v2194 = vunpack.c.h.b16 %v2134
    %v2195 = vpack.c.b16 %v2193, %v2191
    %v2196 = vpack.c.b16 %v2194, %v2192
    %v2252 = vunpack.c.l.b16 %v2135
    %v2253 = vunpack.c.h.b16 %v2135
    %v2254 = vunpack.c.l.b16 %v2136
    %v2255 = vunpack.c.h.b16 %v2136
    %v2256 = vunpack.c.l.b16 %v2137
    %v2257 = vunpack.c.h.b16 %v2137
    %v2258 = vunpack.c.l.b16 %v2138
    %v2259 = vunpack.c.h.b16 %v2138
    %v2260 = vunpack.c.l.b16 %v2139
    %v2261 = vunpack.c.h.b16 %v2139
    %v2262 = vunpack.c.l.b16 %v2140
    %v2263 = vunpack.c.h.b16 %v2140
    %v2264 = vunpack.c.l.b16 %v2141
    %v2265 = vunpack.c.h.b16 %v2141
    %v2266 = vunpack.c.l.b16 %v2142
    %v2267 = vunpack.c.h.b16 %v2142
    %v2268 = vunpack.c.l.b16 %v2143
    %v2269 = vunpack.c.h.b16 %v2143
    %v2270 = vunpack.c.l.b16 %v2144
    %v2271 = vunpack.c.h.b16 %v2144
    %v2272 = vunpack.c.l.b16 %v2145
    %v2273 = vunpack.c.h.b16 %v2145
    %v2274 = vunpack.c.l.b16 %v2146
    %v2275 = vunpack.c.h.b16 %v2146
    %v2276 = vunpack.c.l.b16 %v2147
    %v2277 = vunpack.c.h.b16 %v2147
    %v2278 = vunpack.c.l.b16 %v2148
    %v2279 = vunpack.c.h.b16 %v2148
    %v2280 = vunpack.c.l.b16 %v2149
    %v2281 = vunpack.c.h.b16 %v2149
    %v2282 = vunpack.c.l.b16 %v2150
    %v2283 = vunpack.c.h.b16 %v2150
    %v2284 = vunpack.c.l.b16 %v2151
    %v2285 = vunpack.c.h.b16 %v2151
    %v2286 = vunpack.c.l.b16 %v2152
    %v2287 = vunpack.c.h.b16 %v2152
    %v2288 = vunpack.c.l.b16 %v2153
    %v2289 = vunpack.c.h.b16 %v2153
    %v2290 = vunpack.c.l.b16 %v2154
    %v2291 = vunpack.c.h.b16 %v2154
    %v2292 = vunpack.c.l.b16 %v2155
    %v2293 = vunpack.c.h.b16 %v2155
    %v2294 = vunpack.c.l.b16 %v2156
    %v2295 = vunpack.c.h.b16 %v2156
    %v2296 = vunpack.c.l.b16 %v2157
    %v2297 = vunpack.c.h.b16 %v2157
    %v2298 = vunpack.c.l.b16 %v2158
    %v2299 = vunpack.c.h.b16 %v2158
    %v2300 = vunpack.c.l.b16 %v2159
    %v2301 = vunpack.c.h.b16 %v2159
    %v2302 = vunpack.c.l.b16 %v2160
    %v2303 = vunpack.c.h.b16 %v2160
    %v2304 = vunpack.c.l.b16 %v2161
    %v2305 = vunpack.c.h.b16 %v2161
    %v2306 = vunpack.c.l.b16 %v2162
    %v2307 = vunpack.c.h.b16 %v2162
    %v2308 = vunpack.c.l.b16 %v2163
    %v2309 = vunpack.c.h.b16 %v2163
    %v2310 = vunpack.c.l.b16 %v2164
    %v2311 = vunpack.c.h.b16 %v2164
    %v2312 = vunpack.c.l.b16 %v2165
    %v2313 = vunpack.c.h.b16 %v2165
    %v2314 = vunpack.c.l.b16 %v2166
    %v2315 = vunpack.c.h.b16 %v2166
    %v2316 = vunpack.c.l.b16 %v2167
    %v2317 = vunpack.c.h.b16 %v2167
    %v2318 = vunpack.c.l.b16 %v2168
    %v2319 = vunpack.c.h.b16 %v2168
    %v2320 = vunpack.c.l.b16 %v2169
    %v2321 = vunpack.c.h.b16 %v2169
    %v2322 = vunpack.c.l.b16 %v2170
    %v2323 = vunpack.c.h.b16 %v2170
    %v2324 = vunpack.c.l.b16 %v2171
    %v2325 = vunpack.c.h.b16 %v2171
    %v2326 = vunpack.c.l.b16 %v2172
    %v2327 = vunpack.c.h.b16 %v2172
    %v2328 = vunpack.c.l.b16 %v2173
    %v2329 = vunpack.c.h.b16 %v2173
    %v2330 = vunpack.c.l.b16 %v2174
    %v2331 = vunpack.c.h.b16 %v2174
    %v2332 = vunpack.c.l.b16 %v2175
    %v2333 = vunpack.c.h.b16 %v2175
    %v2334 = vunpack.c.l.b16 %v2176
    %v2335 = vunpack.c.h.b16 %v2176
    %v2336 = vunpack.c.l.b16 %v2177
    %v2337 = vunpack.c.h.b16 %v2177
    %v2338 = vunpack.c.l.b16 %v2178
    %v2339 = vunpack.c.h.b16 %v2178
    %v2340 = vunpack.c.l.b16 %v2179
    %v2341 = vunpack.c.h.b16 %v2179
    %v2342 = vunpack.c.l.b16 %v2180
    %v2343 = vunpack.c.h.b16 %v2180
    %v2344 = vunpack.c.l.b16 %v2181
    %v2345 = vunpack.c.h.b16 %v2181
    %v2346 = vunpack.c.l.b16 %v2182
    %v2347 = vunpack.c.h.b16 %v2182
    %v2348 = vunpack.c.l.b16 %v2183
    %v2349 = vunpack.c.h.b16 %v2183
    %v2350 = vunpack.c.l.b16 %v2184
    %v2351 = vunpack.c.h.b16 %v2184
    %v2352 = vunpack.c.l.b16 %v2185
    %v2353 = vunpack.c.h.b16 %v2185
    %v2354 = vunpack.c.l.b16 %v2186
    %v2355 = vunpack.c.h.b16 %v2186
    %v2356 = vunpack.c.l.b16 %v2187
    %v2357 = vunpack.c.h.b16 %v2187
    %v2358 = vunpack.c.l.b16 %v2188
    %v2359 = vunpack.c.h.b16 %v2188
    %v2360 = vpack.c.b16 %v2258, %v2252
    %v2361 = vpack.c.b16 %v2259, %v2253
    %v2362 = vpack.c.b16 %v2260, %v2254
    %v2363 = vpack.c.b16 %v2261, %v2255
    %v2364 = vpack.c.b16 %v2262, %v2256
    %v2365 = vpack.c.b16 %v2263, %v2257
    %v2366 = vpack.c.b16 %v2270, %v2264
    %v2367 = vpack.c.b16 %v2271, %v2265
    %v2368 = vpack.c.b16 %v2272, %v2266
    %v2369 = vpack.c.b16 %v2273, %v2267
    %v2370 = vpack.c.b16 %v2274, %v2268
    %v2371 = vpack.c.b16 %v2275, %v2269
    %v2372 = vpack.c.b16 %v2282, %v2276
    %v2373 = vpack.c.b16 %v2283, %v2277
    %v2374 = vpack.c.b16 %v2284, %v2278
    %v2375 = vpack.c.b16 %v2285, %v2279
    %v2376 = vpack.c.b16 %v2286, %v2280
    %v2377 = vpack.c.b16 %v2287, %v2281
    %v2378 = vpack.c.b16 %v2294, %v2288
    %v2379 = vpack.c.b16 %v2295, %v2289
    %v2380 = vpack.c.b16 %v2296, %v2290
    %v2381 = vpack.c.b16 %v2297, %v2291
    %v2382 = vpack.c.b16 %v2298, %v2292
    %v2383 = vpack.c.b16 %v2299, %v2293
    %v2384 = vpack.c.b16 %v2306, %v2300
    %v2385 = vpack.c.b16 %v2307, %v2301
    %v2386 = vpack.c.b16 %v2308, %v2302
    %v2387 = vpack.c.b16 %v2309, %v2303
    %v2388 = vpack.c.b16 %v2310, %v2304
    %v2389 = vpack.c.b16 %v2311, %v2305
    %v2390 = vpack.c.b16 %v2318, %v2312
    %v2391 = vpack.c.b16 %v2319, %v2313
    %v2392 = vpack.c.b16 %v2320, %v2314
    %v2393 = vpack.c.b16 %v2321, %v2315
    %v2394 = vpack.c.b16 %v2322, %v2316
    %v2395 = vpack.c.b16 %v2323, %v2317
    %v2396 = vpack.c.b16 %v2330, %v2324
    %v2397 = vpack.c.b16 %v2331, %v2325
    %v2398 = vpack.c.b16 %v2332, %v2326
    %v2399 = vpack.c.b16 %v2333, %v2327
    %v2400 = vpack.c.b16 %v2334, %v2328
    %v2401 = vpack.c.b16 %v2335, %v2329
    %v2402 = vpack.c.b16 %v2342, %v2336
    %v2403 = vpack.c.b16 %v2343, %v2337
    %v2404 = vpack.c.b16 %v2344, %v2338
    %v2405 = vpack.c.b16 %v2345, %v2339
    %v2406 = vpack.c.b16 %v2346, %v2340
    %v2407 = vpack.c.b16 %v2347, %v2341
    %v2408 = vpack.c.b16 %v2354, %v2348
    %v2409 = vpack.c.b16 %v2355, %v2349
    %v2410 = vpack.c.b16 %v2356, %v2350
    %v2411 = vpack.c.b16 %v2357, %v2351
    %v2412 = vpack.c.b16 %v2358, %v2352
    %v2413 = vpack.c.b16 %v2359, %v2353
    %v2469 = vsel %vm1008, %v2196, 0
    %2471 = vmatpush.bf16.msra.mxu0 %v2402
    %2472 = vmatpush.bf16.msra.mxu0 %v2396
    %2473 = vmatpush.bf16.msra.mxu0 %v2390
    %2474 = vmatpush.bf16.msra.mxu0 %v2384
    %2475 = vmatpush.bf16.msra.mxu0 %v2378
    %2476 = vmatpush.bf16.msra.mxu0 %v2372
    %2477 = vmatpush.bf16.msra.mxu0 %v2366
    %2478 = vmatpush.bf16.msra.mxu0 %v2360
    %2479 = vmatmul.bf16.gmra.mxu0 %v2195
    %v2480 = vpop.f32.mrf.mxu0
    %v2481 = vadd.f32 0.0, %v2480
    %v2482 = vpop.f32.mrf.mxu0
    %v2483 = vadd.f32 0.0, %v2482
    %2484 = vdwg.mxu0
    %2485 = vmatpush.bf16.msra.mxu0 0
    %2486 = vmatpush.bf16.msra.mxu0 0
    %2487 = vmatpush.bf16.msra.mxu0 0
    %2488 = vmatpush.bf16.msra.mxu0 0
    %2489 = vmatpush.bf16.msra.mxu0 0
    %2490 = vmatpush.bf16.msra.mxu0 0
    %2491 = vmatpush.bf16.msra.mxu0 0
    %2492 = vmatpush.bf16.msra.mxu0 %v2408
    %2493 = vmatmul.bf16.gmra.mxu0 %v2469
    %v2494 = vpop.f32.mrf.mxu0
    %v2495 = vadd.f32 %v2481, %v2494
    %v2496 = vpop.f32.mrf.mxu0
    %v2497 = vadd.f32 %v2483, %v2496
    %2498 = vdwg.mxu0
    %2499 = vmatpush.bf16.msra.mxu0 %v2403
    %2500 = vmatpush.bf16.msra.mxu0 %v2397
    %2501 = vmatpush.bf16.msra.mxu0 %v2391
    %2502 = vmatpush.bf16.msra.mxu0 %v2385
    %2503 = vmatpush.bf16.msra.mxu0 %v2379
    %2504 = vmatpush.bf16.msra.mxu0 %v2373
    %2505 = vmatpush.bf16.msra.mxu0 %v2367
    %2506 = vmatpush.bf16.msra.mxu0 %v2361
    %2507 = vmatmul.bf16.gmra.mxu0 %v2195
    %v2508 = vpop.f32.mrf.mxu0
    %v2509 = vadd.f32 0.0, %v2508
    %v2510 = vpop.f32.mrf.mxu0
    %v2511 = vadd.f32 0.0, %v2510
    %2512 = vdwg.mxu0
    %2513 = vmatpush.bf16.msra.mxu0 0
    %2514 = vmatpush.bf16.msra.mxu0 0
    %2515 = vmatpush.bf16.msra.mxu0 0
    %2516 = vmatpush.bf16.msra.mxu0 0
    %2517 = vmatpush.bf16.msra.mxu0 0
    %2518 = vmatpush.bf16.msra.mxu0 0
    %2519 = vmatpush.bf16.msra.mxu0 0
    %2520 = vmatpush.bf16.msra.mxu0 %v2409
    %2521 = vmatmul.bf16.gmra.mxu0 %v2469
    %v2522 = vpop.f32.mrf.mxu0
    %v2523 = vadd.f32 %v2509, %v2522
    %v2524 = vpop.f32.mrf.mxu0
    %v2525 = vadd.f32 %v2511, %v2524
    %2526 = vdwg.mxu0
    %2527 = vmatpush.bf16.msra.mxu0 %v2404
    %2528 = vmatpush.bf16.msra.mxu0 %v2398
    %2529 = vmatpush.bf16.msra.mxu0 %v2392
    %2530 = vmatpush.bf16.msra.mxu0 %v2386
    %2531 = vmatpush.bf16.msra.mxu0 %v2380
    %2532 = vmatpush.bf16.msra.mxu0 %v2374
    %2533 = vmatpush.bf16.msra.mxu0 %v2368
    %2534 = vmatpush.bf16.msra.mxu0 %v2362
    %2535 = vmatmul.bf16.gmra.mxu0 %v2195
    %v2536 = vpop.f32.mrf.mxu0
    %v2537 = vadd.f32 0.0, %v2536
    %v2538 = vpop.f32.mrf.mxu0
    %v2539 = vadd.f32 0.0, %v2538
    %2540 = vdwg.mxu0
    %2541 = vmatpush.bf16.msra.mxu0 0
    %2542 = vmatpush.bf16.msra.mxu0 0
    %2543 = vmatpush.bf16.msra.mxu0 0
    %2544 = vmatpush.bf16.msra.mxu0 0
    %2545 = vmatpush.bf16.msra.mxu0 0
    %2546 = vmatpush.bf16.msra.mxu0 0
    %2547 = vmatpush.bf16.msra.mxu0 0
    %2548 = vmatpush.bf16.msra.mxu0 %v2410
    %2549 = vmatmul.bf16.gmra.mxu0 %v2469
    %v2550 = vpop.f32.mrf.mxu0
    %v2551 = vadd.f32 %v2537, %v2550
    %v2552 = vpop.f32.mrf.mxu0
    %v2553 = vadd.f32 %v2539, %v2552
    %2554 = vdwg.mxu0
    %2555 = vmatpush.bf16.msra.mxu0 %v2405
    %2556 = vmatpush.bf16.msra.mxu0 %v2399
    %2557 = vmatpush.bf16.msra.mxu0 %v2393
    %2558 = vmatpush.bf16.msra.mxu0 %v2387
    %2559 = vmatpush.bf16.msra.mxu0 %v2381
    %2560 = vmatpush.bf16.msra.mxu0 %v2375
    %2561 = vmatpush.bf16.msra.mxu0 %v2369
    %2562 = vmatpush.bf16.msra.mxu0 %v2363
    %2563 = vmatmul.bf16.gmra.mxu0 %v2195
    %v2564 = vpop.f32.mrf.mxu0
    %v2565 = vadd.f32 0.0, %v2564
    %v2566 = vpop.f32.mrf.mxu0
    %v2567 = vadd.f32 0.0, %v2566
    %2568 = vdwg.mxu0
    %2569 = vmatpush.bf16.msra.mxu0 0
    %2570 = vmatpush.bf16.msra.mxu0 0
    %2571 = vmatpush.bf16.msra.mxu0 0
    %2572 = vmatpush.bf16.msra.mxu0 0
    %2573 = vmatpush.bf16.msra.mxu0 0
    %2574 = vmatpush.bf16.msra.mxu0 0
    %2575 = vmatpush.bf16.msra.mxu0 0
    %2576 = vmatpush.bf16.msra.mxu0 %v2411
    %2577 = vmatmul.bf16.gmra.mxu0 %v2469
    %v2578 = vpop.f32.mrf.mxu0
    %v2579 = vadd.f32 %v2565, %v2578
    %v2580 = vpop.f32.mrf.mxu0
    %v2581 = vadd.f32 %v2567, %v2580
    %2582 = vdwg.mxu0
    %2583 = vmatpush.bf16.msra.mxu0 %v2406
    %2584 = vmatpush.bf16.msra.mxu0 %v2400
    %2585 = vmatpush.bf16.msra.mxu0 %v2394
    %2586 = vmatpush.bf16.msra.mxu0 %v2388
    %2587 = vmatpush.bf16.msra.mxu0 %v2382
    %2588 = vmatpush.bf16.msra.mxu0 %v2376
    %2589 = vmatpush.bf16.msra.mxu0 %v2370
    %2590 = vmatpush.bf16.msra.mxu0 %v2364
    %2591 = vmatmul.bf16.gmra.mxu0 %v2195
    %v2592 = vpop.f32.mrf.mxu0
    %v2593 = vadd.f32 0.0, %v2592
    %v2594 = vpop.f32.mrf.mxu0
    %v2595 = vadd.f32 0.0, %v2594
    %2596 = vdwg.mxu0
    %2597 = vmatpush.bf16.msra.mxu0 0
    %2598 = vmatpush.bf16.msra.mxu0 0
    %2599 = vmatpush.bf16.msra.mxu0 0
    %2600 = vmatpush.bf16.msra.mxu0 0
    %2601 = vmatpush.bf16.msra.mxu0 0
    %2602 = vmatpush.bf16.msra.mxu0 0
    %2603 = vmatpush.bf16.msra.mxu0 0
    %2604 = vmatpush.bf16.msra.mxu0 %v2412
    %2605 = vmatmul.bf16.gmra.mxu0 %v2469
    %v2606 = vpop.f32.mrf.mxu0
    %v2607 = vadd.f32 %v2593, %v2606
    %v2608 = vpop.f32.mrf.mxu0
    %v2609 = vadd.f32 %v2595, %v2608
    %2610 = vdwg.mxu0
    %2611 = vmatpush.bf16.msra.mxu0 %v2407
    %2612 = vmatpush.bf16.msra.mxu0 %v2401
    %2613 = vmatpush.bf16.msra.mxu0 %v2395
    %2614 = vmatpush.bf16.msra.mxu0 %v2389
    %2615 = vmatpush.bf16.msra.mxu0 %v2383
    %2616 = vmatpush.bf16.msra.mxu0 %v2377
    %2617 = vmatpush.bf16.msra.mxu0 %v2371
    %2618 = vmatpush.bf16.msra.mxu0 %v2365
    %2619 = vmatmul.bf16.gmra.mxu0 %v2195
    %v2620 = vpop.f32.mrf.mxu0
    %v2621 = vadd.f32 0.0, %v2620
    %v2622 = vpop.f32.mrf.mxu0
    %v2623 = vadd.f32 0.0, %v2622
    %2624 = vdwg.mxu0
    %2625 = vmatpush.bf16.msra.mxu0 0
    %2626 = vmatpush.bf16.msra.mxu0 0
    %2627 = vmatpush.bf16.msra.mxu0 0
    %2628 = vmatpush.bf16.msra.mxu0 0
    %2629 = vmatpush.bf16.msra.mxu0 0
    %2630 = vmatpush.bf16.msra.mxu0 0
    %2631 = vmatpush.bf16.msra.mxu0 0
    %2632 = vmatpush.bf16.msra.mxu0 %v2413
    %2633 = vmatmul.bf16.gmra.mxu0 %v2469
    %v2634 = vpop.f32.mrf.mxu0
    %v2635 = vadd.f32 %v2621, %v2634
    %v2636 = vpop.f32.mrf.mxu0
    %v2637 = vadd.f32 %v2623, %v2636
    %2638 = vdwg.mxu0
    %2639 = vmatpush.msra.mxu0 %v41
    %2640 = vmatpush.msra.mxu0 %v40
    %2641 = vmatpush.msra.mxu0 %v39
    %2642 = vmatpush.msra.mxu0 %v38
    %2643 = vmatpush.msra.mxu0 %v37
    %2644 = vmatpush.msra.mxu0 %v36
    %2645 = vmatpush.msra.mxu0 %v35
    %2646 = vmatpush.msra.mxu0 %v34
    %2647 = vmatpush.msra.mxu0 %v33
    %2648 = vmatpush.msra.mxu0 %v32
    %2649 = vmatpush.msra.mxu0 %v31
    %2650 = vmatpush.msra.mxu0 %v30
    %2651 = vmatpush.msra.mxu0 %v29
    %2652 = vmatpush.msra.mxu0 %v28
    %2653 = vmatpush.msra.mxu0 %v27
    %2654 = vmatpush.msra.mxu0 %v26
    %2655 = vmatmul.f32.gmra.mxu0 %v2495
    %v2656 = vpop.f32.mrf.mxu0
    %v2657 = vadd.f32 0.0, %v2656
    %2658 = vmatmul.f32.gmra.mxu0 %v2497
    %v2659 = vpop.f32.mrf.mxu0
    %v2660 = vadd.f32 0.0, %v2659
    %2661 = vdwg.mxu0
    %2662 = vmatpush.msra.mxu0 %v57
    %2663 = vmatpush.msra.mxu0 %v56
    %2664 = vmatpush.msra.mxu0 %v55
    %2665 = vmatpush.msra.mxu0 %v54
    %2666 = vmatpush.msra.mxu0 %v53
    %2667 = vmatpush.msra.mxu0 %v52
    %2668 = vmatpush.msra.mxu0 %v51
    %2669 = vmatpush.msra.mxu0 %v50
    %2670 = vmatpush.msra.mxu0 %v49
    %2671 = vmatpush.msra.mxu0 %v48
    %2672 = vmatpush.msra.mxu0 %v47
    %2673 = vmatpush.msra.mxu0 %v46
    %2674 = vmatpush.msra.mxu0 %v45
    %2675 = vmatpush.msra.mxu0 %v44
    %2676 = vmatpush.msra.mxu0 %v43
    %2677 = vmatpush.msra.mxu0 %v42
    %2678 = vmatmul.f32.gmra.mxu0 %v2523
    %v2679 = vpop.f32.mrf.mxu0
    %v2680 = vadd.f32 %v2657, %v2679
    %2681 = vmatmul.f32.gmra.mxu0 %v2525
    %v2682 = vpop.f32.mrf.mxu0
    %v2683 = vadd.f32 %v2660, %v2682
    %2684 = vdwg.mxu0
    %2685 = vmatpush.msra.mxu0 %v73
    %2686 = vmatpush.msra.mxu0 %v72
    %2687 = vmatpush.msra.mxu0 %v71
    %2688 = vmatpush.msra.mxu0 %v70
    %2689 = vmatpush.msra.mxu0 %v69
    %2690 = vmatpush.msra.mxu0 %v68
    %2691 = vmatpush.msra.mxu0 %v67
    %2692 = vmatpush.msra.mxu0 %v66
    %2693 = vmatpush.msra.mxu0 %v65
    %2694 = vmatpush.msra.mxu0 %v64
    %2695 = vmatpush.msra.mxu0 %v63
    %2696 = vmatpush.msra.mxu0 %v62
    %2697 = vmatpush.msra.mxu0 %v61
    %2698 = vmatpush.msra.mxu0 %v60
    %2699 = vmatpush.msra.mxu0 %v59
    %2700 = vmatpush.msra.mxu0 %v58
    %2701 = vmatmul.f32.gmra.mxu0 %v2551
    %v2702 = vpop.f32.mrf.mxu0
    %v2703 = vadd.f32 %v2680, %v2702
    %2704 = vmatmul.f32.gmra.mxu0 %v2553
    %v2705 = vpop.f32.mrf.mxu0
    %v2706 = vadd.f32 %v2683, %v2705
    %2707 = vdwg.mxu0
    %2708 = vmatpush.msra.mxu0 %v89
    %2709 = vmatpush.msra.mxu0 %v88
    %2710 = vmatpush.msra.mxu0 %v87
    %2711 = vmatpush.msra.mxu0 %v86
    %2712 = vmatpush.msra.mxu0 %v85
    %2713 = vmatpush.msra.mxu0 %v84
    %2714 = vmatpush.msra.mxu0 %v83
    %2715 = vmatpush.msra.mxu0 %v82
    %2716 = vmatpush.msra.mxu0 %v81
    %2717 = vmatpush.msra.mxu0 %v80
    %2718 = vmatpush.msra.mxu0 %v79
    %2719 = vmatpush.msra.mxu0 %v78
    %2720 = vmatpush.msra.mxu0 %v77
    %2721 = vmatpush.msra.mxu0 %v76
    %2722 = vmatpush.msra.mxu0 %v75
    %2723 = vmatpush.msra.mxu0 %v74
    %2724 = vmatmul.f32.gmra.mxu0 %v2579
    %v2725 = vpop.f32.mrf.mxu0
    %v2726 = vadd.f32 %v2703, %v2725
    %2727 = vmatmul.f32.gmra.mxu0 %v2581
    %v2728 = vpop.f32.mrf.mxu0
    %v2729 = vadd.f32 %v2706, %v2728
    %2730 = vdwg.mxu0
    %2731 = vmatpush.msra.mxu0 %v105
    %2732 = vmatpush.msra.mxu0 %v104
    %2733 = vmatpush.msra.mxu0 %v103
    %2734 = vmatpush.msra.mxu0 %v102
    %2735 = vmatpush.msra.mxu0 %v101
    %2736 = vmatpush.msra.mxu0 %v100
    %2737 = vmatpush.msra.mxu0 %v99
    %2738 = vmatpush.msra.mxu0 %v98
    %2739 = vmatpush.msra.mxu0 %v97
    %2740 = vmatpush.msra.mxu0 %v96
    %2741 = vmatpush.msra.mxu0 %v95
    %2742 = vmatpush.msra.mxu0 %v94
    %2743 = vmatpush.msra.mxu0 %v93
    %2744 = vmatpush.msra.mxu0 %v92
    %2745 = vmatpush.msra.mxu0 %v91
    %2746 = vmatpush.msra.mxu0 %v90
    %2747 = vmatmul.f32.gmra.mxu0 %v2607
    %v2748 = vpop.f32.mrf.mxu0
    %v2749 = vadd.f32 %v2726, %v2748
    %2750 = vmatmul.f32.gmra.mxu0 %v2609
    %v2751 = vpop.f32.mrf.mxu0
    %v2752 = vadd.f32 %v2729, %v2751
    %2753 = vdwg.mxu0
    %2754 = vmatpush.msra.mxu0 %v121
    %2755 = vmatpush.msra.mxu0 %v120
    %2756 = vmatpush.msra.mxu0 %v119
    %2757 = vmatpush.msra.mxu0 %v118
    %2758 = vmatpush.msra.mxu0 %v117
    %2759 = vmatpush.msra.mxu0 %v116
    %2760 = vmatpush.msra.mxu0 %v115
    %2761 = vmatpush.msra.mxu0 %v114
    %2762 = vmatpush.msra.mxu0 %v113
    %2763 = vmatpush.msra.mxu0 %v112
    %2764 = vmatpush.msra.mxu0 %v111
    %2765 = vmatpush.msra.mxu0 %v110
    %2766 = vmatpush.msra.mxu0 %v109
    %2767 = vmatpush.msra.mxu0 %v108
    %2768 = vmatpush.msra.mxu0 %v107
    %2769 = vmatpush.msra.mxu0 %v106
    %2770 = vmatmul.f32.gmra.mxu0 %v2635
    %v2771 = vpop.f32.mrf.mxu0
    %v2772 = vadd.f32 %v2749, %v2771
    %2773 = vmatmul.f32.gmra.mxu0 %v2637
    %v2774 = vpop.f32.mrf.mxu0
    %v2775 = vadd.f32 %v2752, %v2774
    %2776 = vdwg.mxu0
    %v2777 = vmul.f32 %v2495, %v2495
    %v2778 = vmul.f32 %v2523, %v2523
    %v2779 = vmul.f32 %v2551, %v2551
    %v2780 = vmul.f32 %v2579, %v2579
    %v2781 = vmul.f32 %v2607, %v2607
    %v2782 = vmul.f32 %v2635, %v2635
    %v2783 = vmul.f32 %v2497, %v2497
    %v2784 = vmul.f32 %v2525, %v2525
    %v2785 = vmul.f32 %v2553, %v2553
    %v2786 = vmul.f32 %v2581, %v2581
    %v2787 = vmul.f32 %v2609, %v2609
    %v2788 = vmul.f32 %v2637, %v2637
    %2789 = vmatpush.msra.mxu0 %v41
    %2790 = vmatpush.msra.mxu0 %v40
    %2791 = vmatpush.msra.mxu0 %v39
    %2792 = vmatpush.msra.mxu0 %v38
    %2793 = vmatpush.msra.mxu0 %v37
    %2794 = vmatpush.msra.mxu0 %v36
    %2795 = vmatpush.msra.mxu0 %v35
    %2796 = vmatpush.msra.mxu0 %v34
    %2797 = vmatpush.msra.mxu0 %v33
    %2798 = vmatpush.msra.mxu0 %v32
    %2799 = vmatpush.msra.mxu0 %v31
    %2800 = vmatpush.msra.mxu0 %v30
    %2801 = vmatpush.msra.mxu0 %v29
    %2802 = vmatpush.msra.mxu0 %v28
    %2803 = vmatpush.msra.mxu0 %v27
    %2804 = vmatpush.msra.mxu0 %v26
    %2805 = vmatmul.f32.gmra.mxu0 %v2777
    %v2806 = vpop.f32.mrf.mxu0
    %v2807 = vadd.f32 0.0, %v2806
    %2808 = vmatmul.f32.gmra.mxu0 %v2783
    %v2809 = vpop.f32.mrf.mxu0
    %v2810 = vadd.f32 0.0, %v2809
    %2811 = vdwg.mxu0
    %2812 = vmatpush.msra.mxu0 %v57
    %2813 = vmatpush.msra.mxu0 %v56
    %2814 = vmatpush.msra.mxu0 %v55
    %2815 = vmatpush.msra.mxu0 %v54
    %2816 = vmatpush.msra.mxu0 %v53
    %2817 = vmatpush.msra.mxu0 %v52
    %2818 = vmatpush.msra.mxu0 %v51
    %2819 = vmatpush.msra.mxu0 %v50
    %2820 = vmatpush.msra.mxu0 %v49
    %2821 = vmatpush.msra.mxu0 %v48
    %2822 = vmatpush.msra.mxu0 %v47
    %2823 = vmatpush.msra.mxu0 %v46
    %2824 = vmatpush.msra.mxu0 %v45
    %2825 = vmatpush.msra.mxu0 %v44
    %2826 = vmatpush.msra.mxu0 %v43
    %2827 = vmatpush.msra.mxu0 %v42
    %2828 = vmatmul.f32.gmra.mxu0 %v2778
    %v2829 = vpop.f32.mrf.mxu0
    %v2830 = vadd.f32 %v2807, %v2829
    %2831 = vmatmul.f32.gmra.mxu0 %v2784
    %v2832 = vpop.f32.mrf.mxu0
    %v2833 = vadd.f32 %v2810, %v2832
    %2834 = vdwg.mxu0
    %2835 = vmatpush.msra.mxu0 %v73
    %2836 = vmatpush.msra.mxu0 %v72
    %2837 = vmatpush.msra.mxu0 %v71
    %2838 = vmatpush.msra.mxu0 %v70
    %2839 = vmatpush.msra.mxu0 %v69
    %2840 = vmatpush.msra.mxu0 %v68
    %2841 = vmatpush.msra.mxu0 %v67
    %2842 = vmatpush.msra.mxu0 %v66
    %2843 = vmatpush.msra.mxu0 %v65
    %2844 = vmatpush.msra.mxu0 %v64
    %2845 = vmatpush.msra.mxu0 %v63
    %2846 = vmatpush.msra.mxu0 %v62
    %2847 = vmatpush.msra.mxu0 %v61
    %2848 = vmatpush.msra.mxu0 %v60
    %2849 = vmatpush.msra.mxu0 %v59
    %2850 = vmatpush.msra.mxu0 %v58
    %2851 = vmatmul.f32.gmra.mxu0 %v2779
    %v2852 = vpop.f32.mrf.mxu0
    %v2853 = vadd.f32 %v2830, %v2852
    %2854 = vmatmul.f32.gmra.mxu0 %v2785
    %v2855 = vpop.f32.mrf.mxu0
    %v2856 = vadd.f32 %v2833, %v2855
    %2857 = vdwg.mxu0
    %2858 = vmatpush.msra.mxu0 %v89
    %2859 = vmatpush.msra.mxu0 %v88
    %2860 = vmatpush.msra.mxu0 %v87
    %2861 = vmatpush.msra.mxu0 %v86
    %2862 = vmatpush.msra.mxu0 %v85
    %2863 = vmatpush.msra.mxu0 %v84
    %2864 = vmatpush.msra.mxu0 %v83
    %2865 = vmatpush.msra.mxu0 %v82
    %2866 = vmatpush.msra.mxu0 %v81
    %2867 = vmatpush.msra.mxu0 %v80
    %2868 = vmatpush.msra.mxu0 %v79
    %2869 = vmatpush.msra.mxu0 %v78
    %2870 = vmatpush.msra.mxu0 %v77
    %2871 = vmatpush.msra.mxu0 %v76
    %2872 = vmatpush.msra.mxu0 %v75
    %2873 = vmatpush.msra.mxu0 %v74
    %2874 = vmatmul.f32.gmra.mxu0 %v2780
    %v2875 = vpop.f32.mrf.mxu0
    %v2876 = vadd.f32 %v2853, %v2875
    %2877 = vmatmul.f32.gmra.mxu0 %v2786
    %v2878 = vpop.f32.mrf.mxu0
    %v2879 = vadd.f32 %v2856, %v2878
    %2880 = vdwg.mxu0
    %2881 = vmatpush.msra.mxu0 %v105
    %2882 = vmatpush.msra.mxu0 %v104
    %2883 = vmatpush.msra.mxu0 %v103
    %2884 = vmatpush.msra.mxu0 %v102
    %2885 = vmatpush.msra.mxu0 %v101
    %2886 = vmatpush.msra.mxu0 %v100
    %2887 = vmatpush.msra.mxu0 %v99
    %2888 = vmatpush.msra.mxu0 %v98
    %2889 = vmatpush.msra.mxu0 %v97
    %2890 = vmatpush.msra.mxu0 %v96
    %2891 = vmatpush.msra.mxu0 %v95
    %2892 = vmatpush.msra.mxu0 %v94
    %2893 = vmatpush.msra.mxu0 %v93
    %2894 = vmatpush.msra.mxu0 %v92
    %2895 = vmatpush.msra.mxu0 %v91
    %2896 = vmatpush.msra.mxu0 %v90
    %2897 = vmatmul.f32.gmra.mxu0 %v2781
    %v2898 = vpop.f32.mrf.mxu0
    %v2899 = vadd.f32 %v2876, %v2898
    %2900 = vmatmul.f32.gmra.mxu0 %v2787
    %v2901 = vpop.f32.mrf.mxu0
    %v2902 = vadd.f32 %v2879, %v2901
    %2903 = vdwg.mxu0
    %2904 = vmatpush.msra.mxu0 %v121
    %2905 = vmatpush.msra.mxu0 %v120
    %2906 = vmatpush.msra.mxu0 %v119
    %2907 = vmatpush.msra.mxu0 %v118
    %2908 = vmatpush.msra.mxu0 %v117
    %2909 = vmatpush.msra.mxu0 %v116
    %2910 = vmatpush.msra.mxu0 %v115
    %2911 = vmatpush.msra.mxu0 %v114
    %2912 = vmatpush.msra.mxu0 %v113
    %2913 = vmatpush.msra.mxu0 %v112
    %2914 = vmatpush.msra.mxu0 %v111
    %2915 = vmatpush.msra.mxu0 %v110
    %2916 = vmatpush.msra.mxu0 %v109
    %2917 = vmatpush.msra.mxu0 %v108
    %2918 = vmatpush.msra.mxu0 %v107
    %2919 = vmatpush.msra.mxu0 %v106
    %2920 = vmatmul.f32.gmra.mxu0 %v2782
    %v2921 = vpop.f32.mrf.mxu0
    %v2922 = vadd.f32 %v2899, %v2921
    %2923 = vmatmul.f32.gmra.mxu0 %v2788
    %v2924 = vpop.f32.mrf.mxu0
    %v2925 = vadd.f32 %v2902, %v2924
    %2926 = vdwg.mxu0
    %v2927 = vmul.f32 %v2772, 0.001953125
    %v2928 = vmul.f32 %v2775, 0.001953125
    %v2929 = vmul.f32 %v2922, 0.001953125
    %v2930 = vmul.f32 %v2925, 0.001953125
    %v2931 = vmul.f32 %v2927, %v2927
    %v2932 = vmul.f32 %v2928, %v2928
    %v2933 = vsub.f32 %v2929, %v2931
    %v2934 = vsub.f32 %v2930, %v2932
    %v2935 = vmax.f32 %v2933, 0.0
    %v2936 = vmax.f32 %v2934, 0.0
    %v2937 = vadd.f32 %v2935, 1e-05
    %v2938 = vadd.f32 %v2936, 1e-05
    %v2939 = vrsqrt.pop %v2937
    %v2940 = vmul.f32 %v2939, %v2937
    %v2941 = vmul.f32 %v2940, %v2939
    %v2942 = vmul.f32 0.5, %v2941
    %v2943 = vsub.f32 1.5, %v2942
    %v2944 = vmul.f32 %v2939, %v2943
    %vm2945 = vweird.f32 %v2937
    %vm2946 = vweird.f32 %v2939
    %vm2947 = vmor %vm2945, %vm2946
    %v2948 = vsel %vm2947, %v2939, %v2944
    %v2949 = vrsqrt.pop %v2938
    %v2950 = vmul.f32 %v2949, %v2938
    %v2951 = vmul.f32 %v2950, %v2949
    %v2952 = vmul.f32 0.5, %v2951
    %v2953 = vsub.f32 1.5, %v2952
    %v2954 = vmul.f32 %v2949, %v2953
    %vm2955 = vweird.f32 %v2938
    %vm2956 = vweird.f32 %v2949
    %vm2957 = vmor %vm2955, %vm2956
    %v2958 = vsel %vm2957, %v2949, %v2954
    %2961 = vrot.lane.b32.xlu0 %v2948, 2
    %v2962 = vpop.permute.xlu0 %2961
    %2963 = vrot.lane.b32.xlu0 %v2958, 2
    %v2964 = vpop.permute.xlu0 %2963
    %v2967 = vmul.f32 %v1607, %v2962
    %v2968 = vmul.f32 %v1608, %v2964
    %2971 = vrot.lane.b32.xlu0 %v2967, 126
    %v2972 = vpop.permute.xlu0 %2971
    %2973 = vrot.lane.b32.xlu0 %v2968, 126
    %v2974 = vpop.permute.xlu0 %2973
    %v2977 = vmul.f32 %v2927, %v2972
    %v2978 = vmul.f32 %v2928, %v2974
    %2981 = vrot.lane.b32.xlu0 %v2977, 3
    %v2982 = vpop.permute.xlu0 %2981
    %2983 = vrot.lane.b32.xlu0 %v2978, 3
    %v2984 = vpop.permute.xlu0 %2983
    %v2987 = vsub.f32 %v1607, %v2982
    %v2988 = vsub.f32 %v1608, %v2984
    %2989 = vset.pattern.permute.xlu0 2
    %2990 = vperm.xlu0 %2989, %v2967
    %v2991 = vpop.permute.xlu0 %2990
    %2993 = vset.pattern.permute.xlu0 2
    %2994 = vperm.xlu0 %2993, %v2968
    %v2995 = vpop.permute.xlu0 %2994
    %v2997 = vmul.f32 %v2495, %v2991
    %v2998 = vmul.f32 %v2523, %v2991
    %v2999 = vmul.f32 %v2551, %v2991
    %v3000 = vmul.f32 %v2579, %v2991
    %v3001 = vmul.f32 %v2607, %v2991
    %v3002 = vmul.f32 %v2635, %v2991
    %v3003 = vmul.f32 %v2497, %v2995
    %v3004 = vmul.f32 %v2525, %v2995
    %v3005 = vmul.f32 %v2553, %v2995
    %v3006 = vmul.f32 %v2581, %v2995
    %v3007 = vmul.f32 %v2609, %v2995
    %v3008 = vmul.f32 %v2637, %v2995
    %3010 = vset.pattern.permute.xlu0 3
    %3011 = vperm.xlu0 %3010, %v2987
    %v3012 = vpop.permute.xlu0 %3011
    %3015 = vset.pattern.permute.xlu0 3
    %3016 = vperm.xlu0 %3015, %v2988
    %v3017 = vpop.permute.xlu0 %3016
    %v3019 = vadd.f32 %v2997, %v3012
    %v3020 = vadd.f32 %v2998, %v3012
    %v3021 = vadd.f32 %v2999, %v3012
    %v3022 = vadd.f32 %v3000, %v3012
    %v3023 = vadd.f32 %v3001, %v3012
    %v3024 = vadd.f32 %v3002, %v3012
    %v3025 = vadd.f32 %v3003, %v3017
    %v3026 = vadd.f32 %v3004, %v3017
    %v3027 = vadd.f32 %v3005, %v3017
    %v3028 = vadd.f32 %v3006, %v3017
    %v3029 = vadd.f32 %v3007, %v3017
    %v3030 = vadd.f32 %v3008, %v3017
    %v3031 = vpack.c.bf16 %v3020, %v3019
    %v3032 = vpack.c.bf16 %v3022, %v3021
    %v3033 = vpack.c.bf16 %v3024, %v3023
    %v3034 = vpack.c.bf16 %v3026, %v3025
    %v3035 = vpack.c.bf16 %v3028, %v3027
    %v3036 = vpack.c.bf16 %v3030, %v3029
    %3037 = vst [vmem:[#allocation4] sm:$0xff] %v3031
    %3038 = vst [vmem:[#allocation4 + $0x8] sm:$0xff] %v3032
    %3039 = vst [vmem:[#allocation4 + $0x10] sm:$0xff] %v3033
    %3040 = vst [vmem:[#allocation4 + $0x18] sm:$0xff] %v3034
    %3041 = vst [vmem:[#allocation4 + $0x20] sm:$0xff] %v3035
    %3042 = vst [vmem:[#allocation4 + $0x28] sm:$0xff] %v3036
    // Predicated region
    $region26: #{tpu_custom_call.1} parent=1 // pred_check
      _
    $region27: #{tpu_custom_call.1} parent=1 // pred_check_branch
      %3044 = sbr.rel (0) target = $region29
    $region28: #{tpu_custom_call.1} parent=1 // pred_region
      %3046 = vsyncadd [#allocation5], 0
      %s3047 = sshll.u32 [#allocation4], 4
      %s3048 = int_to_ptr.vmem [resolvable:$true] %s3047
      %s3049 = sshll.u32 %s6, 4
      %s3050 = int_to_ptr.hbm [resolvable:$true] %s3049
      %3055 = dma.vmem_to_hbm [thread:$0]  %s3048, 768, %s3050, [#allocation5], 384, 384, 24
    $region29: #{tpu_custom_call.1} parent=1 // pred_fallthru
      _
    // Predicated region
    $region30: #{tpu_custom_call.1} parent=1 // pred_check
      _
    $region31: #{tpu_custom_call.1} parent=1 // pred_check_branch
      %3057 = sbr.rel (0) target = $region33
    $region32: #{tpu_custom_call.1} parent=1 // pred_region
      %3059 = dma.done [#allocation5], 768
    $region33: #{tpu_custom_call.1} parent=1 // pred_fallthru
      _
    %3060 = vsyncpa [#allocation5], 1

</llo_original>
